<compile_context>
chip_gen: v7x
topology: tpu7x:2x2x1
jax: 0.10.0
libtpu: 0.0.40
codegen_flags: <defaults>
</compile_context>

<pallas_src>
import jax
import jax.numpy as jnp
import numpy as np
from jax.experimental import pallas as pl
from jax.experimental.pallas import tpu as pltpu

PREC = jax.lax.Precision.HIGHEST          # full-precision XLA glue matmuls
_VMEM_LIMIT = 64 * 1024 * 1024            # explicit scoped-VMEM cap (v7x-safe)


# ----------------------------------------------------------------------------
# Kernel 1: serial LSTM recurrence.  Grid = (batch chunks [parallel],
# time chunks [arbitrary]).  Per step only h_{t-1} @ W_hh runs; the input
# projection (x_t @ W_ih + b_ih + b_hh) is hoisted and streamed in per gate.
# State lives in the fori_loop carry (registers); scratch is touched once per
# chunk.
# ----------------------------------------------------------------------------
def _lstm_recurrent_kernel(xpi_ref, xpf_ref, xpg_ref, xpo_ref,
                           h0_ref, c0_ref, w_hh_ref,
                           hs_ref, hN_ref, cN_ref,
                           h_scr, c_scr):
    ti = pl.program_id(1)
    Tc = xpi_ref.shape[0]

    # Initialize recurrent state from prev_state on the first time chunk of
    # this batch chunk.
    @pl.when(ti == 0)
    def _():
        h_scr[...] = h0_ref[...]
        c_scr[...] = c0_ref[...]

    # Per-gate recurrent weights, loaded once per chunk (lane-aligned blocks).
    w_i = w_hh_ref[0]
    w_f = w_hh_ref[1]
    w_g = w_hh_ref[2]
    w_o = w_hh_ref[3]
    mm_dtype = w_i.dtype

    def step(tt, carry):
        h_prev, c_prev = carry                      # f32, carried in vregs
        h_mm = h_prev.astype(mm_dtype)
        pre_i = xpi_ref[tt] + jnp.dot(h_mm, w_i, preferred_element_type=jnp.float32)
        pre_f = xpf_ref[tt] + jnp.dot(h_mm, w_f, preferred_element_type=jnp.float32)
        pre_g = xpg_ref[tt] + jnp.dot(h_mm, w_g, preferred_element_type=jnp.float32)
        pre_o = xpo_ref[tt] + jnp.dot(h_mm, w_o, preferred_element_type=jnp.float32)
        # PyTorch gate order [i, f, g, o]; nonlinearities + state update in f32.
        i_g = jax.nn.sigmoid(pre_i)
        f_g = jax.nn.sigmoid(pre_f)
        g_g = jnp.tanh(pre_g)
        o_g = jax.nn.sigmoid(pre_o)
        c_new = f_g * c_prev + i_g * g_g
        h_new = o_g * jnp.tanh(c_new)
        hs_ref[tt] = h_new.astype(hs_ref.dtype)     # emit hidden state
        return (h_new, c_new)

    unroll = True if Tc <= 16 else 8
    h_fin, c_fin = jax.lax.fori_loop(0, Tc, step,
                                     (h_scr[...], c_scr[...]),
                                     unroll=unroll)

    # Spill state once per chunk for the next time chunk.
    h_scr[...] = h_fin
    c_scr[...] = c_fin

    # Emit final (h, c) after the last time chunk of this batch chunk.
    @pl.when(ti == pl.num_programs(1) - 1)
    def _():
        hN_ref[...] = h_fin
        cN_ref[...] = c_fin


# ----------------------------------------------------------------------------
# Kernel 2: fused vocab projection.  Grid = (vocab chunks outer, time chunks
# inner) so w_dense streams from HBM exactly once.  One (B*Td, H) @ (H, Vc)
# matmul per block; output written batch-first.
# ----------------------------------------------------------------------------
def _dense_kernel(hs_ref, w_ref, b_ref, out_ref):
    hs = hs_ref[...]                                # (Td, B, H)
    Td, B, H = hs.shape
    w = w_ref[...]                                  # (H, Vc)
    Vc = w.shape[1]
    # Cheap transpose of the small hidden-state block (XLU, off serial path)
    # so the big logits tile lands batch-first without a wrapper transpose.
    h_bm = jnp.transpose(hs, (1, 0, 2)).reshape(B * Td, H)
    acc = jnp.dot(h_bm, w, preferred_element_type=jnp.float32)
    acc = acc + b_ref[...]                          # (1, Vc) broadcast, f32
    out_ref[...] = acc.reshape(B, Td, Vc).astype(out_ref.dtype)


def _choose_chunk(n, target, align):
    """Largest divisor of n that is <= target and a multiple of align;
    falls back to n (single full-size chunk)."""
    if n <= target:
        return n
    for d in range(target, 0, -1):
        if n % d == 0 and d % align == 0:
            return d
    return n


def lstm_model_forward(x_ids, prev_state, params, *,
                       time_chunk=32, dense_time_chunk=None,
                       vocab_chunk=2048, batch_chunk=None):
    """Equivalent of Model.forward(x, prev_state).

    x_ids: (B, T) int32 token ids.
    prev_state: (h0, c0), each (1, B, H)   (PyTorch LSTM state convention).
    Returns (logits (B, T, V) f32, (hN (1,B,H), cN (1,B,H)) f32).
    """
    emb_table = params["embedding"]          # (V, E)
    w_ih = params["w_ih"]                    # (4, E, H)  per-gate, pre-transposed
    w_hh = params["w_hh"]                    # (4, H, H)  per-gate, pre-transposed
    b_g = params["b_gates"]                  # (4, H) f32 (b_ih + b_hh folded)
    w_d = params["w_dense"]                  # (H, V)     pre-transposed
    b_d = params["b_dense"]                  # (1, V) f32

    B, T = x_ids.shape
    V, E = emb_table.shape
    H = w_hh.shape[-1]
    act_dtype = w_hh.dtype                   # hs / matmul operand dtype

    h0 = prev_state[0][0].astype(jnp.float32)   # (B, H)
    c0 = prev_state[1][0].astype(jnp.float32)   # (B, H)

    # --- chunk selection ------------------------------------------------
    Tc = _choose_chunk(T, time_chunk, 1)                       # recurrence chunk
    bc_target = batch_chunk if batch_chunk is not None else max(8, B // 2)
    Bc = _choose_chunk(B, bc_target, 8)                        # v7x: 2 TCs
    if dense_time_chunk is None:
        dense_time_chunk = max(8, 512 // max(B, 1))            # M = B*Td >= ~512
    Td = _choose_chunk(T, dense_time_chunk, 8)
    Vc = _choose_chunk(V, vocab_chunk, 128)
    n_tc, n_bc, n_td, n_vc = T // Tc, B // Bc, T // Td, V // Vc

    # --- XLA glue: embedding gather + hoisted per-gate input projection --
    # Gather lands directly time-major; one big matmul per gate (f32 acc).
    embed_tm = jnp.take(emb_table, x_ids.T, axis=0)            # (T, B, E)
    embed_2d = embed_tm.reshape(T * B, E)
    xp = [
        jnp.dot(embed_2d, w_ih[k], precision=PREC,
                preferred_element_type=jnp.float32).reshape(T, B, H)
        + b_g[k].astype(jnp.float32)
        for k in range(4)
    ]                                                          # 4 x (T, B, H) f32

    # --- Kernel 1: serial recurrence -------------------------------------
    xp_spec = pl.BlockSpec((Tc, Bc, H), lambda bi, ti: (ti, bi, 0))
    state_spec = pl.BlockSpec((Bc, H), lambda bi, ti: (bi, 0),
                              pipeline_mode=pl.Buffered(1))
    whh_spec = pl.BlockSpec((4, H, H), lambda bi, ti: (0, 0, 0),
                            pipeline_mode=pl.Buffered(1))

    hs_tm, hN, cN = pl.pallas_call(
        _lstm_recurrent_kernel,
        out_shape=(
            jax.ShapeDtypeStruct((T, B, H), act_dtype),    # all hidden states
            jax.ShapeDtypeStruct((B, H), jnp.float32),     # final h
            jax.ShapeDtypeStruct((B, H), jnp.float32),     # final c
        ),
        grid_spec=pltpu.PrefetchScalarGridSpec(
            num_scalar_prefetch=0,
            grid=(n_bc, n_tc),
            in_specs=[xp_spec, xp_spec, xp_spec, xp_spec,   # x-proj per gate
                      state_spec, state_spec,               # h0, c0
                      whh_spec],                            # w_hh (4,H,H)
            out_specs=[
                pl.BlockSpec((Tc, Bc, H), lambda bi, ti: (ti, bi, 0)),
                pl.BlockSpec((Bc, H), lambda bi, ti: (bi, 0)),
                pl.BlockSpec((Bc, H), lambda bi, ti: (bi, 0)),
            ],
            scratch_shapes=[
                pltpu.VMEM((Bc, H), jnp.float32),    # h carry across chunks
                pltpu.VMEM((Bc, H), jnp.float32),    # c carry across chunks
            ],
        ),
        compiler_params=pltpu.CompilerParams(
            dimension_semantics=("parallel", "arbitrary"),   # time stays serial
            vmem_limit_bytes=_VMEM_LIMIT,
        ),
    )(xp[0], xp[1], xp[2], xp[3], h0, c0, w_hh)

    # --- Kernel 2: fused, tiled vocab projection (vocab outer) -----------
    logits = pl.pallas_call(
        _dense_kernel,
        out_shape=jax.ShapeDtypeStruct((B, T, V), jnp.float32),
        grid_spec=pltpu.PrefetchScalarGridSpec(
            num_scalar_prefetch=0,
            grid=(n_vc, n_td),                               # vocab OUTER
            in_specs=[
                pl.BlockSpec((Td, B, H), lambda vi, ti: (ti, 0, 0)),   # hs
                pl.BlockSpec((H, Vc), lambda vi, ti: (0, vi)),         # w_dense
                pl.BlockSpec((1, Vc), lambda vi, ti: (0, vi)),         # b_dense
            ],
            out_specs=pl.BlockSpec((B, Td, Vc), lambda vi, ti: (0, ti, vi)),
        ),
        compiler_params=pltpu.CompilerParams(
            dimension_semantics=("parallel", "parallel"),
            vmem_limit_bytes=_VMEM_LIMIT,
        ),
    )(hs_tm, w_d, b_d)

    return logits, (hN[None], cN[None])


def init_params(key, n_vocab, embedding_size, lstm_hidden_size):
    """Deterministic parameter init (PyTorch-style uniform ranges), stored in
    the per-gate / pre-transposed layout the kernels expect."""
    ks = jax.random.split(key, 7)
    H, E, V = lstm_hidden_size, embedding_size, n_vocab
    s = 1.0 / np.sqrt(H)
    return {
        "embedding": jax.random.normal(ks[0], (V, E), jnp.float32),
        # PyTorch weight_ih_l0 is (4H, E) in [i,f,g,o] order -> here (4, E, H).
        "w_ih": jax.random.uniform(ks[1], (4, E, H), jnp.float32, -s, s),
        "w_hh": jax.random.uniform(ks[2], (4, H, H), jnp.float32, -s, s),
        # b_ih + b_hh folded, per gate.
        "b_gates": (jax.random.uniform(ks[3], (4, H), jnp.float32, -s, s)
                    + jax.random.uniform(ks[4], (4, H), jnp.float32, -s, s)),
        "w_dense": jax.random.uniform(ks[5], (H, V), jnp.float32, -s, s),
        "b_dense": jax.random.uniform(ks[6], (1, V), jnp.float32, -s, s),
    }


def cast_params(params, dtype):
    """Cast matmul weights / embedding to `dtype` (e.g. bf16); biases stay f32
    since they are added post f32 accumulation."""
    keep_f32 = {"b_gates", "b_dense"}
    return {k: (v if k in keep_f32 else v.astype(dtype)) for k, v in params.items()}


def reference_forward(x_ids, prev_state, params):
    """Pure-JAX f32 reference of the same forward pass (sanity check)."""
    emb_table = params["embedding"].astype(jnp.float32)
    w_ih = params["w_ih"].astype(jnp.float32)
    w_hh = params["w_hh"].astype(jnp.float32)
    b_g = params["b_gates"].astype(jnp.float32)
    w_d = params["w_dense"].astype(jnp.float32)
    b_d = params["b_dense"].astype(jnp.float32)

    emb = jnp.take(emb_table, x_ids, axis=0)      # (B, T, E)
    h = prev_state[0][0]
    c = prev_state[1][0]

    def step(carry, xt):
        h, c = carry
        pre = [jnp.dot(xt, w_ih[k], precision=PREC)
               + jnp.dot(h, w_hh[k], precision=PREC) + b_g[k]
               for k in range(4)]
        i = jax.nn.sigmoid(pre[0])
        f = jax.nn.sigmoid(pre[1])
        gg = jnp.tanh(pre[2])
        o = jax.nn.sigmoid(pre[3])
        c = f * c + i * gg
        h = o * jnp.tanh(c)
        return (h, c), h

    (hN, cN), hs = jax.lax.scan(step, (h, c), jnp.transpose(emb, (1, 0, 2)))
    out = jnp.transpose(hs, (1, 0, 2))            # (B, T, H)
    logits = jnp.dot(out, w_d, precision=PREC) + b_d
    return logits, (hN[None], cN[None])


if __name__ == "__main__":
    # Small shapes consistent with the module.
    n_vocab = 32
    seq_size = 8
    embedding_size = 16
    lstm_hidden_size = 32
    batch_size = 2

    key = jax.random.PRNGKey(0)
    k_param, k_x = jax.random.split(key)

    params = init_params(k_param, n_vocab, embedding_size, lstm_hidden_size)
    x = jax.random.randint(k_x, (batch_size, seq_size), 0, n_vocab, jnp.int32)

    # zero_state(batch_size)
    prev_state = (jnp.zeros((1, batch_size, lstm_hidden_size), jnp.float32),
                  jnp.zeros((1, batch_size, lstm_hidden_size), jnp.float32))

    # ---- f32 configuration: exact numerics vs. pure-JAX reference -------
    logits, (hN, cN) = lstm_model_forward(x, prev_state, params)
    jax.block_until_ready((logits, hN, cN))

    ref_logits, (ref_h, ref_c) = reference_forward(x, prev_state, params)
    np.testing.assert_allclose(np.asarray(logits), np.asarray(ref_logits),
                               rtol=1e-4, atol=1e-4)
    np.testing.assert_allclose(np.asarray(hN), np.asarray(ref_h),
                               rtol=1e-4, atol=1e-4)
    np.testing.assert_allclose(np.asarray(cN), np.asarray(ref_c),
                               rtol=1e-4, atol=1e-4)

    # ---- bf16 weights/activations (production config), loose check ------
    params_bf16 = cast_params(params, jnp.bfloat16)
    logits_b, (hN_b, cN_b) = lstm_model_forward(x, prev_state, params_bf16)
    jax.block_until_ready((logits_b, hN_b, cN_b))
    np.testing.assert_allclose(np.asarray(logits_b), np.asarray(ref_logits),
                               rtol=5e-2, atol=5e-2)

    print("KERNEL_OK")
</pallas_src>

<mosaic_0001>
module attributes {stable_mosaic.version = 11 : i64} {
  func.func @_lstm_recurrent_kernel(%arg0: i32, %arg1: i32, %arg2: memref<8x2x32xf32, #tpu.memory_space<vmem>>, %arg3: memref<8x2x32xf32, #tpu.memory_space<vmem>>, %arg4: memref<8x2x32xf32, #tpu.memory_space<vmem>>, %arg5: memref<8x2x32xf32, #tpu.memory_space<vmem>>, %arg6: memref<2x32xf32, #tpu.memory_space<vmem>>, %arg7: memref<2x32xf32, #tpu.memory_space<vmem>>, %arg8: memref<4x32x32xf32, #tpu.memory_space<vmem>>, %arg9: memref<8x2x32xf32, #tpu.memory_space<vmem>>, %arg10: memref<2x32xf32, #tpu.memory_space<vmem>>, %arg11: memref<2x32xf32, #tpu.memory_space<vmem>>, %arg12: memref<2x32xf32, #tpu.memory_space<vmem>>, %arg13: memref<2x32xf32, #tpu.memory_space<vmem>>) attributes {dimension_semantics = [#tpu.dimension_semantics<parallel>, #tpu.dimension_semantics<arbitrary>], iteration_bounds = array<i64: 1, 1>, scalar_prefetch = 0 : i64, scratch_operands = 2 : i64, tpu.core_type = #tpu.core_type<tc>, window_params = [{transform_indices = @transform_0, window_bounds = array<i64: 8, 2, 32>}, {transform_indices = @transform_1, window_bounds = array<i64: 8, 2, 32>}, {transform_indices = @transform_2, window_bounds = array<i64: 8, 2, 32>}, {transform_indices = @transform_3, window_bounds = array<i64: 8, 2, 32>}, {pipeline_mode = #tpu.pipeline_mode<synchronous>, transform_indices = @transform_4, window_bounds = array<i64: 2, 32>}, {pipeline_mode = #tpu.pipeline_mode<synchronous>, transform_indices = @transform_5, window_bounds = array<i64: 2, 32>}, {pipeline_mode = #tpu.pipeline_mode<synchronous>, transform_indices = @transform_6, window_bounds = array<i64: 4, 32, 32>}, {transform_indices = @transform_7, window_bounds = array<i64: 8, 2, 32>}, {transform_indices = @transform_8, window_bounds = array<i64: 2, 32>}, {transform_indices = @transform_9, window_bounds = array<i64: 2, 32>}]} {
    %c0_i32 = arith.constant 0 : i32
    %0 = arith.cmpi eq, %arg1, %c0_i32 : i32
    %1 = arith.extui %0 : i1 to i32
    %c0_i32_0 = arith.constant 0 : i32
    %2 = arith.cmpi ne, %1, %c0_i32_0 : i32
    scf.if %2 {
      %c0_155 = arith.constant 0 : index
      %c0_156 = arith.constant 0 : index
      %378 = vector.load %arg6[%c0_155, %c0_156] : memref<2x32xf32, #tpu.memory_space<vmem>>, vector<2x32xf32>
      %c0_157 = arith.constant 0 : index
      %c0_158 = arith.constant 0 : index
      %379 = vector.load %arg12[%c0_157, %c0_158] : memref<2x32xf32, #tpu.memory_space<vmem>>, vector<2x32xf32>
      tpu.vector_store %arg12[%c0_157, %c0_158], %378 {strides = array<i32>} : memref<2x32xf32, #tpu.memory_space<vmem>>, vector<2x32xf32>,
      %c0_159 = arith.constant 0 : index
      %c0_160 = arith.constant 0 : index
      %380 = vector.load %arg7[%c0_159, %c0_160] : memref<2x32xf32, #tpu.memory_space<vmem>>, vector<2x32xf32>
      %c0_161 = arith.constant 0 : index
      %c0_162 = arith.constant 0 : index
      %381 = vector.load %arg13[%c0_161, %c0_162] : memref<2x32xf32, #tpu.memory_space<vmem>>, vector<2x32xf32>
      tpu.vector_store %arg13[%c0_161, %c0_162], %380 {strides = array<i32>} : memref<2x32xf32, #tpu.memory_space<vmem>>, vector<2x32xf32>,
    } else {
    }
    %c0 = arith.constant 0 : index
    %c0_1 = arith.constant 0 : index
    %c0_2 = arith.constant 0 : index
    %3 = vector.load %arg8[%c0, %c0_1, %c0_2] : memref<4x32x32xf32, #tpu.memory_space<vmem>>, vector<1x32x32xf32>
    %4 = vector.shape_cast %3 : vector<1x32x32xf32> to vector<32x32xf32>
    %c1 = arith.constant 1 : index
    %c0_3 = arith.constant 0 : index
    %c0_4 = arith.constant 0 : index
    %5 = vector.load %arg8[%c1, %c0_3, %c0_4] : memref<4x32x32xf32, #tpu.memory_space<vmem>>, vector<1x32x32xf32>
    %6 = vector.shape_cast %5 : vector<1x32x32xf32> to vector<32x32xf32>
    %c2 = arith.constant 2 : index
    %c0_5 = arith.constant 0 : index
    %c0_6 = arith.constant 0 : index
    %7 = vector.load %arg8[%c2, %c0_5, %c0_6] : memref<4x32x32xf32, #tpu.memory_space<vmem>>, vector<1x32x32xf32>
    %8 = vector.shape_cast %7 : vector<1x32x32xf32> to vector<32x32xf32>
    %c3 = arith.constant 3 : index
    %c0_7 = arith.constant 0 : index
    %c0_8 = arith.constant 0 : index
    %9 = vector.load %arg8[%c3, %c0_7, %c0_8] : memref<4x32x32xf32, #tpu.memory_space<vmem>>, vector<1x32x32xf32>
    %10 = vector.shape_cast %9 : vector<1x32x32xf32> to vector<32x32xf32>
    %c0_9 = arith.constant 0 : index
    %c0_10 = arith.constant 0 : index
    %11 = vector.load %arg12[%c0_9, %c0_10] : memref<2x32xf32, #tpu.memory_space<vmem>>, vector<2x32xf32>
    %c0_11 = arith.constant 0 : index
    %c0_12 = arith.constant 0 : index
    %12 = vector.load %arg13[%c0_11, %c0_12] : memref<2x32xf32, #tpu.memory_space<vmem>>, vector<2x32xf32>
    %c0_i32_13 = arith.constant 0 : i32
    %13 = arith.index_cast %c0_i32_13 : i32 to index
    %c0_14 = arith.constant 0 : index
    %c0_15 = arith.constant 0 : index
    %14 = vector.load %arg2[%13, %c0_14, %c0_15] : memref<8x2x32xf32, #tpu.memory_space<vmem>>, vector<1x2x32xf32>
    %15 = vector.shape_cast %14 : vector<1x2x32xf32> to vector<2x32xf32>
    %cst = arith.constant dense<0.000000e+00> : vector<2x32xf32>
    %16 = tpu.matmul %11, %4, %cst {dimension_numbers = #tpu.dot_dimension_numbers<[1], [0], [0], [1], [0, 0, 1, 1], [], []>} : vector<2x32xf32>, vector<32x32xf32>, vector<2x32xf32> -> vector<2x32xf32>
    %17 = arith.addf %15, %16 : vector<2x32xf32>
    %18 = arith.index_cast %c0_i32_13 : i32 to index
    %c0_16 = arith.constant 0 : index
    %c0_17 = arith.constant 0 : index
    %19 = vector.load %arg3[%18, %c0_16, %c0_17] : memref<8x2x32xf32, #tpu.memory_space<vmem>>, vector<1x2x32xf32>
    %20 = vector.shape_cast %19 : vector<1x2x32xf32> to vector<2x32xf32>
    %cst_18 = arith.constant dense<0.000000e+00> : vector<2x32xf32>
    %21 = tpu.matmul %11, %6, %cst_18 {dimension_numbers = #tpu.dot_dimension_numbers<[1], [0], [0], [1], [0, 0, 1, 1], [], []>} : vector<2x32xf32>, vector<32x32xf32>, vector<2x32xf32> -> vector<2x32xf32>
    %22 = arith.addf %20, %21 : vector<2x32xf32>
    %23 = arith.index_cast %c0_i32_13 : i32 to index
    %c0_19 = arith.constant 0 : index
    %c0_20 = arith.constant 0 : index
    %24 = vector.load %arg4[%23, %c0_19, %c0_20] : memref<8x2x32xf32, #tpu.memory_space<vmem>>, vector<1x2x32xf32>
    %25 = vector.shape_cast %24 : vector<1x2x32xf32> to vector<2x32xf32>
    %cst_21 = arith.constant dense<0.000000e+00> : vector<2x32xf32>
    %26 = tpu.matmul %11, %8, %cst_21 {dimension_numbers = #tpu.dot_dimension_numbers<[1], [0], [0], [1], [0, 0, 1, 1], [], []>} : vector<2x32xf32>, vector<32x32xf32>, vector<2x32xf32> -> vector<2x32xf32>
    %27 = arith.addf %25, %26 : vector<2x32xf32>
    %28 = arith.index_cast %c0_i32_13 : i32 to index
    %c0_22 = arith.constant 0 : index
    %c0_23 = arith.constant 0 : index
    %29 = vector.load %arg5[%28, %c0_22, %c0_23] : memref<8x2x32xf32, #tpu.memory_space<vmem>>, vector<1x2x32xf32>
    %30 = vector.shape_cast %29 : vector<1x2x32xf32> to vector<2x32xf32>
    %cst_24 = arith.constant dense<0.000000e+00> : vector<2x32xf32>
    %31 = tpu.matmul %11, %10, %cst_24 {dimension_numbers = #tpu.dot_dimension_numbers<[1], [0], [0], [1], [0, 0, 1, 1], [], []>} : vector<2x32xf32>, vector<32x32xf32>, vector<2x32xf32> -> vector<2x32xf32>
    %32 = arith.addf %30, %31 : vector<2x32xf32>
    %33 = arith.negf %17 : vector<2x32xf32>
    %34 = math.exp %33 : vector<2x32xf32>
    %cst_25 = arith.constant 1.000000e+00 : f32
    %35 = vector.broadcast %cst_25 : f32 to vector<2x32xf32>
    %36 = arith.addf %35, %34 : vector<2x32xf32>
    %37 = arith.divf %35, %36 : vector<2x32xf32>
    %38 = arith.negf %22 : vector<2x32xf32>
    %39 = math.exp %38 : vector<2x32xf32>
    %cst_26 = arith.constant 1.000000e+00 : f32
    %40 = vector.broadcast %cst_26 : f32 to vector<2x32xf32>
    %41 = arith.addf %40, %39 : vector<2x32xf32>
    %42 = arith.divf %40, %41 : vector<2x32xf32>
    %43 = math.tanh %27 : vector<2x32xf32>
    %44 = arith.negf %32 : vector<2x32xf32>
    %45 = math.exp %44 : vector<2x32xf32>
    %cst_27 = arith.constant 1.000000e+00 : f32
    %46 = vector.broadcast %cst_27 : f32 to vector<2x32xf32>
    %47 = arith.addf %46, %45 : vector<2x32xf32>
    %48 = arith.divf %46, %47 : vector<2x32xf32>
    %49 = arith.mulf %42, %12 : vector<2x32xf32>
    %50 = arith.mulf %37, %43 : vector<2x32xf32>
    %51 = arith.addf %49, %50 : vector<2x32xf32>
    %52 = math.tanh %51 : vector<2x32xf32>
    %53 = arith.mulf %48, %52 : vector<2x32xf32>
    %54 = arith.index_cast %c0_i32_13 : i32 to index
    %c0_28 = arith.constant 0 : index
    %c0_29 = arith.constant 0 : index
    %55 = vector.load %arg9[%54, %c0_28, %c0_29] : memref<8x2x32xf32, #tpu.memory_space<vmem>>, vector<1x2x32xf32>
    %56 = vector.shape_cast %55 : vector<1x2x32xf32> to vector<2x32xf32>
    %57 = vector.shape_cast %53 : vector<2x32xf32> to vector<1x2x32xf32>
    tpu.vector_store %arg9[%54, %c0_28, %c0_29], %57 {strides = array<i32>} : memref<8x2x32xf32, #tpu.memory_space<vmem>>, vector<1x2x32xf32>,
    %c1_i32 = arith.constant 1 : i32
    %58 = arith.index_cast %c1_i32 : i32 to index
    %c0_30 = arith.constant 0 : index
    %c0_31 = arith.constant 0 : index
    %59 = vector.load %arg2[%58, %c0_30, %c0_31] : memref<8x2x32xf32, #tpu.memory_space<vmem>>, vector<1x2x32xf32>
    %60 = vector.shape_cast %59 : vector<1x2x32xf32> to vector<2x32xf32>
    %cst_32 = arith.constant dense<0.000000e+00> : vector<2x32xf32>
    %61 = tpu.matmul %53, %4, %cst_32 {dimension_numbers = #tpu.dot_dimension_numbers<[1], [0], [0], [1], [0, 0, 1, 1], [], []>} : vector<2x32xf32>, vector<32x32xf32>, vector<2x32xf32> -> vector<2x32xf32>
    %62 = arith.addf %60, %61 : vector<2x32xf32>
    %63 = arith.index_cast %c1_i32 : i32 to index
    %c0_33 = arith.constant 0 : index
    %c0_34 = arith.constant 0 : index
    %64 = vector.load %arg3[%63, %c0_33, %c0_34] : memref<8x2x32xf32, #tpu.memory_space<vmem>>, vector<1x2x32xf32>
    %65 = vector.shape_cast %64 : vector<1x2x32xf32> to vector<2x32xf32>
    %cst_35 = arith.constant dense<0.000000e+00> : vector<2x32xf32>
    %66 = tpu.matmul %53, %6, %cst_35 {dimension_numbers = #tpu.dot_dimension_numbers<[1], [0], [0], [1], [0, 0, 1, 1], [], []>} : vector<2x32xf32>, vector<32x32xf32>, vector<2x32xf32> -> vector<2x32xf32>
    %67 = arith.addf %65, %66 : vector<2x32xf32>
    %68 = arith.index_cast %c1_i32 : i32 to index
    %c0_36 = arith.constant 0 : index
    %c0_37 = arith.constant 0 : index
    %69 = vector.load %arg4[%68, %c0_36, %c0_37] : memref<8x2x32xf32, #tpu.memory_space<vmem>>, vector<1x2x32xf32>
    %70 = vector.shape_cast %69 : vector<1x2x32xf32> to vector<2x32xf32>
    %cst_38 = arith.constant dense<0.000000e+00> : vector<2x32xf32>
    %71 = tpu.matmul %53, %8, %cst_38 {dimension_numbers = #tpu.dot_dimension_numbers<[1], [0], [0], [1], [0, 0, 1, 1], [], []>} : vector<2x32xf32>, vector<32x32xf32>, vector<2x32xf32> -> vector<2x32xf32>
    %72 = arith.addf %70, %71 : vector<2x32xf32>
    %73 = arith.index_cast %c1_i32 : i32 to index
    %c0_39 = arith.constant 0 : index
    %c0_40 = arith.constant 0 : index
    %74 = vector.load %arg5[%73, %c0_39, %c0_40] : memref<8x2x32xf32, #tpu.memory_space<vmem>>, vector<1x2x32xf32>
    %75 = vector.shape_cast %74 : vector<1x2x32xf32> to vector<2x32xf32>
    %cst_41 = arith.constant dense<0.000000e+00> : vector<2x32xf32>
    %76 = tpu.matmul %53, %10, %cst_41 {dimension_numbers = #tpu.dot_dimension_numbers<[1], [0], [0], [1], [0, 0, 1, 1], [], []>} : vector<2x32xf32>, vector<32x32xf32>, vector<2x32xf32> -> vector<2x32xf32>
    %77 = arith.addf %75, %76 : vector<2x32xf32>
    %78 = arith.negf %62 : vector<2x32xf32>
    %79 = math.exp %78 : vector<2x32xf32>
    %cst_42 = arith.constant 1.000000e+00 : f32
    %80 = vector.broadcast %cst_42 : f32 to vector<2x32xf32>
    %81 = arith.addf %80, %79 : vector<2x32xf32>
    %82 = arith.divf %80, %81 : vector<2x32xf32>
    %83 = arith.negf %67 : vector<2x32xf32>
    %84 = math.exp %83 : vector<2x32xf32>
    %cst_43 = arith.constant 1.000000e+00 : f32
    %85 = vector.broadcast %cst_43 : f32 to vector<2x32xf32>
    %86 = arith.addf %85, %84 : vector<2x32xf32>
    %87 = arith.divf %85, %86 : vector<2x32xf32>
    %88 = math.tanh %72 : vector<2x32xf32>
    %89 = arith.negf %77 : vector<2x32xf32>
    %90 = math.exp %89 : vector<2x32xf32>
    %cst_44 = arith.constant 1.000000e+00 : f32
    %91 = vector.broadcast %cst_44 : f32 to vector<2x32xf32>
    %92 = arith.addf %91, %90 : vector<2x32xf32>
    %93 = arith.divf %91, %92 : vector<2x32xf32>
    %94 = arith.mulf %87, %51 : vector<2x32xf32>
    %95 = arith.mulf %82, %88 : vector<2x32xf32>
    %96 = arith.addf %94, %95 : vector<2x32xf32>
    %97 = math.tanh %96 : vector<2x32xf32>
    %98 = arith.mulf %93, %97 : vector<2x32xf32>
    %99 = arith.index_cast %c1_i32 : i32 to index
    %c0_45 = arith.constant 0 : index
    %c0_46 = arith.constant 0 : index
    %100 = vector.load %arg9[%99, %c0_45, %c0_46] : memref<8x2x32xf32, #tpu.memory_space<vmem>>, vector<1x2x32xf32>
    %101 = vector.shape_cast %100 : vector<1x2x32xf32> to vector<2x32xf32>
    %102 = vector.shape_cast %98 : vector<2x32xf32> to vector<1x2x32xf32>
    tpu.vector_store %arg9[%99, %c0_45, %c0_46], %102 {strides = array<i32>} : memref<8x2x32xf32, #tpu.memory_space<vmem>>, vector<1x2x32xf32>,
    %c2_i32 = arith.constant 2 : i32
    %103 = arith.index_cast %c2_i32 : i32 to index
    %c0_47 = arith.constant 0 : index
    %c0_48 = arith.constant 0 : index
    %104 = vector.load %arg2[%103, %c0_47, %c0_48] : memref<8x2x32xf32, #tpu.memory_space<vmem>>, vector<1x2x32xf32>
    %105 = vector.shape_cast %104 : vector<1x2x32xf32> to vector<2x32xf32>
    %cst_49 = arith.constant dense<0.000000e+00> : vector<2x32xf32>
    %106 = tpu.matmul %98, %4, %cst_49 {dimension_numbers = #tpu.dot_dimension_numbers<[1], [0], [0], [1], [0, 0, 1, 1], [], []>} : vector<2x32xf32>, vector<32x32xf32>, vector<2x32xf32> -> vector<2x32xf32>
    %107 = arith.addf %105, %106 : vector<2x32xf32>
    %108 = arith.index_cast %c2_i32 : i32 to index
    %c0_50 = arith.constant 0 : index
    %c0_51 = arith.constant 0 : index
    %109 = vector.load %arg3[%108, %c0_50, %c0_51] : memref<8x2x32xf32, #tpu.memory_space<vmem>>, vector<1x2x32xf32>
    %110 = vector.shape_cast %109 : vector<1x2x32xf32> to vector<2x32xf32>
    %cst_52 = arith.constant dense<0.000000e+00> : vector<2x32xf32>
    %111 = tpu.matmul %98, %6, %cst_52 {dimension_numbers = #tpu.dot_dimension_numbers<[1], [0], [0], [1], [0, 0, 1, 1], [], []>} : vector<2x32xf32>, vector<32x32xf32>, vector<2x32xf32> -> vector<2x32xf32>
    %112 = arith.addf %110, %111 : vector<2x32xf32>
    %113 = arith.index_cast %c2_i32 : i32 to index
    %c0_53 = arith.constant 0 : index
    %c0_54 = arith.constant 0 : index
    %114 = vector.load %arg4[%113, %c0_53, %c0_54] : memref<8x2x32xf32, #tpu.memory_space<vmem>>, vector<1x2x32xf32>
    %115 = vector.shape_cast %114 : vector<1x2x32xf32> to vector<2x32xf32>
    %cst_55 = arith.constant dense<0.000000e+00> : vector<2x32xf32>
    %116 = tpu.matmul %98, %8, %cst_55 {dimension_numbers = #tpu.dot_dimension_numbers<[1], [0], [0], [1], [0, 0, 1, 1], [], []>} : vector<2x32xf32>, vector<32x32xf32>, vector<2x32xf32> -> vector<2x32xf32>
    %117 = arith.addf %115, %116 : vector<2x32xf32>
    %118 = arith.index_cast %c2_i32 : i32 to index
    %c0_56 = arith.constant 0 : index
    %c0_57 = arith.constant 0 : index
    %119 = vector.load %arg5[%118, %c0_56, %c0_57] : memref<8x2x32xf32, #tpu.memory_space<vmem>>, vector<1x2x32xf32>
    %120 = vector.shape_cast %119 : vector<1x2x32xf32> to vector<2x32xf32>
    %cst_58 = arith.constant dense<0.000000e+00> : vector<2x32xf32>
    %121 = tpu.matmul %98, %10, %cst_58 {dimension_numbers = #tpu.dot_dimension_numbers<[1], [0], [0], [1], [0, 0, 1, 1], [], []>} : vector<2x32xf32>, vector<32x32xf32>, vector<2x32xf32> -> vector<2x32xf32>
    %122 = arith.addf %120, %121 : vector<2x32xf32>
    %123 = arith.negf %107 : vector<2x32xf32>
    %124 = math.exp %123 : vector<2x32xf32>
    %cst_59 = arith.constant 1.000000e+00 : f32
    %125 = vector.broadcast %cst_59 : f32 to vector<2x32xf32>
    %126 = arith.addf %125, %124 : vector<2x32xf32>
    %127 = arith.divf %125, %126 : vector<2x32xf32>
    %128 = arith.negf %112 : vector<2x32xf32>
    %129 = math.exp %128 : vector<2x32xf32>
    %cst_60 = arith.constant 1.000000e+00 : f32
    %130 = vector.broadcast %cst_60 : f32 to vector<2x32xf32>
    %131 = arith.addf %130, %129 : vector<2x32xf32>
    %132 = arith.divf %130, %131 : vector<2x32xf32>
    %133 = math.tanh %117 : vector<2x32xf32>
    %134 = arith.negf %122 : vector<2x32xf32>
    %135 = math.exp %134 : vector<2x32xf32>
    %cst_61 = arith.constant 1.000000e+00 : f32
    %136 = vector.broadcast %cst_61 : f32 to vector<2x32xf32>
    %137 = arith.addf %136, %135 : vector<2x32xf32>
    %138 = arith.divf %136, %137 : vector<2x32xf32>
    %139 = arith.mulf %132, %96 : vector<2x32xf32>
    %140 = arith.mulf %127, %133 : vector<2x32xf32>
    %141 = arith.addf %139, %140 : vector<2x32xf32>
    %142 = math.tanh %141 : vector<2x32xf32>
    %143 = arith.mulf %138, %142 : vector<2x32xf32>
    %144 = arith.index_cast %c2_i32 : i32 to index
    %c0_62 = arith.constant 0 : index
    %c0_63 = arith.constant 0 : index
    %145 = vector.load %arg9[%144, %c0_62, %c0_63] : memref<8x2x32xf32, #tpu.memory_space<vmem>>, vector<1x2x32xf32>
    %146 = vector.shape_cast %145 : vector<1x2x32xf32> to vector<2x32xf32>
    %147 = vector.shape_cast %143 : vector<2x32xf32> to vector<1x2x32xf32>
    tpu.vector_store %arg9[%144, %c0_62, %c0_63], %147 {strides = array<i32>} : memref<8x2x32xf32, #tpu.memory_space<vmem>>, vector<1x2x32xf32>,
    %c3_i32 = arith.constant 3 : i32
    %148 = arith.index_cast %c3_i32 : i32 to index
    %c0_64 = arith.constant 0 : index
    %c0_65 = arith.constant 0 : index
    %149 = vector.load %arg2[%148, %c0_64, %c0_65] : memref<8x2x32xf32, #tpu.memory_space<vmem>>, vector<1x2x32xf32>
    %150 = vector.shape_cast %149 : vector<1x2x32xf32> to vector<2x32xf32>
    %cst_66 = arith.constant dense<0.000000e+00> : vector<2x32xf32>
    %151 = tpu.matmul %143, %4, %cst_66 {dimension_numbers = #tpu.dot_dimension_numbers<[1], [0], [0], [1], [0, 0, 1, 1], [], []>} : vector<2x32xf32>, vector<32x32xf32>, vector<2x32xf32> -> vector<2x32xf32>
    %152 = arith.addf %150, %151 : vector<2x32xf32>
    %153 = arith.index_cast %c3_i32 : i32 to index
    %c0_67 = arith.constant 0 : index
    %c0_68 = arith.constant 0 : index
    %154 = vector.load %arg3[%153, %c0_67, %c0_68] : memref<8x2x32xf32, #tpu.memory_space<vmem>>, vector<1x2x32xf32>
    %155 = vector.shape_cast %154 : vector<1x2x32xf32> to vector<2x32xf32>
    %cst_69 = arith.constant dense<0.000000e+00> : vector<2x32xf32>
    %156 = tpu.matmul %143, %6, %cst_69 {dimension_numbers = #tpu.dot_dimension_numbers<[1], [0], [0], [1], [0, 0, 1, 1], [], []>} : vector<2x32xf32>, vector<32x32xf32>, vector<2x32xf32> -> vector<2x32xf32>
    %157 = arith.addf %155, %156 : vector<2x32xf32>
    %158 = arith.index_cast %c3_i32 : i32 to index
    %c0_70 = arith.constant 0 : index
    %c0_71 = arith.constant 0 : index
    %159 = vector.load %arg4[%158, %c0_70, %c0_71] : memref<8x2x32xf32, #tpu.memory_space<vmem>>, vector<1x2x32xf32>
    %160 = vector.shape_cast %159 : vector<1x2x32xf32> to vector<2x32xf32>
    %cst_72 = arith.constant dense<0.000000e+00> : vector<2x32xf32>
    %161 = tpu.matmul %143, %8, %cst_72 {dimension_numbers = #tpu.dot_dimension_numbers<[1], [0], [0], [1], [0, 0, 1, 1], [], []>} : vector<2x32xf32>, vector<32x32xf32>, vector<2x32xf32> -> vector<2x32xf32>
    %162 = arith.addf %160, %161 : vector<2x32xf32>
    %163 = arith.index_cast %c3_i32 : i32 to index
    %c0_73 = arith.constant 0 : index
    %c0_74 = arith.constant 0 : index
    %164 = vector.load %arg5[%163, %c0_73, %c0_74] : memref<8x2x32xf32, #tpu.memory_space<vmem>>, vector<1x2x32xf32>
    %165 = vector.shape_cast %164 : vector<1x2x32xf32> to vector<2x32xf32>
    %cst_75 = arith.constant dense<0.000000e+00> : vector<2x32xf32>
    %166 = tpu.matmul %143, %10, %cst_75 {dimension_numbers = #tpu.dot_dimension_numbers<[1], [0], [0], [1], [0, 0, 1, 1], [], []>} : vector<2x32xf32>, vector<32x32xf32>, vector<2x32xf32> -> vector<2x32xf32>
    %167 = arith.addf %165, %166 : vector<2x32xf32>
    %168 = arith.negf %152 : vector<2x32xf32>
    %169 = math.exp %168 : vector<2x32xf32>
    %cst_76 = arith.constant 1.000000e+00 : f32
    %170 = vector.broadcast %cst_76 : f32 to vector<2x32xf32>
    %171 = arith.addf %170, %169 : vector<2x32xf32>
    %172 = arith.divf %170, %171 : vector<2x32xf32>
    %173 = arith.negf %157 : vector<2x32xf32>
    %174 = math.exp %173 : vector<2x32xf32>
    %cst_77 = arith.constant 1.000000e+00 : f32
    %175 = vector.broadcast %cst_77 : f32 to vector<2x32xf32>
    %176 = arith.addf %175, %174 : vector<2x32xf32>
    %177 = arith.divf %175, %176 : vector<2x32xf32>
    %178 = math.tanh %162 : vector<2x32xf32>
    %179 = arith.negf %167 : vector<2x32xf32>
    %180 = math.exp %179 : vector<2x32xf32>
    %cst_78 = arith.constant 1.000000e+00 : f32
    %181 = vector.broadcast %cst_78 : f32 to vector<2x32xf32>
    %182 = arith.addf %181, %180 : vector<2x32xf32>
    %183 = arith.divf %181, %182 : vector<2x32xf32>
    %184 = arith.mulf %177, %141 : vector<2x32xf32>
    %185 = arith.mulf %172, %178 : vector<2x32xf32>
    %186 = arith.addf %184, %185 : vector<2x32xf32>
    %187 = math.tanh %186 : vector<2x32xf32>
    %188 = arith.mulf %183, %187 : vector<2x32xf32>
    %189 = arith.index_cast %c3_i32 : i32 to index
    %c0_79 = arith.constant 0 : index
    %c0_80 = arith.constant 0 : index
    %190 = vector.load %arg9[%189, %c0_79, %c0_80] : memref<8x2x32xf32, #tpu.memory_space<vmem>>, vector<1x2x32xf32>
    %191 = vector.shape_cast %190 : vector<1x2x32xf32> to vector<2x32xf32>
    %192 = vector.shape_cast %188 : vector<2x32xf32> to vector<1x2x32xf32>
    tpu.vector_store %arg9[%189, %c0_79, %c0_80], %192 {strides = array<i32>} : memref<8x2x32xf32, #tpu.memory_space<vmem>>, vector<1x2x32xf32>,
    %c4_i32 = arith.constant 4 : i32
    %193 = arith.index_cast %c4_i32 : i32 to index
    %c0_81 = arith.constant 0 : index
    %c0_82 = arith.constant 0 : index
    %194 = vector.load %arg2[%193, %c0_81, %c0_82] : memref<8x2x32xf32, #tpu.memory_space<vmem>>, vector<1x2x32xf32>
    %195 = vector.shape_cast %194 : vector<1x2x32xf32> to vector<2x32xf32>
    %cst_83 = arith.constant dense<0.000000e+00> : vector<2x32xf32>
    %196 = tpu.matmul %188, %4, %cst_83 {dimension_numbers = #tpu.dot_dimension_numbers<[1], [0], [0], [1], [0, 0, 1, 1], [], []>} : vector<2x32xf32>, vector<32x32xf32>, vector<2x32xf32> -> vector<2x32xf32>
    %197 = arith.addf %195, %196 : vector<2x32xf32>
    %198 = arith.index_cast %c4_i32 : i32 to index
    %c0_84 = arith.constant 0 : index
    %c0_85 = arith.constant 0 : index
    %199 = vector.load %arg3[%198, %c0_84, %c0_85] : memref<8x2x32xf32, #tpu.memory_space<vmem>>, vector<1x2x32xf32>
    %200 = vector.shape_cast %199 : vector<1x2x32xf32> to vector<2x32xf32>
    %cst_86 = arith.constant dense<0.000000e+00> : vector<2x32xf32>
    %201 = tpu.matmul %188, %6, %cst_86 {dimension_numbers = #tpu.dot_dimension_numbers<[1], [0], [0], [1], [0, 0, 1, 1], [], []>} : vector<2x32xf32>, vector<32x32xf32>, vector<2x32xf32> -> vector<2x32xf32>
    %202 = arith.addf %200, %201 : vector<2x32xf32>
    %203 = arith.index_cast %c4_i32 : i32 to index
    %c0_87 = arith.constant 0 : index
    %c0_88 = arith.constant 0 : index
    %204 = vector.load %arg4[%203, %c0_87, %c0_88] : memref<8x2x32xf32, #tpu.memory_space<vmem>>, vector<1x2x32xf32>
    %205 = vector.shape_cast %204 : vector<1x2x32xf32> to vector<2x32xf32>
    %cst_89 = arith.constant dense<0.000000e+00> : vector<2x32xf32>
    %206 = tpu.matmul %188, %8, %cst_89 {dimension_numbers = #tpu.dot_dimension_numbers<[1], [0], [0], [1], [0, 0, 1, 1], [], []>} : vector<2x32xf32>, vector<32x32xf32>, vector<2x32xf32> -> vector<2x32xf32>
    %207 = arith.addf %205, %206 : vector<2x32xf32>
    %208 = arith.index_cast %c4_i32 : i32 to index
    %c0_90 = arith.constant 0 : index
    %c0_91 = arith.constant 0 : index
    %209 = vector.load %arg5[%208, %c0_90, %c0_91] : memref<8x2x32xf32, #tpu.memory_space<vmem>>, vector<1x2x32xf32>
    %210 = vector.shape_cast %209 : vector<1x2x32xf32> to vector<2x32xf32>
    %cst_92 = arith.constant dense<0.000000e+00> : vector<2x32xf32>
    %211 = tpu.matmul %188, %10, %cst_92 {dimension_numbers = #tpu.dot_dimension_numbers<[1], [0], [0], [1], [0, 0, 1, 1], [], []>} : vector<2x32xf32>, vector<32x32xf32>, vector<2x32xf32> -> vector<2x32xf32>
    %212 = arith.addf %210, %211 : vector<2x32xf32>
    %213 = arith.negf %197 : vector<2x32xf32>
    %214 = math.exp %213 : vector<2x32xf32>
    %cst_93 = arith.constant 1.000000e+00 : f32
    %215 = vector.broadcast %cst_93 : f32 to vector<2x32xf32>
    %216 = arith.addf %215, %214 : vector<2x32xf32>
    %217 = arith.divf %215, %216 : vector<2x32xf32>
    %218 = arith.negf %202 : vector<2x32xf32>
    %219 = math.exp %218 : vector<2x32xf32>
    %cst_94 = arith.constant 1.000000e+00 : f32
    %220 = vector.broadcast %cst_94 : f32 to vector<2x32xf32>
    %221 = arith.addf %220, %219 : vector<2x32xf32>
    %222 = arith.divf %220, %221 : vector<2x32xf32>
    %223 = math.tanh %207 : vector<2x32xf32>
    %224 = arith.negf %212 : vector<2x32xf32>
    %225 = math.exp %224 : vector<2x32xf32>
    %cst_95 = arith.constant 1.000000e+00 : f32
    %226 = vector.broadcast %cst_95 : f32 to vector<2x32xf32>
    %227 = arith.addf %226, %225 : vector<2x32xf32>
    %228 = arith.divf %226, %227 : vector<2x32xf32>
    %229 = arith.mulf %222, %186 : vector<2x32xf32>
    %230 = arith.mulf %217, %223 : vector<2x32xf32>
    %231 = arith.addf %229, %230 : vector<2x32xf32>
    %232 = math.tanh %231 : vector<2x32xf32>
    %233 = arith.mulf %228, %232 : vector<2x32xf32>
    %234 = arith.index_cast %c4_i32 : i32 to index
    %c0_96 = arith.constant 0 : index
    %c0_97 = arith.constant 0 : index
    %235 = vector.load %arg9[%234, %c0_96, %c0_97] : memref<8x2x32xf32, #tpu.memory_space<vmem>>, vector<1x2x32xf32>
    %236 = vector.shape_cast %235 : vector<1x2x32xf32> to vector<2x32xf32>
    %237 = vector.shape_cast %233 : vector<2x32xf32> to vector<1x2x32xf32>
    tpu.vector_store %arg9[%234, %c0_96, %c0_97], %237 {strides = array<i32>} : memref<8x2x32xf32, #tpu.memory_space<vmem>>, vector<1x2x32xf32>,
    %c5_i32 = arith.constant 5 : i32
    %238 = arith.index_cast %c5_i32 : i32 to index
    %c0_98 = arith.constant 0 : index
    %c0_99 = arith.constant 0 : index
    %239 = vector.load %arg2[%238, %c0_98, %c0_99] : memref<8x2x32xf32, #tpu.memory_space<vmem>>, vector<1x2x32xf32>
    %240 = vector.shape_cast %239 : vector<1x2x32xf32> to vector<2x32xf32>
    %cst_100 = arith.constant dense<0.000000e+00> : vector<2x32xf32>
    %241 = tpu.matmul %233, %4, %cst_100 {dimension_numbers = #tpu.dot_dimension_numbers<[1], [0], [0], [1], [0, 0, 1, 1], [], []>} : vector<2x32xf32>, vector<32x32xf32>, vector<2x32xf32> -> vector<2x32xf32>
    %242 = arith.addf %240, %241 : vector<2x32xf32>
    %243 = arith.index_cast %c5_i32 : i32 to index
    %c0_101 = arith.constant 0 : index
    %c0_102 = arith.constant 0 : index
    %244 = vector.load %arg3[%243, %c0_101, %c0_102] : memref<8x2x32xf32, #tpu.memory_space<vmem>>, vector<1x2x32xf32>
    %245 = vector.shape_cast %244 : vector<1x2x32xf32> to vector<2x32xf32>
    %cst_103 = arith.constant dense<0.000000e+00> : vector<2x32xf32>
    %246 = tpu.matmul %233, %6, %cst_103 {dimension_numbers = #tpu.dot_dimension_numbers<[1], [0], [0], [1], [0, 0, 1, 1], [], []>} : vector<2x32xf32>, vector<32x32xf32>, vector<2x32xf32> -> vector<2x32xf32>
    %247 = arith.addf %245, %246 : vector<2x32xf32>
    %248 = arith.index_cast %c5_i32 : i32 to index
    %c0_104 = arith.constant 0 : index
    %c0_105 = arith.constant 0 : index
    %249 = vector.load %arg4[%248, %c0_104, %c0_105] : memref<8x2x32xf32, #tpu.memory_space<vmem>>, vector<1x2x32xf32>
    %250 = vector.shape_cast %249 : vector<1x2x32xf32> to vector<2x32xf32>
    %cst_106 = arith.constant dense<0.000000e+00> : vector<2x32xf32>
    %251 = tpu.matmul %233, %8, %cst_106 {dimension_numbers = #tpu.dot_dimension_numbers<[1], [0], [0], [1], [0, 0, 1, 1], [], []>} : vector<2x32xf32>, vector<32x32xf32>, vector<2x32xf32> -> vector<2x32xf32>
    %252 = arith.addf %250, %251 : vector<2x32xf32>
    %253 = arith.index_cast %c5_i32 : i32 to index
    %c0_107 = arith.constant 0 : index
    %c0_108 = arith.constant 0 : index
    %254 = vector.load %arg5[%253, %c0_107, %c0_108] : memref<8x2x32xf32, #tpu.memory_space<vmem>>, vector<1x2x32xf32>
    %255 = vector.shape_cast %254 : vector<1x2x32xf32> to vector<2x32xf32>
    %cst_109 = arith.constant dense<0.000000e+00> : vector<2x32xf32>
    %256 = tpu.matmul %233, %10, %cst_109 {dimension_numbers = #tpu.dot_dimension_numbers<[1], [0], [0], [1], [0, 0, 1, 1], [], []>} : vector<2x32xf32>, vector<32x32xf32>, vector<2x32xf32> -> vector<2x32xf32>
    %257 = arith.addf %255, %256 : vector<2x32xf32>
    %258 = arith.negf %242 : vector<2x32xf32>
    %259 = math.exp %258 : vector<2x32xf32>
    %cst_110 = arith.constant 1.000000e+00 : f32
    %260 = vector.broadcast %cst_110 : f32 to vector<2x32xf32>
    %261 = arith.addf %260, %259 : vector<2x32xf32>
    %262 = arith.divf %260, %261 : vector<2x32xf32>
    %263 = arith.negf %247 : vector<2x32xf32>
    %264 = math.exp %263 : vector<2x32xf32>
    %cst_111 = arith.constant 1.000000e+00 : f32
    %265 = vector.broadcast %cst_111 : f32 to vector<2x32xf32>
    %266 = arith.addf %265, %264 : vector<2x32xf32>
    %267 = arith.divf %265, %266 : vector<2x32xf32>
    %268 = math.tanh %252 : vector<2x32xf32>
    %269 = arith.negf %257 : vector<2x32xf32>
    %270 = math.exp %269 : vector<2x32xf32>
    %cst_112 = arith.constant 1.000000e+00 : f32
    %271 = vector.broadcast %cst_112 : f32 to vector<2x32xf32>
    %272 = arith.addf %271, %270 : vector<2x32xf32>
    %273 = arith.divf %271, %272 : vector<2x32xf32>
    %274 = arith.mulf %267, %231 : vector<2x32xf32>
    %275 = arith.mulf %262, %268 : vector<2x32xf32>
    %276 = arith.addf %274, %275 : vector<2x32xf32>
    %277 = math.tanh %276 : vector<2x32xf32>
    %278 = arith.mulf %273, %277 : vector<2x32xf32>
    %279 = arith.index_cast %c5_i32 : i32 to index
    %c0_113 = arith.constant 0 : index
    %c0_114 = arith.constant 0 : index
    %280 = vector.load %arg9[%279, %c0_113, %c0_114] : memref<8x2x32xf32, #tpu.memory_space<vmem>>, vector<1x2x32xf32>
    %281 = vector.shape_cast %280 : vector<1x2x32xf32> to vector<2x32xf32>
    %282 = vector.shape_cast %278 : vector<2x32xf32> to vector<1x2x32xf32>
    tpu.vector_store %arg9[%279, %c0_113, %c0_114], %282 {strides = array<i32>} : memref<8x2x32xf32, #tpu.memory_space<vmem>>, vector<1x2x32xf32>,
    %c6_i32 = arith.constant 6 : i32
    %283 = arith.index_cast %c6_i32 : i32 to index
    %c0_115 = arith.constant 0 : index
    %c0_116 = arith.constant 0 : index
    %284 = vector.load %arg2[%283, %c0_115, %c0_116] : memref<8x2x32xf32, #tpu.memory_space<vmem>>, vector<1x2x32xf32>
    %285 = vector.shape_cast %284 : vector<1x2x32xf32> to vector<2x32xf32>
    %cst_117 = arith.constant dense<0.000000e+00> : vector<2x32xf32>
    %286 = tpu.matmul %278, %4, %cst_117 {dimension_numbers = #tpu.dot_dimension_numbers<[1], [0], [0], [1], [0, 0, 1, 1], [], []>} : vector<2x32xf32>, vector<32x32xf32>, vector<2x32xf32> -> vector<2x32xf32>
    %287 = arith.addf %285, %286 : vector<2x32xf32>
    %288 = arith.index_cast %c6_i32 : i32 to index
    %c0_118 = arith.constant 0 : index
    %c0_119 = arith.constant 0 : index
    %289 = vector.load %arg3[%288, %c0_118, %c0_119] : memref<8x2x32xf32, #tpu.memory_space<vmem>>, vector<1x2x32xf32>
    %290 = vector.shape_cast %289 : vector<1x2x32xf32> to vector<2x32xf32>
    %cst_120 = arith.constant dense<0.000000e+00> : vector<2x32xf32>
    %291 = tpu.matmul %278, %6, %cst_120 {dimension_numbers = #tpu.dot_dimension_numbers<[1], [0], [0], [1], [0, 0, 1, 1], [], []>} : vector<2x32xf32>, vector<32x32xf32>, vector<2x32xf32> -> vector<2x32xf32>
    %292 = arith.addf %290, %291 : vector<2x32xf32>
    %293 = arith.index_cast %c6_i32 : i32 to index
    %c0_121 = arith.constant 0 : index
    %c0_122 = arith.constant 0 : index
    %294 = vector.load %arg4[%293, %c0_121, %c0_122] : memref<8x2x32xf32, #tpu.memory_space<vmem>>, vector<1x2x32xf32>
    %295 = vector.shape_cast %294 : vector<1x2x32xf32> to vector<2x32xf32>
    %cst_123 = arith.constant dense<0.000000e+00> : vector<2x32xf32>
    %296 = tpu.matmul %278, %8, %cst_123 {dimension_numbers = #tpu.dot_dimension_numbers<[1], [0], [0], [1], [0, 0, 1, 1], [], []>} : vector<2x32xf32>, vector<32x32xf32>, vector<2x32xf32> -> vector<2x32xf32>
    %297 = arith.addf %295, %296 : vector<2x32xf32>
    %298 = arith.index_cast %c6_i32 : i32 to index
    %c0_124 = arith.constant 0 : index
    %c0_125 = arith.constant 0 : index
    %299 = vector.load %arg5[%298, %c0_124, %c0_125] : memref<8x2x32xf32, #tpu.memory_space<vmem>>, vector<1x2x32xf32>
    %300 = vector.shape_cast %299 : vector<1x2x32xf32> to vector<2x32xf32>
    %cst_126 = arith.constant dense<0.000000e+00> : vector<2x32xf32>
    %301 = tpu.matmul %278, %10, %cst_126 {dimension_numbers = #tpu.dot_dimension_numbers<[1], [0], [0], [1], [0, 0, 1, 1], [], []>} : vector<2x32xf32>, vector<32x32xf32>, vector<2x32xf32> -> vector<2x32xf32>
    %302 = arith.addf %300, %301 : vector<2x32xf32>
    %303 = arith.negf %287 : vector<2x32xf32>
    %304 = math.exp %303 : vector<2x32xf32>
    %cst_127 = arith.constant 1.000000e+00 : f32
    %305 = vector.broadcast %cst_127 : f32 to vector<2x32xf32>
    %306 = arith.addf %305, %304 : vector<2x32xf32>
    %307 = arith.divf %305, %306 : vector<2x32xf32>
    %308 = arith.negf %292 : vector<2x32xf32>
    %309 = math.exp %308 : vector<2x32xf32>
    %cst_128 = arith.constant 1.000000e+00 : f32
    %310 = vector.broadcast %cst_128 : f32 to vector<2x32xf32>
    %311 = arith.addf %310, %309 : vector<2x32xf32>
    %312 = arith.divf %310, %311 : vector<2x32xf32>
    %313 = math.tanh %297 : vector<2x32xf32>
    %314 = arith.negf %302 : vector<2x32xf32>
    %315 = math.exp %314 : vector<2x32xf32>
    %cst_129 = arith.constant 1.000000e+00 : f32
    %316 = vector.broadcast %cst_129 : f32 to vector<2x32xf32>
    %317 = arith.addf %316, %315 : vector<2x32xf32>
    %318 = arith.divf %316, %317 : vector<2x32xf32>
    %319 = arith.mulf %312, %276 : vector<2x32xf32>
    %320 = arith.mulf %307, %313 : vector<2x32xf32>
    %321 = arith.addf %319, %320 : vector<2x32xf32>
    %322 = math.tanh %321 : vector<2x32xf32>
    %323 = arith.mulf %318, %322 : vector<2x32xf32>
    %324 = arith.index_cast %c6_i32 : i32 to index
    %c0_130 = arith.constant 0 : index
    %c0_131 = arith.constant 0 : index
    %325 = vector.load %arg9[%324, %c0_130, %c0_131] : memref<8x2x32xf32, #tpu.memory_space<vmem>>, vector<1x2x32xf32>
    %326 = vector.shape_cast %325 : vector<1x2x32xf32> to vector<2x32xf32>
    %327 = vector.shape_cast %323 : vector<2x32xf32> to vector<1x2x32xf32>
    tpu.vector_store %arg9[%324, %c0_130, %c0_131], %327 {strides = array<i32>} : memref<8x2x32xf32, #tpu.memory_space<vmem>>, vector<1x2x32xf32>,
    %c7_i32 = arith.constant 7 : i32
    %328 = arith.index_cast %c7_i32 : i32 to index
    %c0_132 = arith.constant 0 : index
    %c0_133 = arith.constant 0 : index
    %329 = vector.load %arg2[%328, %c0_132, %c0_133] : memref<8x2x32xf32, #tpu.memory_space<vmem>>, vector<1x2x32xf32>
    %330 = vector.shape_cast %329 : vector<1x2x32xf32> to vector<2x32xf32>
    %cst_134 = arith.constant dense<0.000000e+00> : vector<2x32xf32>
    %331 = tpu.matmul %323, %4, %cst_134 {dimension_numbers = #tpu.dot_dimension_numbers<[1], [0], [0], [1], [0, 0, 1, 1], [], []>} : vector<2x32xf32>, vector<32x32xf32>, vector<2x32xf32> -> vector<2x32xf32>
    %332 = arith.addf %330, %331 : vector<2x32xf32>
    %333 = arith.index_cast %c7_i32 : i32 to index
    %c0_135 = arith.constant 0 : index
    %c0_136 = arith.constant 0 : index
    %334 = vector.load %arg3[%333, %c0_135, %c0_136] : memref<8x2x32xf32, #tpu.memory_space<vmem>>, vector<1x2x32xf32>
    %335 = vector.shape_cast %334 : vector<1x2x32xf32> to vector<2x32xf32>
    %cst_137 = arith.constant dense<0.000000e+00> : vector<2x32xf32>
    %336 = tpu.matmul %323, %6, %cst_137 {dimension_numbers = #tpu.dot_dimension_numbers<[1], [0], [0], [1], [0, 0, 1, 1], [], []>} : vector<2x32xf32>, vector<32x32xf32>, vector<2x32xf32> -> vector<2x32xf32>
    %337 = arith.addf %335, %336 : vector<2x32xf32>
    %338 = arith.index_cast %c7_i32 : i32 to index
    %c0_138 = arith.constant 0 : index
    %c0_139 = arith.constant 0 : index
    %339 = vector.load %arg4[%338, %c0_138, %c0_139] : memref<8x2x32xf32, #tpu.memory_space<vmem>>, vector<1x2x32xf32>
    %340 = vector.shape_cast %339 : vector<1x2x32xf32> to vector<2x32xf32>
    %cst_140 = arith.constant dense<0.000000e+00> : vector<2x32xf32>
    %341 = tpu.matmul %323, %8, %cst_140 {dimension_numbers = #tpu.dot_dimension_numbers<[1], [0], [0], [1], [0, 0, 1, 1], [], []>} : vector<2x32xf32>, vector<32x32xf32>, vector<2x32xf32> -> vector<2x32xf32>
    %342 = arith.addf %340, %341 : vector<2x32xf32>
    %343 = arith.index_cast %c7_i32 : i32 to index
    %c0_141 = arith.constant 0 : index
    %c0_142 = arith.constant 0 : index
    %344 = vector.load %arg5[%343, %c0_141, %c0_142] : memref<8x2x32xf32, #tpu.memory_space<vmem>>, vector<1x2x32xf32>
    %345 = vector.shape_cast %344 : vector<1x2x32xf32> to vector<2x32xf32>
    %cst_143 = arith.constant dense<0.000000e+00> : vector<2x32xf32>
    %346 = tpu.matmul %323, %10, %cst_143 {dimension_numbers = #tpu.dot_dimension_numbers<[1], [0], [0], [1], [0, 0, 1, 1], [], []>} : vector<2x32xf32>, vector<32x32xf32>, vector<2x32xf32> -> vector<2x32xf32>
    %347 = arith.addf %345, %346 : vector<2x32xf32>
    %348 = arith.negf %332 : vector<2x32xf32>
    %349 = math.exp %348 : vector<2x32xf32>
    %cst_144 = arith.constant 1.000000e+00 : f32
    %350 = vector.broadcast %cst_144 : f32 to vector<2x32xf32>
    %351 = arith.addf %350, %349 : vector<2x32xf32>
    %352 = arith.divf %350, %351 : vector<2x32xf32>
    %353 = arith.negf %337 : vector<2x32xf32>
    %354 = math.exp %353 : vector<2x32xf32>
    %cst_145 = arith.constant 1.000000e+00 : f32
    %355 = vector.broadcast %cst_145 : f32 to vector<2x32xf32>
    %356 = arith.addf %355, %354 : vector<2x32xf32>
    %357 = arith.divf %355, %356 : vector<2x32xf32>
    %358 = math.tanh %342 : vector<2x32xf32>
    %359 = arith.negf %347 : vector<2x32xf32>
    %360 = math.exp %359 : vector<2x32xf32>
    %cst_146 = arith.constant 1.000000e+00 : f32
    %361 = vector.broadcast %cst_146 : f32 to vector<2x32xf32>
    %362 = arith.addf %361, %360 : vector<2x32xf32>
    %363 = arith.divf %361, %362 : vector<2x32xf32>
    %364 = arith.mulf %357, %321 : vector<2x32xf32>
    %365 = arith.mulf %352, %358 : vector<2x32xf32>
    %366 = arith.addf %364, %365 : vector<2x32xf32>
    %367 = math.tanh %366 : vector<2x32xf32>
    %368 = arith.mulf %363, %367 : vector<2x32xf32>
    %369 = arith.index_cast %c7_i32 : i32 to index
    %c0_147 = arith.constant 0 : index
    %c0_148 = arith.constant 0 : index
    %370 = vector.load %arg9[%369, %c0_147, %c0_148] : memref<8x2x32xf32, #tpu.memory_space<vmem>>, vector<1x2x32xf32>
    %371 = vector.shape_cast %370 : vector<1x2x32xf32> to vector<2x32xf32>
    %372 = vector.shape_cast %368 : vector<2x32xf32> to vector<1x2x32xf32>
    tpu.vector_store %arg9[%369, %c0_147, %c0_148], %372 {strides = array<i32>} : memref<8x2x32xf32, #tpu.memory_space<vmem>>, vector<1x2x32xf32>,
    %c8_i32 = arith.constant 8 : i32
    %c0_149 = arith.constant 0 : index
    %c0_150 = arith.constant 0 : index
    %373 = vector.load %arg12[%c0_149, %c0_150] : memref<2x32xf32, #tpu.memory_space<vmem>>, vector<2x32xf32>
    tpu.vector_store %arg12[%c0_149, %c0_150], %368 {strides = array<i32>} : memref<2x32xf32, #tpu.memory_space<vmem>>, vector<2x32xf32>,
    %c0_151 = arith.constant 0 : index
    %c0_152 = arith.constant 0 : index
    %374 = vector.load %arg13[%c0_151, %c0_152] : memref<2x32xf32, #tpu.memory_space<vmem>>, vector<2x32xf32>
    tpu.vector_store %arg13[%c0_151, %c0_152], %366 {strides = array<i32>} : memref<2x32xf32, #tpu.memory_space<vmem>>, vector<2x32xf32>,
    %c0_i32_153 = arith.constant 0 : i32
    %375 = arith.cmpi eq, %arg1, %c0_i32_153 : i32
    %376 = arith.extui %375 : i1 to i32
    %c0_i32_154 = arith.constant 0 : i32
    %377 = arith.cmpi ne, %376, %c0_i32_154 : i32
    scf.if %377 {
      %c0_155 = arith.constant 0 : index
      %c0_156 = arith.constant 0 : index
      %378 = vector.load %arg10[%c0_155, %c0_156] : memref<2x32xf32, #tpu.memory_space<vmem>>, vector<2x32xf32>
      tpu.vector_store %arg10[%c0_155, %c0_156], %368 {strides = array<i32>} : memref<2x32xf32, #tpu.memory_space<vmem>>, vector<2x32xf32>,
      %c0_157 = arith.constant 0 : index
      %c0_158 = arith.constant 0 : index
      %379 = vector.load %arg11[%c0_157, %c0_158] : memref<2x32xf32, #tpu.memory_space<vmem>>, vector<2x32xf32>
      tpu.vector_store %arg11[%c0_157, %c0_158], %366 {strides = array<i32>} : memref<2x32xf32, #tpu.memory_space<vmem>>, vector<2x32xf32>,
    } else {
    }
    return
  }
  func.func @transform_0(%arg0: i32, %arg1: i32) -> (i32, i32, i32) {
    %c0_i32 = arith.constant 0 : i32
    %c0_i32_0 = arith.constant 0 : i32
    return %arg1, %arg0, %c0_i32 : i32, i32, i32
  }
  func.func @transform_1(%arg0: i32, %arg1: i32) -> (i32, i32, i32) {
    %c0_i32 = arith.constant 0 : i32
    %c0_i32_0 = arith.constant 0 : i32
    return %arg1, %arg0, %c0_i32 : i32, i32, i32
  }
  func.func @transform_2(%arg0: i32, %arg1: i32) -> (i32, i32, i32) {
    %c0_i32 = arith.constant 0 : i32
    %c0_i32_0 = arith.constant 0 : i32
    return %arg1, %arg0, %c0_i32 : i32, i32, i32
  }
  func.func @transform_3(%arg0: i32, %arg1: i32) -> (i32, i32, i32) {
    %c0_i32 = arith.constant 0 : i32
    %c0_i32_0 = arith.constant 0 : i32
    return %arg1, %arg0, %c0_i32 : i32, i32, i32
  }
  func.func @transform_4(%arg0: i32, %arg1: i32) -> (i32, i32) {
    %c0_i32 = arith.constant 0 : i32
    %c0_i32_0 = arith.constant 0 : i32
    return %arg0, %c0_i32 : i32, i32
  }
  func.func @transform_5(%arg0: i32, %arg1: i32) -> (i32, i32) {
    %c0_i32 = arith.constant 0 : i32
    %c0_i32_0 = arith.constant 0 : i32
    return %arg0, %c0_i32 : i32, i32
  }
  func.func @transform_6(%arg0: i32, %arg1: i32) -> (i32, i32, i32) {
    %c0_i32 = arith.constant 0 : i32
    %c0_i32_0 = arith.constant 0 : i32
    %c0_i32_1 = arith.constant 0 : i32
    %c0_i32_2 = arith.constant 0 : i32
    return %c0_i32, %c0_i32_0, %c0_i32_1 : i32, i32, i32
  }
  func.func @transform_7(%arg0: i32, %arg1: i32) -> (i32, i32, i32) {
    %c0_i32 = arith.constant 0 : i32
    %c0_i32_0 = arith.constant 0 : i32
    return %arg1, %arg0, %c0_i32 : i32, i32, i32
  }
  func.func @transform_8(%arg0: i32, %arg1: i32) -> (i32, i32) {
    %c0_i32 = arith.constant 0 : i32
    %c0_i32_0 = arith.constant 0 : i32
    return %arg0, %c0_i32 : i32, i32
  }
  func.func @transform_9(%arg0: i32, %arg1: i32) -> (i32, i32) {
    %c0_i32 = arith.constant 0 : i32
    %c0_i32_0 = arith.constant 0 : i32
    return %arg0, %c0_i32 : i32, i32
  }
}

</mosaic_0001>

<llo_original>
// kernel: tpu_custom_call.1
$region0: #{tpu_custom_call.1}
  #allocation0 [shape = 'u32[]', space=smem, size = 0x4, offset = 0x4, fixed_abs, tag = 'smem constant byte address 0x4 - core index']
  #allocation1 [shape = 'u32[144,128]{1,0:T(1,128)}', space=vmem, size = 0x12000, scoped, tag = 'internal scratch']
  #allocation2 [shape = 'f32[2,32]{1,0:T(2,128)}', space=vmem, size = 0x400, scoped, tag = 'scratch operand']
  #allocation3 [shape = 'f32[2,32]{1,0:T(2,128)}', space=vmem, size = 0x400, scoped, tag = 'scratch operand']
  %s0 = inlined_call_operand.hbm [shape: f32[8,2,32], index: 0, kind: input, shape index: {}]
  %s1 = inlined_call_operand.hbm [shape: f32[8,2,32], index: 1, kind: input, shape index: {}]
  %s2 = inlined_call_operand.hbm [shape: f32[8,2,32], index: 2, kind: input, shape index: {}]
  %s3 = inlined_call_operand.hbm [shape: f32[8,2,32], index: 3, kind: input, shape index: {}]
  %s4 = inlined_call_operand.hbm [shape: f32[2,32], index: 4, kind: input, shape index: {}]
  %s5 = inlined_call_operand.hbm [shape: f32[2,32], index: 5, kind: input, shape index: {}]
  %s6 = inlined_call_operand.hbm [shape: f32[4,32,32], index: 6, kind: input, shape index: {}]
  %s7 = inlined_call_operand.hbm [shape: f32[8,2,32], index: 7, kind: output, shape index: {0}]
  %s8 = inlined_call_operand.hbm [shape: f32[2,32], index: 8, kind: output, shape index: {1}]
  %s9 = inlined_call_operand.hbm [shape: f32[2,32], index: 9, kind: output, shape index: {2}]
  %10 = xla_tuple %s7, %s8, %s9
  %s11 = sld [smem:[#allocation0]]
  $region90: #{tpu_custom_call.1} parent=0
    _
  %s13 = ssub.s32 1, %s11
  %s14 = scalar_select 0, %s13, %s11
  $region1: #{tpu_custom_call.1} parent=0
    #allocation4 [shape = 'u8[8192]{0}', space=vmem, size = 0x2000, scoped, tag = 'input window, operand 0, single buffered']
    #allocation5 [shape = 's32[1]{0}', space=sflag, size = 0x4, scoped, tag = 'scoped memory for tpu_custom_call.1']
    #allocation6 [shape = 's32[1]{0}', space=sflag, size = 0x4, scoped, tag = 'scoped memory for tpu_custom_call.1']
    #allocation7 [shape = 'u8[8192]{0}', space=vmem, size = 0x2000, scoped, tag = 'input window, operand 1, single buffered']
    #allocation8 [shape = 's32[1]{0}', space=sflag, size = 0x4, scoped, tag = 'scoped memory for tpu_custom_call.1']
    #allocation9 [shape = 'u8[8192]{0}', space=vmem, size = 0x2000, scoped, tag = 'input window, operand 2, single buffered']
    #allocation10 [shape = 'u8[8192]{0}', space=vmem, size = 0x2000, scoped, tag = 'input window, operand 3, single buffered']
    #allocation11 [shape = 's32[1]{0}', space=sflag, size = 0x4, scoped, tag = 'scoped memory for tpu_custom_call.1']
    #allocation12 [shape = 'u8[1024]{0}', space=vmem, size = 0x400, scoped, tag = 'input window, operand 4, single buffered']
    #allocation13 [shape = 'u8[1024]{0}', space=vmem, size = 0x400, scoped, tag = 'input window, operand 5, single buffered']
    #allocation14 [shape = 's32[1]{0}', space=sflag, size = 0x4, scoped, tag = 'scoped memory for tpu_custom_call.1']
    #allocation15 [shape = 'u8[65536]{0}', space=vmem, size = 0x10000, scoped, tag = 'input window, operand 6, single buffered']
    #allocation16 [shape = 'u8[8192]{0}', space=vmem, size = 0x2000, scoped, tag = 'output window, operand 0, single buffered']
    #allocation17 [shape = 'u8[1024]{0}', space=vmem, size = 0x400, scoped, tag = 'output window, operand 1, single buffered']
    #allocation18 [shape = 's32[1]{0}', space=sflag, size = 0x4, scoped, tag = 'scoped memory for tpu_custom_call.1']
    #allocation19 [shape = 'u8[1024]{0}', space=vmem, size = 0x400, scoped, tag = 'output window, operand 2, single buffered']
    %15 = vsyncpa [#allocation5], 0
    %16 = vsyncpa [#allocation8], 0
    %17 = vsyncpa [#allocation11], 0
    %18 = vsyncpa [#allocation14], 0
    %19 = vsyncpa [#allocation6], 0
    %20 = vsyncpa [#allocation18], 0
    // Predicated region
    $region2: #{tpu_custom_call.1} parent=1 // pred_check
      _
    $region3: #{tpu_custom_call.1} parent=1 // pred_check_branch
      %22 = sbr.rel (0) target = $region5
    $region4: #{tpu_custom_call.1} parent=1 // pred_region
      %s24 = ssub.s32 256, 256
      %25 = vsyncadd [#allocation5], %s24
      %s26 = sshll.u32 [#allocation4], 4
      %s27 = int_to_ptr.vmem [resolvable:$true] %s26
      %32 = dma.hbm_to_vmem [thread:$0]  %s0, 256, %s27, [#allocation5], 32, 32, 2
    $region5: #{tpu_custom_call.1} parent=1 // pred_fallthru
      _
    // Predicated region
    $region6: #{tpu_custom_call.1} parent=1 // pred_check
      _
    $region7: #{tpu_custom_call.1} parent=1 // pred_check_branch
      %34 = sbr.rel (0) target = $region9
    $region8: #{tpu_custom_call.1} parent=1 // pred_region
      %s36 = ssub.s32 256, 256
      %37 = vsyncadd [#allocation8], %s36
      %s38 = sshll.u32 [#allocation7], 4
      %s39 = int_to_ptr.vmem [resolvable:$true] %s38
      %44 = dma.hbm_to_vmem [thread:$0]  %s1, 256, %s39, [#allocation8], 32, 32, 2
    $region9: #{tpu_custom_call.1} parent=1 // pred_fallthru
      _
    // Predicated region
    $region10: #{tpu_custom_call.1} parent=1 // pred_check
      _
    $region11: #{tpu_custom_call.1} parent=1 // pred_check_branch
      %46 = sbr.rel (0) target = $region13
    $region12: #{tpu_custom_call.1} parent=1 // pred_region
      %s48 = ssub.s32 256, 256
      %49 = vsyncadd [#allocation8], %s48
      %s50 = sshll.u32 [#allocation9], 4
      %s51 = int_to_ptr.vmem [resolvable:$true] %s50
      %56 = dma.hbm_to_vmem [thread:$0]  %s2, 256, %s51, [#allocation8], 32, 32, 2
    $region13: #{tpu_custom_call.1} parent=1 // pred_fallthru
      _
    // Predicated region
    $region14: #{tpu_custom_call.1} parent=1 // pred_check
      _
    $region15: #{tpu_custom_call.1} parent=1 // pred_check_branch
      %58 = sbr.rel (0) target = $region17
    $region16: #{tpu_custom_call.1} parent=1 // pred_region
      %s60 = ssub.s32 256, 256
      %61 = vsyncadd [#allocation11], %s60
      %s62 = sshll.u32 [#allocation10], 4
      %s63 = int_to_ptr.vmem [resolvable:$true] %s62
      %68 = dma.hbm_to_vmem [thread:$0]  %s3, 256, %s63, [#allocation11], 32, 32, 2
    $region17: #{tpu_custom_call.1} parent=1 // pred_fallthru
      _
    // Predicated region
    $region18: #{tpu_custom_call.1} parent=1 // pred_check
      _
    $region19: #{tpu_custom_call.1} parent=1 // pred_check_branch
      %70 = sbr.rel (0) target = $region21
    $region20: #{tpu_custom_call.1} parent=1 // pred_region
      %s72 = ssub.s32 32, 32
      %73 = vsyncadd [#allocation11], %s72
      %s75 = sshll.u32 [#allocation12], 4
      %s76 = int_to_ptr.vmem [resolvable:$true] %s75
      %78 = dma.hbm_to_vmem [thread:$0]  %s4, 32, %s76, [#allocation11]
    $region21: #{tpu_custom_call.1} parent=1 // pred_fallthru
      _
    // Predicated region
    $region22: #{tpu_custom_call.1} parent=1 // pred_check
      _
    $region23: #{tpu_custom_call.1} parent=1 // pred_check_branch
      %80 = sbr.rel (0) target = $region25
    $region24: #{tpu_custom_call.1} parent=1 // pred_region
      %s82 = ssub.s32 32, 32
      %83 = vsyncadd [#allocation14], %s82
      %s85 = sshll.u32 [#allocation13], 4
      %s86 = int_to_ptr.vmem [resolvable:$true] %s85
      %88 = dma.hbm_to_vmem [thread:$0]  %s5, 32, %s86, [#allocation14]
    $region25: #{tpu_custom_call.1} parent=1 // pred_fallthru
      _
    // Predicated region
    $region26: #{tpu_custom_call.1} parent=1 // pred_check
      _
    $region27: #{tpu_custom_call.1} parent=1 // pred_check_branch
      %90 = sbr.rel (0) target = $region29
    $region28: #{tpu_custom_call.1} parent=1 // pred_region
      %s92 = ssub.s32 2048, 2048
      %93 = vsyncadd [#allocation14], %s92
      %s94 = sshll.u32 [#allocation15], 4
      %s95 = int_to_ptr.vmem [resolvable:$true] %s94
      %100 = dma.hbm_to_vmem [thread:$0]  %s6, 2048, %s95, [#allocation14], 128, 128, 8
    $region29: #{tpu_custom_call.1} parent=1 // pred_fallthru
      _
    // Predicated region
    $region30: #{tpu_custom_call.1} parent=1 // pred_check
      _
    $region31: #{tpu_custom_call.1} parent=1 // pred_check_branch
      %102 = sbr.rel (0) target = $region33
    $region32: #{tpu_custom_call.1} parent=1 // pred_region
      %103 = dma.done [#allocation5], 256
    $region33: #{tpu_custom_call.1} parent=1 // pred_fallthru
      _
    // Predicated region
    $region34: #{tpu_custom_call.1} parent=1 // pred_check
      _
    $region35: #{tpu_custom_call.1} parent=1 // pred_check_branch
      %105 = sbr.rel (0) target = $region37
    $region36: #{tpu_custom_call.1} parent=1 // pred_region
      %106 = dma.done [#allocation8], 256
    $region37: #{tpu_custom_call.1} parent=1 // pred_fallthru
      _
    // Predicated region
    $region38: #{tpu_custom_call.1} parent=1 // pred_check
      _
    $region39: #{tpu_custom_call.1} parent=1 // pred_check_branch
      %108 = sbr.rel (0) target = $region41
    $region40: #{tpu_custom_call.1} parent=1 // pred_region
      %109 = dma.done [#allocation8], 256
    $region41: #{tpu_custom_call.1} parent=1 // pred_fallthru
      _
    // Predicated region
    $region42: #{tpu_custom_call.1} parent=1 // pred_check
      _
    $region43: #{tpu_custom_call.1} parent=1 // pred_check_branch
      %111 = sbr.rel (0) target = $region45
    $region44: #{tpu_custom_call.1} parent=1 // pred_region
      %112 = dma.done [#allocation11], 256
    $region45: #{tpu_custom_call.1} parent=1 // pred_fallthru
      _
    // Predicated region
    $region46: #{tpu_custom_call.1} parent=1 // pred_check
      _
    $region47: #{tpu_custom_call.1} parent=1 // pred_check_branch
      %114 = sbr.rel (0) target = $region49
    $region48: #{tpu_custom_call.1} parent=1 // pred_region
      %115 = dma.done [#allocation11], 32
    $region49: #{tpu_custom_call.1} parent=1 // pred_fallthru
      _
    // Predicated region
    $region50: #{tpu_custom_call.1} parent=1 // pred_check
      _
    $region51: #{tpu_custom_call.1} parent=1 // pred_check_branch
      %117 = sbr.rel (0) target = $region53
    $region52: #{tpu_custom_call.1} parent=1 // pred_region
      %118 = dma.done [#allocation14], 32
    $region53: #{tpu_custom_call.1} parent=1 // pred_fallthru
      _
    // Predicated region
    $region54: #{tpu_custom_call.1} parent=1 // pred_check
      _
    $region55: #{tpu_custom_call.1} parent=1 // pred_check_branch
      %120 = sbr.rel (0) target = $region57
    $region56: #{tpu_custom_call.1} parent=1 // pred_region
      %121 = dma.done [#allocation14], 2048
    $region57: #{tpu_custom_call.1} parent=1 // pred_fallthru
      _
    %p122 = scmp.eq.s32.totalorder 0, 0
    // Predicated region
    $region58: #{tpu_custom_call.1} parent=1 // pred_check
      %p123 = pneg %p122
    $region59: #{tpu_custom_call.1} parent=1 // pred_check_branch
      %125 = sbr.rel (%p123) target = $region61
    $region60: #{tpu_custom_call.1} parent=1 // pred_region
      %v126 = vld [vmem:[#allocation12] sm:$0x3]
      %vm127 = vcmask 254976
      %128 = vst.msk [vmem:[#allocation2] sm:$0x3] %vm127, %v126
      %v129 = vld [vmem:[#allocation13] sm:$0x3]
      %130 = vst.msk [vmem:[#allocation3] sm:$0x3] %vm127, %v129
    $region61: #{tpu_custom_call.1} parent=1 // pred_fallthru
      _
    %v131 = vld [vmem:[#allocation15] sm:$0xff]
    %v132 = vld [vmem:[#allocation15 + $0x8] sm:$0xff]
    %v133 = vld [vmem:[#allocation15 + $0x10] sm:$0xff]
    %v134 = vld [vmem:[#allocation15 + $0x18] sm:$0xff]
    %s135 = scalar_lea.vmem [#allocation15], 32
    %v136 = vld [vmem:[%s135] sm:$0xff]
    %v137 = vld [vmem:[%s135 + $0x8] sm:$0xff]
    %v138 = vld [vmem:[%s135 + $0x10] sm:$0xff]
    %v139 = vld [vmem:[%s135 + $0x18] sm:$0xff]
    %s140 = scalar_lea.vmem [#allocation15], 64
    %v141 = vld [vmem:[%s140] sm:$0xff]
    %v142 = vld [vmem:[%s140 + $0x8] sm:$0xff]
    %v143 = vld [vmem:[%s140 + $0x10] sm:$0xff]
    %v144 = vld [vmem:[%s140 + $0x18] sm:$0xff]
    %s145 = scalar_lea.vmem [#allocation15], 96
    %v146 = vld [vmem:[%s145] sm:$0xff]
    %v147 = vld [vmem:[%s145 + $0x8] sm:$0xff]
    %v148 = vld [vmem:[%s145 + $0x10] sm:$0xff]
    %v149 = vld [vmem:[%s145 + $0x18] sm:$0xff]
    %v150 = vld [vmem:[#allocation2] sm:$0x3]
    %v151 = vld [vmem:[#allocation3] sm:$0x3]
    %v152 = vld [vmem:[#allocation4] sm:$0x3]
    %vm153 = vcmask 261120
    %v155 = vsel %vm153, %v150, 0
    %157 = vmatprep.subr.mxu0 0.0
    %158 = vmatpush1.msra.mxu0 %v131
    %159 = vmatprep.subr.mxu0 0.0
    %160 = vmatpush1.msra.mxu0 %v132
    %161 = vmatprep.subr.mxu0 0.0
    %162 = vmatpush1.msra.mxu0 %v133
    %163 = vmatprep.subr.mxu0 0.0
    %164 = vmatpush1.msra.mxu0 %v134
    %165 = vmatprep.subr.mxu0 0.0
    %166 = vmatpush1.msra.mxu0 0.0
    %167 = vmatprep.subr.mxu0 0.0
    %168 = vmatpush1.msra.mxu0 0.0
    %169 = vmatprep.subr.mxu0 0.0
    %170 = vmatpush1.msra.mxu0 0.0
    %171 = vmatprep.subr.mxu0 0.0
    %172 = vmatpush1.msra.mxu0 0.0
    %173 = vmatprep.subr.mxu0 0.0
    %174 = vmatpush1.msra.mxu0 0.0
    %175 = vmatprep.subr.mxu0 0.0
    %176 = vmatpush1.msra.mxu0 0.0
    %177 = vmatprep.subr.mxu0 0.0
    %178 = vmatpush1.msra.mxu0 0.0
    %179 = vmatprep.subr.mxu0 0.0
    %180 = vmatpush1.msra.mxu0 0.0
    %181 = vmatprep.subr.mxu0 0.0
    %182 = vmatpush1.msra.mxu0 0.0
    %183 = vmatprep.subr.mxu0 0.0
    %184 = vmatpush1.msra.mxu0 0.0
    %185 = vmatprep.subr.mxu0 0.0
    %186 = vmatpush1.msra.mxu0 0.0
    %187 = vmatprep.subr.mxu0 0.0
    %188 = vmatpush1.msra.mxu0 0.0
    %189 = vmatprep.subr.mxu0 0.0
    %190 = vmatpush1.msra.mxu0 0.0
    %191 = vmatprep.subr.mxu0 0.0
    %192 = vmatpush1.msra.mxu0 0.0
    %193 = vmatprep.subr.mxu0 0.0
    %194 = vmatpush1.msra.mxu0 0.0
    %195 = vmatprep.subr.mxu0 0.0
    %196 = vmatpush1.msra.mxu0 0.0
    %197 = vmatprep.subr.mxu0 0.0
    %198 = vmatpush1.msra.mxu0 0.0
    %199 = vmatprep.subr.mxu0 0.0
    %200 = vmatpush1.msra.mxu0 0.0
    %201 = vmatprep.subr.mxu0 0.0
    %202 = vmatpush1.msra.mxu0 0.0
    %203 = vmatprep.subr.mxu0 0.0
    %204 = vmatpush1.msra.mxu0 0.0
    %205 = vmatprep.subr.mxu0 0.0
    %206 = vmatpush1.msra.mxu0 0.0
    %207 = vmatprep.subr.mxu0 0.0
    %208 = vmatpush1.msra.mxu0 0.0
    %209 = vmatprep.subr.mxu0 0.0
    %210 = vmatpush1.msra.mxu0 0.0
    %211 = vmatprep.subr.mxu0 0.0
    %212 = vmatpush1.msra.mxu0 0.0
    %213 = vmatprep.subr.mxu0 0.0
    %214 = vmatpush1.msra.mxu0 0.0
    %215 = vmatprep.subr.mxu0 0.0
    %216 = vmatpush1.msra.mxu0 0.0
    %217 = vmatprep.subr.mxu0 0.0
    %218 = vmatpush1.msra.mxu0 0.0
    %219 = vmatprep.subr.mxu0 0.0
    %220 = vmatpush1.msra.mxu0 0.0
    %221 = vmatprep.mubr.f32.mxu0 0.0
    %222 = vmatmul.mubr.f32.gmra.mrb[0].mxu0 %v155
    %v223 = vpop.f32.mrb[0].mxu0
    %v224 = vadd.f32 0.0, %v223
    %v225 = vpop.f32.mrb[0].mxu0
    %226 = vdwg.mxu0
    %v227 = vadd.f32 %v152, %v224
    %v228 = vld [vmem:[#allocation7] sm:$0x3]
    %229 = vmatprep.subr.mxu0 0.0
    %230 = vmatpush1.msra.mxu0 %v136
    %231 = vmatprep.subr.mxu0 0.0
    %232 = vmatpush1.msra.mxu0 %v137
    %233 = vmatprep.subr.mxu0 0.0
    %234 = vmatpush1.msra.mxu0 %v138
    %235 = vmatprep.subr.mxu0 0.0
    %236 = vmatpush1.msra.mxu0 %v139
    %237 = vmatprep.subr.mxu0 0.0
    %238 = vmatpush1.msra.mxu0 0.0
    %239 = vmatprep.subr.mxu0 0.0
    %240 = vmatpush1.msra.mxu0 0.0
    %241 = vmatprep.subr.mxu0 0.0
    %242 = vmatpush1.msra.mxu0 0.0
    %243 = vmatprep.subr.mxu0 0.0
    %244 = vmatpush1.msra.mxu0 0.0
    %245 = vmatprep.subr.mxu0 0.0
    %246 = vmatpush1.msra.mxu0 0.0
    %247 = vmatprep.subr.mxu0 0.0
    %248 = vmatpush1.msra.mxu0 0.0
    %249 = vmatprep.subr.mxu0 0.0
    %250 = vmatpush1.msra.mxu0 0.0
    %251 = vmatprep.subr.mxu0 0.0
    %252 = vmatpush1.msra.mxu0 0.0
    %253 = vmatprep.subr.mxu0 0.0
    %254 = vmatpush1.msra.mxu0 0.0
    %255 = vmatprep.subr.mxu0 0.0
    %256 = vmatpush1.msra.mxu0 0.0
    %257 = vmatprep.subr.mxu0 0.0
    %258 = vmatpush1.msra.mxu0 0.0
    %259 = vmatprep.subr.mxu0 0.0
    %260 = vmatpush1.msra.mxu0 0.0
    %261 = vmatprep.subr.mxu0 0.0
    %262 = vmatpush1.msra.mxu0 0.0
    %263 = vmatprep.subr.mxu0 0.0
    %264 = vmatpush1.msra.mxu0 0.0
    %265 = vmatprep.subr.mxu0 0.0
    %266 = vmatpush1.msra.mxu0 0.0
    %267 = vmatprep.subr.mxu0 0.0
    %268 = vmatpush1.msra.mxu0 0.0
    %269 = vmatprep.subr.mxu0 0.0
    %270 = vmatpush1.msra.mxu0 0.0
    %271 = vmatprep.subr.mxu0 0.0
    %272 = vmatpush1.msra.mxu0 0.0
    %273 = vmatprep.subr.mxu0 0.0
    %274 = vmatpush1.msra.mxu0 0.0
    %275 = vmatprep.subr.mxu0 0.0
    %276 = vmatpush1.msra.mxu0 0.0
    %277 = vmatprep.subr.mxu0 0.0
    %278 = vmatpush1.msra.mxu0 0.0
    %279 = vmatprep.subr.mxu0 0.0
    %280 = vmatpush1.msra.mxu0 0.0
    %281 = vmatprep.subr.mxu0 0.0
    %282 = vmatpush1.msra.mxu0 0.0
    %283 = vmatprep.subr.mxu0 0.0
    %284 = vmatpush1.msra.mxu0 0.0
    %285 = vmatprep.subr.mxu0 0.0
    %286 = vmatpush1.msra.mxu0 0.0
    %287 = vmatprep.subr.mxu0 0.0
    %288 = vmatpush1.msra.mxu0 0.0
    %289 = vmatprep.subr.mxu0 0.0
    %290 = vmatpush1.msra.mxu0 0.0
    %291 = vmatprep.subr.mxu0 0.0
    %292 = vmatpush1.msra.mxu0 0.0
    %293 = vmatprep.mubr.f32.mxu0 0.0
    %294 = vmatmul.mubr.f32.gmra.mrb[0].mxu0 %v155
    %v295 = vpop.f32.mrb[0].mxu0
    %v296 = vadd.f32 0.0, %v295
    %v297 = vpop.f32.mrb[0].mxu0
    %298 = vdwg.mxu0
    %v299 = vadd.f32 %v228, %v296
    %v300 = vld [vmem:[#allocation9] sm:$0x3]
    %301 = vmatprep.subr.mxu0 0.0
    %302 = vmatpush1.msra.mxu0 %v141
    %303 = vmatprep.subr.mxu0 0.0
    %304 = vmatpush1.msra.mxu0 %v142
    %305 = vmatprep.subr.mxu0 0.0
    %306 = vmatpush1.msra.mxu0 %v143
    %307 = vmatprep.subr.mxu0 0.0
    %308 = vmatpush1.msra.mxu0 %v144
    %309 = vmatprep.subr.mxu0 0.0
    %310 = vmatpush1.msra.mxu0 0.0
    %311 = vmatprep.subr.mxu0 0.0
    %312 = vmatpush1.msra.mxu0 0.0
    %313 = vmatprep.subr.mxu0 0.0
    %314 = vmatpush1.msra.mxu0 0.0
    %315 = vmatprep.subr.mxu0 0.0
    %316 = vmatpush1.msra.mxu0 0.0
    %317 = vmatprep.subr.mxu0 0.0
    %318 = vmatpush1.msra.mxu0 0.0
    %319 = vmatprep.subr.mxu0 0.0
    %320 = vmatpush1.msra.mxu0 0.0
    %321 = vmatprep.subr.mxu0 0.0
    %322 = vmatpush1.msra.mxu0 0.0
    %323 = vmatprep.subr.mxu0 0.0
    %324 = vmatpush1.msra.mxu0 0.0
    %325 = vmatprep.subr.mxu0 0.0
    %326 = vmatpush1.msra.mxu0 0.0
    %327 = vmatprep.subr.mxu0 0.0
    %328 = vmatpush1.msra.mxu0 0.0
    %329 = vmatprep.subr.mxu0 0.0
    %330 = vmatpush1.msra.mxu0 0.0
    %331 = vmatprep.subr.mxu0 0.0
    %332 = vmatpush1.msra.mxu0 0.0
    %333 = vmatprep.subr.mxu0 0.0
    %334 = vmatpush1.msra.mxu0 0.0
    %335 = vmatprep.subr.mxu0 0.0
    %336 = vmatpush1.msra.mxu0 0.0
    %337 = vmatprep.subr.mxu0 0.0
    %338 = vmatpush1.msra.mxu0 0.0
    %339 = vmatprep.subr.mxu0 0.0
    %340 = vmatpush1.msra.mxu0 0.0
    %341 = vmatprep.subr.mxu0 0.0
    %342 = vmatpush1.msra.mxu0 0.0
    %343 = vmatprep.subr.mxu0 0.0
    %344 = vmatpush1.msra.mxu0 0.0
    %345 = vmatprep.subr.mxu0 0.0
    %346 = vmatpush1.msra.mxu0 0.0
    %347 = vmatprep.subr.mxu0 0.0
    %348 = vmatpush1.msra.mxu0 0.0
    %349 = vmatprep.subr.mxu0 0.0
    %350 = vmatpush1.msra.mxu0 0.0
    %351 = vmatprep.subr.mxu0 0.0
    %352 = vmatpush1.msra.mxu0 0.0
    %353 = vmatprep.subr.mxu0 0.0
    %354 = vmatpush1.msra.mxu0 0.0
    %355 = vmatprep.subr.mxu0 0.0
    %356 = vmatpush1.msra.mxu0 0.0
    %357 = vmatprep.subr.mxu0 0.0
    %358 = vmatpush1.msra.mxu0 0.0
    %359 = vmatprep.subr.mxu0 0.0
    %360 = vmatpush1.msra.mxu0 0.0
    %361 = vmatprep.subr.mxu0 0.0
    %362 = vmatpush1.msra.mxu0 0.0
    %363 = vmatprep.subr.mxu0 0.0
    %364 = vmatpush1.msra.mxu0 0.0
    %365 = vmatprep.mubr.f32.mxu0 0.0
    %366 = vmatmul.mubr.f32.gmra.mrb[0].mxu0 %v155
    %v367 = vpop.f32.mrb[0].mxu0
    %v368 = vadd.f32 0.0, %v367
    %v369 = vpop.f32.mrb[0].mxu0
    %370 = vdwg.mxu0
    %v371 = vadd.f32 %v300, %v368
    %v372 = vld [vmem:[#allocation10] sm:$0x3]
    %373 = vmatprep.subr.mxu0 0.0
    %374 = vmatpush1.msra.mxu0 %v146
    %375 = vmatprep.subr.mxu0 0.0
    %376 = vmatpush1.msra.mxu0 %v147
    %377 = vmatprep.subr.mxu0 0.0
    %378 = vmatpush1.msra.mxu0 %v148
    %379 = vmatprep.subr.mxu0 0.0
    %380 = vmatpush1.msra.mxu0 %v149
    %381 = vmatprep.subr.mxu0 0.0
    %382 = vmatpush1.msra.mxu0 0.0
    %383 = vmatprep.subr.mxu0 0.0
    %384 = vmatpush1.msra.mxu0 0.0
    %385 = vmatprep.subr.mxu0 0.0
    %386 = vmatpush1.msra.mxu0 0.0
    %387 = vmatprep.subr.mxu0 0.0
    %388 = vmatpush1.msra.mxu0 0.0
    %389 = vmatprep.subr.mxu0 0.0
    %390 = vmatpush1.msra.mxu0 0.0
    %391 = vmatprep.subr.mxu0 0.0
    %392 = vmatpush1.msra.mxu0 0.0
    %393 = vmatprep.subr.mxu0 0.0
    %394 = vmatpush1.msra.mxu0 0.0
    %395 = vmatprep.subr.mxu0 0.0
    %396 = vmatpush1.msra.mxu0 0.0
    %397 = vmatprep.subr.mxu0 0.0
    %398 = vmatpush1.msra.mxu0 0.0
    %399 = vmatprep.subr.mxu0 0.0
    %400 = vmatpush1.msra.mxu0 0.0
    %401 = vmatprep.subr.mxu0 0.0
    %402 = vmatpush1.msra.mxu0 0.0
    %403 = vmatprep.subr.mxu0 0.0
    %404 = vmatpush1.msra.mxu0 0.0
    %405 = vmatprep.subr.mxu0 0.0
    %406 = vmatpush1.msra.mxu0 0.0
    %407 = vmatprep.subr.mxu0 0.0
    %408 = vmatpush1.msra.mxu0 0.0
    %409 = vmatprep.subr.mxu0 0.0
    %410 = vmatpush1.msra.mxu0 0.0
    %411 = vmatprep.subr.mxu0 0.0
    %412 = vmatpush1.msra.mxu0 0.0
    %413 = vmatprep.subr.mxu0 0.0
    %414 = vmatpush1.msra.mxu0 0.0
    %415 = vmatprep.subr.mxu0 0.0
    %416 = vmatpush1.msra.mxu0 0.0
    %417 = vmatprep.subr.mxu0 0.0
    %418 = vmatpush1.msra.mxu0 0.0
    %419 = vmatprep.subr.mxu0 0.0
    %420 = vmatpush1.msra.mxu0 0.0
    %421 = vmatprep.subr.mxu0 0.0
    %422 = vmatpush1.msra.mxu0 0.0
    %423 = vmatprep.subr.mxu0 0.0
    %424 = vmatpush1.msra.mxu0 0.0
    %425 = vmatprep.subr.mxu0 0.0
    %426 = vmatpush1.msra.mxu0 0.0
    %427 = vmatprep.subr.mxu0 0.0
    %428 = vmatpush1.msra.mxu0 0.0
    %429 = vmatprep.subr.mxu0 0.0
    %430 = vmatpush1.msra.mxu0 0.0
    %431 = vmatprep.subr.mxu0 0.0
    %432 = vmatpush1.msra.mxu0 0.0
    %433 = vmatprep.subr.mxu0 0.0
    %434 = vmatpush1.msra.mxu0 0.0
    %435 = vmatprep.subr.mxu0 0.0
    %436 = vmatpush1.msra.mxu0 0.0
    %437 = vmatprep.mubr.f32.mxu0 0.0
    %438 = vmatmul.mubr.f32.gmra.mrb[0].mxu0 %v155
    %v439 = vpop.f32.mrb[0].mxu0
    %v440 = vadd.f32 0.0, %v439
    %v441 = vpop.f32.mrb[0].mxu0
    %442 = vdwg.mxu0
    %v443 = vadd.f32 %v372, %v440
    %v444 = vxor.u32 %v227, 2147483648
    %v445 = vmul.f32 %v444, 1.442695
    %v446 = vpow.pop %v445
    %v447 = vadd.f32 %v446, 1.0
    %v448 = vrcp.pop %v447
    %v449 = vmul.f32 1.0, %v448
    %v450 = vxor.u32 %v299, 2147483648
    %v451 = vmul.f32 %v450, 1.442695
    %v452 = vpow.pop %v451
    %v453 = vadd.f32 %v452, 1.0
    %v454 = vrcp.pop %v453
    %v455 = vmul.f32 1.0, %v454
    %v456 = vtanh.pop %v371
    %v457 = vxor.u32 %v443, 2147483648
    %v458 = vmul.f32 %v457, 1.442695
    %v459 = vpow.pop %v458
    %v460 = vadd.f32 %v459, 1.0
    %v461 = vrcp.pop %v460
    %v462 = vmul.f32 1.0, %v461
    %v463 = vmul.f32 %v455, %v151
    %v464 = vmul.f32 %v449, %v456
    %v465 = vadd.f32 %v463, %v464
    %v466 = vtanh.pop %v465
    %v467 = vmul.f32 %v462, %v466
    %vm468 = vcmask 254976
    %469 = vst.msk [vmem:[#allocation16] sm:$0x3] %vm468, %v467
    %s470 = scalar_lea.vmem [#allocation4], 2
    %v471 = vld [vmem:[%s470] sm:$0x3]
    %v473 = vsel %vm153, %v467, 0
    %475 = vmatprep.subr.mxu0 0.0
    %476 = vmatpush1.msra.mxu0 %v131
    %477 = vmatprep.subr.mxu0 0.0
    %478 = vmatpush1.msra.mxu0 %v132
    %479 = vmatprep.subr.mxu0 0.0
    %480 = vmatpush1.msra.mxu0 %v133
    %481 = vmatprep.subr.mxu0 0.0
    %482 = vmatpush1.msra.mxu0 %v134
    %483 = vmatprep.subr.mxu0 0.0
    %484 = vmatpush1.msra.mxu0 0.0
    %485 = vmatprep.subr.mxu0 0.0
    %486 = vmatpush1.msra.mxu0 0.0
    %487 = vmatprep.subr.mxu0 0.0
    %488 = vmatpush1.msra.mxu0 0.0
    %489 = vmatprep.subr.mxu0 0.0
    %490 = vmatpush1.msra.mxu0 0.0
    %491 = vmatprep.subr.mxu0 0.0
    %492 = vmatpush1.msra.mxu0 0.0
    %493 = vmatprep.subr.mxu0 0.0
    %494 = vmatpush1.msra.mxu0 0.0
    %495 = vmatprep.subr.mxu0 0.0
    %496 = vmatpush1.msra.mxu0 0.0
    %497 = vmatprep.subr.mxu0 0.0
    %498 = vmatpush1.msra.mxu0 0.0
    %499 = vmatprep.subr.mxu0 0.0
    %500 = vmatpush1.msra.mxu0 0.0
    %501 = vmatprep.subr.mxu0 0.0
    %502 = vmatpush1.msra.mxu0 0.0
    %503 = vmatprep.subr.mxu0 0.0
    %504 = vmatpush1.msra.mxu0 0.0
    %505 = vmatprep.subr.mxu0 0.0
    %506 = vmatpush1.msra.mxu0 0.0
    %507 = vmatprep.subr.mxu0 0.0
    %508 = vmatpush1.msra.mxu0 0.0
    %509 = vmatprep.subr.mxu0 0.0
    %510 = vmatpush1.msra.mxu0 0.0
    %511 = vmatprep.subr.mxu0 0.0
    %512 = vmatpush1.msra.mxu0 0.0
    %513 = vmatprep.subr.mxu0 0.0
    %514 = vmatpush1.msra.mxu0 0.0
    %515 = vmatprep.subr.mxu0 0.0
    %516 = vmatpush1.msra.mxu0 0.0
    %517 = vmatprep.subr.mxu0 0.0
    %518 = vmatpush1.msra.mxu0 0.0
    %519 = vmatprep.subr.mxu0 0.0
    %520 = vmatpush1.msra.mxu0 0.0
    %521 = vmatprep.subr.mxu0 0.0
    %522 = vmatpush1.msra.mxu0 0.0
    %523 = vmatprep.subr.mxu0 0.0
    %524 = vmatpush1.msra.mxu0 0.0
    %525 = vmatprep.subr.mxu0 0.0
    %526 = vmatpush1.msra.mxu0 0.0
    %527 = vmatprep.subr.mxu0 0.0
    %528 = vmatpush1.msra.mxu0 0.0
    %529 = vmatprep.subr.mxu0 0.0
    %530 = vmatpush1.msra.mxu0 0.0
    %531 = vmatprep.subr.mxu0 0.0
    %532 = vmatpush1.msra.mxu0 0.0
    %533 = vmatprep.subr.mxu0 0.0
    %534 = vmatpush1.msra.mxu0 0.0
    %535 = vmatprep.subr.mxu0 0.0
    %536 = vmatpush1.msra.mxu0 0.0
    %537 = vmatprep.subr.mxu0 0.0
    %538 = vmatpush1.msra.mxu0 0.0
    %539 = vmatprep.mubr.f32.mxu0 0.0
    %540 = vmatmul.mubr.f32.gmra.mrb[0].mxu0 %v473
    %v541 = vpop.f32.mrb[0].mxu0
    %v542 = vadd.f32 0.0, %v541
    %v543 = vpop.f32.mrb[0].mxu0
    %544 = vdwg.mxu0
    %v545 = vadd.f32 %v471, %v542
    %s546 = scalar_lea.vmem [#allocation7], 2
    %v547 = vld [vmem:[%s546] sm:$0x3]
    %548 = vmatprep.subr.mxu0 0.0
    %549 = vmatpush1.msra.mxu0 %v136
    %550 = vmatprep.subr.mxu0 0.0
    %551 = vmatpush1.msra.mxu0 %v137
    %552 = vmatprep.subr.mxu0 0.0
    %553 = vmatpush1.msra.mxu0 %v138
    %554 = vmatprep.subr.mxu0 0.0
    %555 = vmatpush1.msra.mxu0 %v139
    %556 = vmatprep.subr.mxu0 0.0
    %557 = vmatpush1.msra.mxu0 0.0
    %558 = vmatprep.subr.mxu0 0.0
    %559 = vmatpush1.msra.mxu0 0.0
    %560 = vmatprep.subr.mxu0 0.0
    %561 = vmatpush1.msra.mxu0 0.0
    %562 = vmatprep.subr.mxu0 0.0
    %563 = vmatpush1.msra.mxu0 0.0
    %564 = vmatprep.subr.mxu0 0.0
    %565 = vmatpush1.msra.mxu0 0.0
    %566 = vmatprep.subr.mxu0 0.0
    %567 = vmatpush1.msra.mxu0 0.0
    %568 = vmatprep.subr.mxu0 0.0
    %569 = vmatpush1.msra.mxu0 0.0
    %570 = vmatprep.subr.mxu0 0.0
    %571 = vmatpush1.msra.mxu0 0.0
    %572 = vmatprep.subr.mxu0 0.0
    %573 = vmatpush1.msra.mxu0 0.0
    %574 = vmatprep.subr.mxu0 0.0
    %575 = vmatpush1.msra.mxu0 0.0
    %576 = vmatprep.subr.mxu0 0.0
    %577 = vmatpush1.msra.mxu0 0.0
    %578 = vmatprep.subr.mxu0 0.0
    %579 = vmatpush1.msra.mxu0 0.0
    %580 = vmatprep.subr.mxu0 0.0
    %581 = vmatpush1.msra.mxu0 0.0
    %582 = vmatprep.subr.mxu0 0.0
    %583 = vmatpush1.msra.mxu0 0.0
    %584 = vmatprep.subr.mxu0 0.0
    %585 = vmatpush1.msra.mxu0 0.0
    %586 = vmatprep.subr.mxu0 0.0
    %587 = vmatpush1.msra.mxu0 0.0
    %588 = vmatprep.subr.mxu0 0.0
    %589 = vmatpush1.msra.mxu0 0.0
    %590 = vmatprep.subr.mxu0 0.0
    %591 = vmatpush1.msra.mxu0 0.0
    %592 = vmatprep.subr.mxu0 0.0
    %593 = vmatpush1.msra.mxu0 0.0
    %594 = vmatprep.subr.mxu0 0.0
    %595 = vmatpush1.msra.mxu0 0.0
    %596 = vmatprep.subr.mxu0 0.0
    %597 = vmatpush1.msra.mxu0 0.0
    %598 = vmatprep.subr.mxu0 0.0
    %599 = vmatpush1.msra.mxu0 0.0
    %600 = vmatprep.subr.mxu0 0.0
    %601 = vmatpush1.msra.mxu0 0.0
    %602 = vmatprep.subr.mxu0 0.0
    %603 = vmatpush1.msra.mxu0 0.0
    %604 = vmatprep.subr.mxu0 0.0
    %605 = vmatpush1.msra.mxu0 0.0
    %606 = vmatprep.subr.mxu0 0.0
    %607 = vmatpush1.msra.mxu0 0.0
    %608 = vmatprep.subr.mxu0 0.0
    %609 = vmatpush1.msra.mxu0 0.0
    %610 = vmatprep.subr.mxu0 0.0
    %611 = vmatpush1.msra.mxu0 0.0
    %612 = vmatprep.mubr.f32.mxu0 0.0
    %613 = vmatmul.mubr.f32.gmra.mrb[0].mxu0 %v473
    %v614 = vpop.f32.mrb[0].mxu0
    %v615 = vadd.f32 0.0, %v614
    %v616 = vpop.f32.mrb[0].mxu0
    %617 = vdwg.mxu0
    %v618 = vadd.f32 %v547, %v615
    %s619 = scalar_lea.vmem [#allocation9], 2
    %v620 = vld [vmem:[%s619] sm:$0x3]
    %621 = vmatprep.subr.mxu0 0.0
    %622 = vmatpush1.msra.mxu0 %v141
    %623 = vmatprep.subr.mxu0 0.0
    %624 = vmatpush1.msra.mxu0 %v142
    %625 = vmatprep.subr.mxu0 0.0
    %626 = vmatpush1.msra.mxu0 %v143
    %627 = vmatprep.subr.mxu0 0.0
    %628 = vmatpush1.msra.mxu0 %v144
    %629 = vmatprep.subr.mxu0 0.0
    %630 = vmatpush1.msra.mxu0 0.0
    %631 = vmatprep.subr.mxu0 0.0
    %632 = vmatpush1.msra.mxu0 0.0
    %633 = vmatprep.subr.mxu0 0.0
    %634 = vmatpush1.msra.mxu0 0.0
    %635 = vmatprep.subr.mxu0 0.0
    %636 = vmatpush1.msra.mxu0 0.0
    %637 = vmatprep.subr.mxu0 0.0
    %638 = vmatpush1.msra.mxu0 0.0
    %639 = vmatprep.subr.mxu0 0.0
    %640 = vmatpush1.msra.mxu0 0.0
    %641 = vmatprep.subr.mxu0 0.0
    %642 = vmatpush1.msra.mxu0 0.0
    %643 = vmatprep.subr.mxu0 0.0
    %644 = vmatpush1.msra.mxu0 0.0
    %645 = vmatprep.subr.mxu0 0.0
    %646 = vmatpush1.msra.mxu0 0.0
    %647 = vmatprep.subr.mxu0 0.0
    %648 = vmatpush1.msra.mxu0 0.0
    %649 = vmatprep.subr.mxu0 0.0
    %650 = vmatpush1.msra.mxu0 0.0
    %651 = vmatprep.subr.mxu0 0.0
    %652 = vmatpush1.msra.mxu0 0.0
    %653 = vmatprep.subr.mxu0 0.0
    %654 = vmatpush1.msra.mxu0 0.0
    %655 = vmatprep.subr.mxu0 0.0
    %656 = vmatpush1.msra.mxu0 0.0
    %657 = vmatprep.subr.mxu0 0.0
    %658 = vmatpush1.msra.mxu0 0.0
    %659 = vmatprep.subr.mxu0 0.0
    %660 = vmatpush1.msra.mxu0 0.0
    %661 = vmatprep.subr.mxu0 0.0
    %662 = vmatpush1.msra.mxu0 0.0
    %663 = vmatprep.subr.mxu0 0.0
    %664 = vmatpush1.msra.mxu0 0.0
    %665 = vmatprep.subr.mxu0 0.0
    %666 = vmatpush1.msra.mxu0 0.0
    %667 = vmatprep.subr.mxu0 0.0
    %668 = vmatpush1.msra.mxu0 0.0
    %669 = vmatprep.subr.mxu0 0.0
    %670 = vmatpush1.msra.mxu0 0.0
    %671 = vmatprep.subr.mxu0 0.0
    %672 = vmatpush1.msra.mxu0 0.0
    %673 = vmatprep.subr.mxu0 0.0
    %674 = vmatpush1.msra.mxu0 0.0
    %675 = vmatprep.subr.mxu0 0.0
    %676 = vmatpush1.msra.mxu0 0.0
    %677 = vmatprep.subr.mxu0 0.0
    %678 = vmatpush1.msra.mxu0 0.0
    %679 = vmatprep.subr.mxu0 0.0
    %680 = vmatpush1.msra.mxu0 0.0
    %681 = vmatprep.subr.mxu0 0.0
    %682 = vmatpush1.msra.mxu0 0.0
    %683 = vmatprep.subr.mxu0 0.0
    %684 = vmatpush1.msra.mxu0 0.0
    %685 = vmatprep.mubr.f32.mxu0 0.0
    %686 = vmatmul.mubr.f32.gmra.mrb[0].mxu0 %v473
    %v687 = vpop.f32.mrb[0].mxu0
    %v688 = vadd.f32 0.0, %v687
    %v689 = vpop.f32.mrb[0].mxu0
    %690 = vdwg.mxu0
    %v691 = vadd.f32 %v620, %v688
    %s692 = scalar_lea.vmem [#allocation10], 2
    %v693 = vld [vmem:[%s692] sm:$0x3]
    %694 = vmatprep.subr.mxu0 0.0
    %695 = vmatpush1.msra.mxu0 %v146
    %696 = vmatprep.subr.mxu0 0.0
    %697 = vmatpush1.msra.mxu0 %v147
    %698 = vmatprep.subr.mxu0 0.0
    %699 = vmatpush1.msra.mxu0 %v148
    %700 = vmatprep.subr.mxu0 0.0
    %701 = vmatpush1.msra.mxu0 %v149
    %702 = vmatprep.subr.mxu0 0.0
    %703 = vmatpush1.msra.mxu0 0.0
    %704 = vmatprep.subr.mxu0 0.0
    %705 = vmatpush1.msra.mxu0 0.0
    %706 = vmatprep.subr.mxu0 0.0
    %707 = vmatpush1.msra.mxu0 0.0
    %708 = vmatprep.subr.mxu0 0.0
    %709 = vmatpush1.msra.mxu0 0.0
    %710 = vmatprep.subr.mxu0 0.0
    %711 = vmatpush1.msra.mxu0 0.0
    %712 = vmatprep.subr.mxu0 0.0
    %713 = vmatpush1.msra.mxu0 0.0
    %714 = vmatprep.subr.mxu0 0.0
    %715 = vmatpush1.msra.mxu0 0.0
    %716 = vmatprep.subr.mxu0 0.0
    %717 = vmatpush1.msra.mxu0 0.0
    %718 = vmatprep.subr.mxu0 0.0
    %719 = vmatpush1.msra.mxu0 0.0
    %720 = vmatprep.subr.mxu0 0.0
    %721 = vmatpush1.msra.mxu0 0.0
    %722 = vmatprep.subr.mxu0 0.0
    %723 = vmatpush1.msra.mxu0 0.0
    %724 = vmatprep.subr.mxu0 0.0
    %725 = vmatpush1.msra.mxu0 0.0
    %726 = vmatprep.subr.mxu0 0.0
    %727 = vmatpush1.msra.mxu0 0.0
    %728 = vmatprep.subr.mxu0 0.0
    %729 = vmatpush1.msra.mxu0 0.0
    %730 = vmatprep.subr.mxu0 0.0
    %731 = vmatpush1.msra.mxu0 0.0
    %732 = vmatprep.subr.mxu0 0.0
    %733 = vmatpush1.msra.mxu0 0.0
    %734 = vmatprep.subr.mxu0 0.0
    %735 = vmatpush1.msra.mxu0 0.0
    %736 = vmatprep.subr.mxu0 0.0
    %737 = vmatpush1.msra.mxu0 0.0
    %738 = vmatprep.subr.mxu0 0.0
    %739 = vmatpush1.msra.mxu0 0.0
    %740 = vmatprep.subr.mxu0 0.0
    %741 = vmatpush1.msra.mxu0 0.0
    %742 = vmatprep.subr.mxu0 0.0
    %743 = vmatpush1.msra.mxu0 0.0
    %744 = vmatprep.subr.mxu0 0.0
    %745 = vmatpush1.msra.mxu0 0.0
    %746 = vmatprep.subr.mxu0 0.0
    %747 = vmatpush1.msra.mxu0 0.0
    %748 = vmatprep.subr.mxu0 0.0
    %749 = vmatpush1.msra.mxu0 0.0
    %750 = vmatprep.subr.mxu0 0.0
    %751 = vmatpush1.msra.mxu0 0.0
    %752 = vmatprep.subr.mxu0 0.0
    %753 = vmatpush1.msra.mxu0 0.0
    %754 = vmatprep.subr.mxu0 0.0
    %755 = vmatpush1.msra.mxu0 0.0
    %756 = vmatprep.subr.mxu0 0.0
    %757 = vmatpush1.msra.mxu0 0.0
    %758 = vmatprep.mubr.f32.mxu0 0.0
    %759 = vmatmul.mubr.f32.gmra.mrb[0].mxu0 %v473
    %v760 = vpop.f32.mrb[0].mxu0
    %v761 = vadd.f32 0.0, %v760
    %v762 = vpop.f32.mrb[0].mxu0
    %763 = vdwg.mxu0
    %v764 = vadd.f32 %v693, %v761
    %v765 = vxor.u32 %v545, 2147483648
    %v766 = vmul.f32 %v765, 1.442695
    %v767 = vpow.pop %v766
    %v768 = vadd.f32 %v767, 1.0
    %v769 = vrcp.pop %v768
    %v770 = vmul.f32 1.0, %v769
    %v771 = vxor.u32 %v618, 2147483648
    %v772 = vmul.f32 %v771, 1.442695
    %v773 = vpow.pop %v772
    %v774 = vadd.f32 %v773, 1.0
    %v775 = vrcp.pop %v774
    %v776 = vmul.f32 1.0, %v775
    %v777 = vtanh.pop %v691
    %v778 = vxor.u32 %v764, 2147483648
    %v779 = vmul.f32 %v778, 1.442695
    %v780 = vpow.pop %v779
    %v781 = vadd.f32 %v780, 1.0
    %v782 = vrcp.pop %v781
    %v783 = vmul.f32 1.0, %v782
    %v784 = vmul.f32 %v776, %v465
    %v785 = vmul.f32 %v770, %v777
    %v786 = vadd.f32 %v784, %v785
    %v787 = vtanh.pop %v786
    %v788 = vmul.f32 %v783, %v787
    %s789 = scalar_lea.vmem [#allocation16], 2
    %790 = vst.msk [vmem:[%s789] sm:$0x3] %vm468, %v788
    %s791 = scalar_lea.vmem [#allocation4], 4
    %v792 = vld [vmem:[%s791] sm:$0x3]
    %v794 = vsel %vm153, %v788, 0
    %796 = vmatprep.subr.mxu0 0.0
    %797 = vmatpush1.msra.mxu0 %v131
    %798 = vmatprep.subr.mxu0 0.0
    %799 = vmatpush1.msra.mxu0 %v132
    %800 = vmatprep.subr.mxu0 0.0
    %801 = vmatpush1.msra.mxu0 %v133
    %802 = vmatprep.subr.mxu0 0.0
    %803 = vmatpush1.msra.mxu0 %v134
    %804 = vmatprep.subr.mxu0 0.0
    %805 = vmatpush1.msra.mxu0 0.0
    %806 = vmatprep.subr.mxu0 0.0
    %807 = vmatpush1.msra.mxu0 0.0
    %808 = vmatprep.subr.mxu0 0.0
    %809 = vmatpush1.msra.mxu0 0.0
    %810 = vmatprep.subr.mxu0 0.0
    %811 = vmatpush1.msra.mxu0 0.0
    %812 = vmatprep.subr.mxu0 0.0
    %813 = vmatpush1.msra.mxu0 0.0
    %814 = vmatprep.subr.mxu0 0.0
    %815 = vmatpush1.msra.mxu0 0.0
    %816 = vmatprep.subr.mxu0 0.0
    %817 = vmatpush1.msra.mxu0 0.0
    %818 = vmatprep.subr.mxu0 0.0
    %819 = vmatpush1.msra.mxu0 0.0
    %820 = vmatprep.subr.mxu0 0.0
    %821 = vmatpush1.msra.mxu0 0.0
    %822 = vmatprep.subr.mxu0 0.0
    %823 = vmatpush1.msra.mxu0 0.0
    %824 = vmatprep.subr.mxu0 0.0
    %825 = vmatpush1.msra.mxu0 0.0
    %826 = vmatprep.subr.mxu0 0.0
    %827 = vmatpush1.msra.mxu0 0.0
    %828 = vmatprep.subr.mxu0 0.0
    %829 = vmatpush1.msra.mxu0 0.0
    %830 = vmatprep.subr.mxu0 0.0
    %831 = vmatpush1.msra.mxu0 0.0
    %832 = vmatprep.subr.mxu0 0.0
    %833 = vmatpush1.msra.mxu0 0.0
    %834 = vmatprep.subr.mxu0 0.0
    %835 = vmatpush1.msra.mxu0 0.0
    %836 = vmatprep.subr.mxu0 0.0
    %837 = vmatpush1.msra.mxu0 0.0
    %838 = vmatprep.subr.mxu0 0.0
    %839 = vmatpush1.msra.mxu0 0.0
    %840 = vmatprep.subr.mxu0 0.0
    %841 = vmatpush1.msra.mxu0 0.0
    %842 = vmatprep.subr.mxu0 0.0
    %843 = vmatpush1.msra.mxu0 0.0
    %844 = vmatprep.subr.mxu0 0.0
    %845 = vmatpush1.msra.mxu0 0.0
    %846 = vmatprep.subr.mxu0 0.0
    %847 = vmatpush1.msra.mxu0 0.0
    %848 = vmatprep.subr.mxu0 0.0
    %849 = vmatpush1.msra.mxu0 0.0
    %850 = vmatprep.subr.mxu0 0.0
    %851 = vmatpush1.msra.mxu0 0.0
    %852 = vmatprep.subr.mxu0 0.0
    %853 = vmatpush1.msra.mxu0 0.0
    %854 = vmatprep.subr.mxu0 0.0
    %855 = vmatpush1.msra.mxu0 0.0
    %856 = vmatprep.subr.mxu0 0.0
    %857 = vmatpush1.msra.mxu0 0.0
    %858 = vmatprep.subr.mxu0 0.0
    %859 = vmatpush1.msra.mxu0 0.0
    %860 = vmatprep.mubr.f32.mxu0 0.0
    %861 = vmatmul.mubr.f32.gmra.mrb[0].mxu0 %v794
    %v862 = vpop.f32.mrb[0].mxu0
    %v863 = vadd.f32 0.0, %v862
    %v864 = vpop.f32.mrb[0].mxu0
    %865 = vdwg.mxu0
    %v866 = vadd.f32 %v792, %v863
    %s867 = scalar_lea.vmem [#allocation7], 4
    %v868 = vld [vmem:[%s867] sm:$0x3]
    %869 = vmatprep.subr.mxu0 0.0
    %870 = vmatpush1.msra.mxu0 %v136
    %871 = vmatprep.subr.mxu0 0.0
    %872 = vmatpush1.msra.mxu0 %v137
    %873 = vmatprep.subr.mxu0 0.0
    %874 = vmatpush1.msra.mxu0 %v138
    %875 = vmatprep.subr.mxu0 0.0
    %876 = vmatpush1.msra.mxu0 %v139
    %877 = vmatprep.subr.mxu0 0.0
    %878 = vmatpush1.msra.mxu0 0.0
    %879 = vmatprep.subr.mxu0 0.0
    %880 = vmatpush1.msra.mxu0 0.0
    %881 = vmatprep.subr.mxu0 0.0
    %882 = vmatpush1.msra.mxu0 0.0
    %883 = vmatprep.subr.mxu0 0.0
    %884 = vmatpush1.msra.mxu0 0.0
    %885 = vmatprep.subr.mxu0 0.0
    %886 = vmatpush1.msra.mxu0 0.0
    %887 = vmatprep.subr.mxu0 0.0
    %888 = vmatpush1.msra.mxu0 0.0
    %889 = vmatprep.subr.mxu0 0.0
    %890 = vmatpush1.msra.mxu0 0.0
    %891 = vmatprep.subr.mxu0 0.0
    %892 = vmatpush1.msra.mxu0 0.0
    %893 = vmatprep.subr.mxu0 0.0
    %894 = vmatpush1.msra.mxu0 0.0
    %895 = vmatprep.subr.mxu0 0.0
    %896 = vmatpush1.msra.mxu0 0.0
    %897 = vmatprep.subr.mxu0 0.0
    %898 = vmatpush1.msra.mxu0 0.0
    %899 = vmatprep.subr.mxu0 0.0
    %900 = vmatpush1.msra.mxu0 0.0
    %901 = vmatprep.subr.mxu0 0.0
    %902 = vmatpush1.msra.mxu0 0.0
    %903 = vmatprep.subr.mxu0 0.0
    %904 = vmatpush1.msra.mxu0 0.0
    %905 = vmatprep.subr.mxu0 0.0
    %906 = vmatpush1.msra.mxu0 0.0
    %907 = vmatprep.subr.mxu0 0.0
    %908 = vmatpush1.msra.mxu0 0.0
    %909 = vmatprep.subr.mxu0 0.0
    %910 = vmatpush1.msra.mxu0 0.0
    %911 = vmatprep.subr.mxu0 0.0
    %912 = vmatpush1.msra.mxu0 0.0
    %913 = vmatprep.subr.mxu0 0.0
    %914 = vmatpush1.msra.mxu0 0.0
    %915 = vmatprep.subr.mxu0 0.0
    %916 = vmatpush1.msra.mxu0 0.0
    %917 = vmatprep.subr.mxu0 0.0
    %918 = vmatpush1.msra.mxu0 0.0
    %919 = vmatprep.subr.mxu0 0.0
    %920 = vmatpush1.msra.mxu0 0.0
    %921 = vmatprep.subr.mxu0 0.0
    %922 = vmatpush1.msra.mxu0 0.0
    %923 = vmatprep.subr.mxu0 0.0
    %924 = vmatpush1.msra.mxu0 0.0
    %925 = vmatprep.subr.mxu0 0.0
    %926 = vmatpush1.msra.mxu0 0.0
    %927 = vmatprep.subr.mxu0 0.0
    %928 = vmatpush1.msra.mxu0 0.0
    %929 = vmatprep.subr.mxu0 0.0
    %930 = vmatpush1.msra.mxu0 0.0
    %931 = vmatprep.subr.mxu0 0.0
    %932 = vmatpush1.msra.mxu0 0.0
    %933 = vmatprep.mubr.f32.mxu0 0.0
    %934 = vmatmul.mubr.f32.gmra.mrb[0].mxu0 %v794
    %v935 = vpop.f32.mrb[0].mxu0
    %v936 = vadd.f32 0.0, %v935
    %v937 = vpop.f32.mrb[0].mxu0
    %938 = vdwg.mxu0
    %v939 = vadd.f32 %v868, %v936
    %s940 = scalar_lea.vmem [#allocation9], 4
    %v941 = vld [vmem:[%s940] sm:$0x3]
    %942 = vmatprep.subr.mxu0 0.0
    %943 = vmatpush1.msra.mxu0 %v141
    %944 = vmatprep.subr.mxu0 0.0
    %945 = vmatpush1.msra.mxu0 %v142
    %946 = vmatprep.subr.mxu0 0.0
    %947 = vmatpush1.msra.mxu0 %v143
    %948 = vmatprep.subr.mxu0 0.0
    %949 = vmatpush1.msra.mxu0 %v144
    %950 = vmatprep.subr.mxu0 0.0
    %951 = vmatpush1.msra.mxu0 0.0
    %952 = vmatprep.subr.mxu0 0.0
    %953 = vmatpush1.msra.mxu0 0.0
    %954 = vmatprep.subr.mxu0 0.0
    %955 = vmatpush1.msra.mxu0 0.0
    %956 = vmatprep.subr.mxu0 0.0
    %957 = vmatpush1.msra.mxu0 0.0
    %958 = vmatprep.subr.mxu0 0.0
    %959 = vmatpush1.msra.mxu0 0.0
    %960 = vmatprep.subr.mxu0 0.0
    %961 = vmatpush1.msra.mxu0 0.0
    %962 = vmatprep.subr.mxu0 0.0
    %963 = vmatpush1.msra.mxu0 0.0
    %964 = vmatprep.subr.mxu0 0.0
    %965 = vmatpush1.msra.mxu0 0.0
    %966 = vmatprep.subr.mxu0 0.0
    %967 = vmatpush1.msra.mxu0 0.0
    %968 = vmatprep.subr.mxu0 0.0
    %969 = vmatpush1.msra.mxu0 0.0
    %970 = vmatprep.subr.mxu0 0.0
    %971 = vmatpush1.msra.mxu0 0.0
    %972 = vmatprep.subr.mxu0 0.0
    %973 = vmatpush1.msra.mxu0 0.0
    %974 = vmatprep.subr.mxu0 0.0
    %975 = vmatpush1.msra.mxu0 0.0
    %976 = vmatprep.subr.mxu0 0.0
    %977 = vmatpush1.msra.mxu0 0.0
    %978 = vmatprep.subr.mxu0 0.0
    %979 = vmatpush1.msra.mxu0 0.0
    %980 = vmatprep.subr.mxu0 0.0
    %981 = vmatpush1.msra.mxu0 0.0
    %982 = vmatprep.subr.mxu0 0.0
    %983 = vmatpush1.msra.mxu0 0.0
    %984 = vmatprep.subr.mxu0 0.0
    %985 = vmatpush1.msra.mxu0 0.0
    %986 = vmatprep.subr.mxu0 0.0
    %987 = vmatpush1.msra.mxu0 0.0
    %988 = vmatprep.subr.mxu0 0.0
    %989 = vmatpush1.msra.mxu0 0.0
    %990 = vmatprep.subr.mxu0 0.0
    %991 = vmatpush1.msra.mxu0 0.0
    %992 = vmatprep.subr.mxu0 0.0
    %993 = vmatpush1.msra.mxu0 0.0
    %994 = vmatprep.subr.mxu0 0.0
    %995 = vmatpush1.msra.mxu0 0.0
    %996 = vmatprep.subr.mxu0 0.0
    %997 = vmatpush1.msra.mxu0 0.0
    %998 = vmatprep.subr.mxu0 0.0
    %999 = vmatpush1.msra.mxu0 0.0
    %1000 = vmatprep.subr.mxu0 0.0
    %1001 = vmatpush1.msra.mxu0 0.0
    %1002 = vmatprep.subr.mxu0 0.0
    %1003 = vmatpush1.msra.mxu0 0.0
    %1004 = vmatprep.subr.mxu0 0.0
    %1005 = vmatpush1.msra.mxu0 0.0
    %1006 = vmatprep.mubr.f32.mxu0 0.0
    %1007 = vmatmul.mubr.f32.gmra.mrb[0].mxu0 %v794
    %v1008 = vpop.f32.mrb[0].mxu0
    %v1009 = vadd.f32 0.0, %v1008
    %v1010 = vpop.f32.mrb[0].mxu0
    %1011 = vdwg.mxu0
    %v1012 = vadd.f32 %v941, %v1009
    %s1013 = scalar_lea.vmem [#allocation10], 4
    %v1014 = vld [vmem:[%s1013] sm:$0x3]
    %1015 = vmatprep.subr.mxu0 0.0
    %1016 = vmatpush1.msra.mxu0 %v146
    %1017 = vmatprep.subr.mxu0 0.0
    %1018 = vmatpush1.msra.mxu0 %v147
    %1019 = vmatprep.subr.mxu0 0.0
    %1020 = vmatpush1.msra.mxu0 %v148
    %1021 = vmatprep.subr.mxu0 0.0
    %1022 = vmatpush1.msra.mxu0 %v149
    %1023 = vmatprep.subr.mxu0 0.0
    %1024 = vmatpush1.msra.mxu0 0.0
    %1025 = vmatprep.subr.mxu0 0.0
    %1026 = vmatpush1.msra.mxu0 0.0
    %1027 = vmatprep.subr.mxu0 0.0
    %1028 = vmatpush1.msra.mxu0 0.0
    %1029 = vmatprep.subr.mxu0 0.0
    %1030 = vmatpush1.msra.mxu0 0.0
    %1031 = vmatprep.subr.mxu0 0.0
    %1032 = vmatpush1.msra.mxu0 0.0
    %1033 = vmatprep.subr.mxu0 0.0
    %1034 = vmatpush1.msra.mxu0 0.0
    %1035 = vmatprep.subr.mxu0 0.0
    %1036 = vmatpush1.msra.mxu0 0.0
    %1037 = vmatprep.subr.mxu0 0.0
    %1038 = vmatpush1.msra.mxu0 0.0
    %1039 = vmatprep.subr.mxu0 0.0
    %1040 = vmatpush1.msra.mxu0 0.0
    %1041 = vmatprep.subr.mxu0 0.0
    %1042 = vmatpush1.msra.mxu0 0.0
    %1043 = vmatprep.subr.mxu0 0.0
    %1044 = vmatpush1.msra.mxu0 0.0
    %1045 = vmatprep.subr.mxu0 0.0
    %1046 = vmatpush1.msra.mxu0 0.0
    %1047 = vmatprep.subr.mxu0 0.0
    %1048 = vmatpush1.msra.mxu0 0.0
    %1049 = vmatprep.subr.mxu0 0.0
    %1050 = vmatpush1.msra.mxu0 0.0
    %1051 = vmatprep.subr.mxu0 0.0
    %1052 = vmatpush1.msra.mxu0 0.0
    %1053 = vmatprep.subr.mxu0 0.0
    %1054 = vmatpush1.msra.mxu0 0.0
    %1055 = vmatprep.subr.mxu0 0.0
    %1056 = vmatpush1.msra.mxu0 0.0
    %1057 = vmatprep.subr.mxu0 0.0
    %1058 = vmatpush1.msra.mxu0 0.0
    %1059 = vmatprep.subr.mxu0 0.0
    %1060 = vmatpush1.msra.mxu0 0.0
    %1061 = vmatprep.subr.mxu0 0.0
    %1062 = vmatpush1.msra.mxu0 0.0
    %1063 = vmatprep.subr.mxu0 0.0
    %1064 = vmatpush1.msra.mxu0 0.0
    %1065 = vmatprep.subr.mxu0 0.0
    %1066 = vmatpush1.msra.mxu0 0.0
    %1067 = vmatprep.subr.mxu0 0.0
    %1068 = vmatpush1.msra.mxu0 0.0
    %1069 = vmatprep.subr.mxu0 0.0
    %1070 = vmatpush1.msra.mxu0 0.0
    %1071 = vmatprep.subr.mxu0 0.0
    %1072 = vmatpush1.msra.mxu0 0.0
    %1073 = vmatprep.subr.mxu0 0.0
    %1074 = vmatpush1.msra.mxu0 0.0
    %1075 = vmatprep.subr.mxu0 0.0
    %1076 = vmatpush1.msra.mxu0 0.0
    %1077 = vmatprep.subr.mxu0 0.0
    %1078 = vmatpush1.msra.mxu0 0.0
    %1079 = vmatprep.mubr.f32.mxu0 0.0
    %1080 = vmatmul.mubr.f32.gmra.mrb[0].mxu0 %v794
    %v1081 = vpop.f32.mrb[0].mxu0
    %v1082 = vadd.f32 0.0, %v1081
    %v1083 = vpop.f32.mrb[0].mxu0
    %1084 = vdwg.mxu0
    %v1085 = vadd.f32 %v1014, %v1082
    %v1086 = vxor.u32 %v866, 2147483648
    %v1087 = vmul.f32 %v1086, 1.442695
    %v1088 = vpow.pop %v1087
    %v1089 = vadd.f32 %v1088, 1.0
    %v1090 = vrcp.pop %v1089
    %v1091 = vmul.f32 1.0, %v1090
    %v1092 = vxor.u32 %v939, 2147483648
    %v1093 = vmul.f32 %v1092, 1.442695
    %v1094 = vpow.pop %v1093
    %v1095 = vadd.f32 %v1094, 1.0
    %v1096 = vrcp.pop %v1095
    %v1097 = vmul.f32 1.0, %v1096
    %v1098 = vtanh.pop %v1012
    %v1099 = vxor.u32 %v1085, 2147483648
    %v1100 = vmul.f32 %v1099, 1.442695
    %v1101 = vpow.pop %v1100
    %v1102 = vadd.f32 %v1101, 1.0
    %v1103 = vrcp.pop %v1102
    %v1104 = vmul.f32 1.0, %v1103
    %v1105 = vmul.f32 %v1097, %v786
    %v1106 = vmul.f32 %v1091, %v1098
    %v1107 = vadd.f32 %v1105, %v1106
    %v1108 = vtanh.pop %v1107
    %v1109 = vmul.f32 %v1104, %v1108
    %s1110 = scalar_lea.vmem [#allocation16], 4
    %1111 = vst.msk [vmem:[%s1110] sm:$0x3] %vm468, %v1109
    %s1112 = scalar_lea.vmem [#allocation4], 6
    %v1113 = vld [vmem:[%s1112] sm:$0x3]
    %v1115 = vsel %vm153, %v1109, 0
    %1117 = vmatprep.subr.mxu0 0.0
    %1118 = vmatpush1.msra.mxu0 %v131
    %1119 = vmatprep.subr.mxu0 0.0
    %1120 = vmatpush1.msra.mxu0 %v132
    %1121 = vmatprep.subr.mxu0 0.0
    %1122 = vmatpush1.msra.mxu0 %v133
    %1123 = vmatprep.subr.mxu0 0.0
    %1124 = vmatpush1.msra.mxu0 %v134
    %1125 = vmatprep.subr.mxu0 0.0
    %1126 = vmatpush1.msra.mxu0 0.0
    %1127 = vmatprep.subr.mxu0 0.0
    %1128 = vmatpush1.msra.mxu0 0.0
    %1129 = vmatprep.subr.mxu0 0.0
    %1130 = vmatpush1.msra.mxu0 0.0
    %1131 = vmatprep.subr.mxu0 0.0
    %1132 = vmatpush1.msra.mxu0 0.0
    %1133 = vmatprep.subr.mxu0 0.0
    %1134 = vmatpush1.msra.mxu0 0.0
    %1135 = vmatprep.subr.mxu0 0.0
    %1136 = vmatpush1.msra.mxu0 0.0
    %1137 = vmatprep.subr.mxu0 0.0
    %1138 = vmatpush1.msra.mxu0 0.0
    %1139 = vmatprep.subr.mxu0 0.0
    %1140 = vmatpush1.msra.mxu0 0.0
    %1141 = vmatprep.subr.mxu0 0.0
    %1142 = vmatpush1.msra.mxu0 0.0
    %1143 = vmatprep.subr.mxu0 0.0
    %1144 = vmatpush1.msra.mxu0 0.0
    %1145 = vmatprep.subr.mxu0 0.0
    %1146 = vmatpush1.msra.mxu0 0.0
    %1147 = vmatprep.subr.mxu0 0.0
    %1148 = vmatpush1.msra.mxu0 0.0
    %1149 = vmatprep.subr.mxu0 0.0
    %1150 = vmatpush1.msra.mxu0 0.0
    %1151 = vmatprep.subr.mxu0 0.0
    %1152 = vmatpush1.msra.mxu0 0.0
    %1153 = vmatprep.subr.mxu0 0.0
    %1154 = vmatpush1.msra.mxu0 0.0
    %1155 = vmatprep.subr.mxu0 0.0
    %1156 = vmatpush1.msra.mxu0 0.0
    %1157 = vmatprep.subr.mxu0 0.0
    %1158 = vmatpush1.msra.mxu0 0.0
    %1159 = vmatprep.subr.mxu0 0.0
    %1160 = vmatpush1.msra.mxu0 0.0
    %1161 = vmatprep.subr.mxu0 0.0
    %1162 = vmatpush1.msra.mxu0 0.0
    %1163 = vmatprep.subr.mxu0 0.0
    %1164 = vmatpush1.msra.mxu0 0.0
    %1165 = vmatprep.subr.mxu0 0.0
    %1166 = vmatpush1.msra.mxu0 0.0
    %1167 = vmatprep.subr.mxu0 0.0
    %1168 = vmatpush1.msra.mxu0 0.0
    %1169 = vmatprep.subr.mxu0 0.0
    %1170 = vmatpush1.msra.mxu0 0.0
    %1171 = vmatprep.subr.mxu0 0.0
    %1172 = vmatpush1.msra.mxu0 0.0
    %1173 = vmatprep.subr.mxu0 0.0
    %1174 = vmatpush1.msra.mxu0 0.0
    %1175 = vmatprep.subr.mxu0 0.0
    %1176 = vmatpush1.msra.mxu0 0.0
    %1177 = vmatprep.subr.mxu0 0.0
    %1178 = vmatpush1.msra.mxu0 0.0
    %1179 = vmatprep.subr.mxu0 0.0
    %1180 = vmatpush1.msra.mxu0 0.0
    %1181 = vmatprep.mubr.f32.mxu0 0.0
    %1182 = vmatmul.mubr.f32.gmra.mrb[0].mxu0 %v1115
    %v1183 = vpop.f32.mrb[0].mxu0
    %v1184 = vadd.f32 0.0, %v1183
    %v1185 = vpop.f32.mrb[0].mxu0
    %1186 = vdwg.mxu0
    %v1187 = vadd.f32 %v1113, %v1184
    %s1188 = scalar_lea.vmem [#allocation7], 6
    %v1189 = vld [vmem:[%s1188] sm:$0x3]
    %1190 = vmatprep.subr.mxu0 0.0
    %1191 = vmatpush1.msra.mxu0 %v136
    %1192 = vmatprep.subr.mxu0 0.0
    %1193 = vmatpush1.msra.mxu0 %v137
    %1194 = vmatprep.subr.mxu0 0.0
    %1195 = vmatpush1.msra.mxu0 %v138
    %1196 = vmatprep.subr.mxu0 0.0
    %1197 = vmatpush1.msra.mxu0 %v139
    %1198 = vmatprep.subr.mxu0 0.0
    %1199 = vmatpush1.msra.mxu0 0.0
    %1200 = vmatprep.subr.mxu0 0.0
    %1201 = vmatpush1.msra.mxu0 0.0
    %1202 = vmatprep.subr.mxu0 0.0
    %1203 = vmatpush1.msra.mxu0 0.0
    %1204 = vmatprep.subr.mxu0 0.0
    %1205 = vmatpush1.msra.mxu0 0.0
    %1206 = vmatprep.subr.mxu0 0.0
    %1207 = vmatpush1.msra.mxu0 0.0
    %1208 = vmatprep.subr.mxu0 0.0
    %1209 = vmatpush1.msra.mxu0 0.0
    %1210 = vmatprep.subr.mxu0 0.0
    %1211 = vmatpush1.msra.mxu0 0.0
    %1212 = vmatprep.subr.mxu0 0.0
    %1213 = vmatpush1.msra.mxu0 0.0
    %1214 = vmatprep.subr.mxu0 0.0
    %1215 = vmatpush1.msra.mxu0 0.0
    %1216 = vmatprep.subr.mxu0 0.0
    %1217 = vmatpush1.msra.mxu0 0.0
    %1218 = vmatprep.subr.mxu0 0.0
    %1219 = vmatpush1.msra.mxu0 0.0
    %1220 = vmatprep.subr.mxu0 0.0
    %1221 = vmatpush1.msra.mxu0 0.0
    %1222 = vmatprep.subr.mxu0 0.0
    %1223 = vmatpush1.msra.mxu0 0.0
    %1224 = vmatprep.subr.mxu0 0.0
    %1225 = vmatpush1.msra.mxu0 0.0
    %1226 = vmatprep.subr.mxu0 0.0
    %1227 = vmatpush1.msra.mxu0 0.0
    %1228 = vmatprep.subr.mxu0 0.0
    %1229 = vmatpush1.msra.mxu0 0.0
    %1230 = vmatprep.subr.mxu0 0.0
    %1231 = vmatpush1.msra.mxu0 0.0
    %1232 = vmatprep.subr.mxu0 0.0
    %1233 = vmatpush1.msra.mxu0 0.0
    %1234 = vmatprep.subr.mxu0 0.0
    %1235 = vmatpush1.msra.mxu0 0.0
    %1236 = vmatprep.subr.mxu0 0.0
    %1237 = vmatpush1.msra.mxu0 0.0
    %1238 = vmatprep.subr.mxu0 0.0
    %1239 = vmatpush1.msra.mxu0 0.0
    %1240 = vmatprep.subr.mxu0 0.0
    %1241 = vmatpush1.msra.mxu0 0.0
    %1242 = vmatprep.subr.mxu0 0.0
    %1243 = vmatpush1.msra.mxu0 0.0
    %1244 = vmatprep.subr.mxu0 0.0
    %1245 = vmatpush1.msra.mxu0 0.0
    %1246 = vmatprep.subr.mxu0 0.0
    %1247 = vmatpush1.msra.mxu0 0.0
    %1248 = vmatprep.subr.mxu0 0.0
    %1249 = vmatpush1.msra.mxu0 0.0
    %1250 = vmatprep.subr.mxu0 0.0
    %1251 = vmatpush1.msra.mxu0 0.0
    %1252 = vmatprep.subr.mxu0 0.0
    %1253 = vmatpush1.msra.mxu0 0.0
    %1254 = vmatprep.mubr.f32.mxu0 0.0
    %1255 = vmatmul.mubr.f32.gmra.mrb[0].mxu0 %v1115
    %v1256 = vpop.f32.mrb[0].mxu0
    %v1257 = vadd.f32 0.0, %v1256
    %v1258 = vpop.f32.mrb[0].mxu0
    %1259 = vdwg.mxu0
    %v1260 = vadd.f32 %v1189, %v1257
    %s1261 = scalar_lea.vmem [#allocation9], 6
    %v1262 = vld [vmem:[%s1261] sm:$0x3]
    %1263 = vmatprep.subr.mxu0 0.0
    %1264 = vmatpush1.msra.mxu0 %v141
    %1265 = vmatprep.subr.mxu0 0.0
    %1266 = vmatpush1.msra.mxu0 %v142
    %1267 = vmatprep.subr.mxu0 0.0
    %1268 = vmatpush1.msra.mxu0 %v143
    %1269 = vmatprep.subr.mxu0 0.0
    %1270 = vmatpush1.msra.mxu0 %v144
    %1271 = vmatprep.subr.mxu0 0.0
    %1272 = vmatpush1.msra.mxu0 0.0
    %1273 = vmatprep.subr.mxu0 0.0
    %1274 = vmatpush1.msra.mxu0 0.0
    %1275 = vmatprep.subr.mxu0 0.0
    %1276 = vmatpush1.msra.mxu0 0.0
    %1277 = vmatprep.subr.mxu0 0.0
    %1278 = vmatpush1.msra.mxu0 0.0
    %1279 = vmatprep.subr.mxu0 0.0
    %1280 = vmatpush1.msra.mxu0 0.0
    %1281 = vmatprep.subr.mxu0 0.0
    %1282 = vmatpush1.msra.mxu0 0.0
    %1283 = vmatprep.subr.mxu0 0.0
    %1284 = vmatpush1.msra.mxu0 0.0
    %1285 = vmatprep.subr.mxu0 0.0
    %1286 = vmatpush1.msra.mxu0 0.0
    %1287 = vmatprep.subr.mxu0 0.0
    %1288 = vmatpush1.msra.mxu0 0.0
    %1289 = vmatprep.subr.mxu0 0.0
    %1290 = vmatpush1.msra.mxu0 0.0
    %1291 = vmatprep.subr.mxu0 0.0
    %1292 = vmatpush1.msra.mxu0 0.0
    %1293 = vmatprep.subr.mxu0 0.0
    %1294 = vmatpush1.msra.mxu0 0.0
    %1295 = vmatprep.subr.mxu0 0.0
    %1296 = vmatpush1.msra.mxu0 0.0
    %1297 = vmatprep.subr.mxu0 0.0
    %1298 = vmatpush1.msra.mxu0 0.0
    %1299 = vmatprep.subr.mxu0 0.0
    %1300 = vmatpush1.msra.mxu0 0.0
    %1301 = vmatprep.subr.mxu0 0.0
    %1302 = vmatpush1.msra.mxu0 0.0
    %1303 = vmatprep.subr.mxu0 0.0
    %1304 = vmatpush1.msra.mxu0 0.0
    %1305 = vmatprep.subr.mxu0 0.0
    %1306 = vmatpush1.msra.mxu0 0.0
    %1307 = vmatprep.subr.mxu0 0.0
    %1308 = vmatpush1.msra.mxu0 0.0
    %1309 = vmatprep.subr.mxu0 0.0
    %1310 = vmatpush1.msra.mxu0 0.0
    %1311 = vmatprep.subr.mxu0 0.0
    %1312 = vmatpush1.msra.mxu0 0.0
    %1313 = vmatprep.subr.mxu0 0.0
    %1314 = vmatpush1.msra.mxu0 0.0
    %1315 = vmatprep.subr.mxu0 0.0
    %1316 = vmatpush1.msra.mxu0 0.0
    %1317 = vmatprep.subr.mxu0 0.0
    %1318 = vmatpush1.msra.mxu0 0.0
    %1319 = vmatprep.subr.mxu0 0.0
    %1320 = vmatpush1.msra.mxu0 0.0
    %1321 = vmatprep.subr.mxu0 0.0
    %1322 = vmatpush1.msra.mxu0 0.0
    %1323 = vmatprep.subr.mxu0 0.0
    %1324 = vmatpush1.msra.mxu0 0.0
    %1325 = vmatprep.subr.mxu0 0.0
    %1326 = vmatpush1.msra.mxu0 0.0
    %1327 = vmatprep.mubr.f32.mxu0 0.0
    %1328 = vmatmul.mubr.f32.gmra.mrb[0].mxu0 %v1115
    %v1329 = vpop.f32.mrb[0].mxu0
    %v1330 = vadd.f32 0.0, %v1329
    %v1331 = vpop.f32.mrb[0].mxu0
    %1332 = vdwg.mxu0
    %v1333 = vadd.f32 %v1262, %v1330
    %s1334 = scalar_lea.vmem [#allocation10], 6
    %v1335 = vld [vmem:[%s1334] sm:$0x3]
    %1336 = vmatprep.subr.mxu0 0.0
    %1337 = vmatpush1.msra.mxu0 %v146
    %1338 = vmatprep.subr.mxu0 0.0
    %1339 = vmatpush1.msra.mxu0 %v147
    %1340 = vmatprep.subr.mxu0 0.0
    %1341 = vmatpush1.msra.mxu0 %v148
    %1342 = vmatprep.subr.mxu0 0.0
    %1343 = vmatpush1.msra.mxu0 %v149
    %1344 = vmatprep.subr.mxu0 0.0
    %1345 = vmatpush1.msra.mxu0 0.0
    %1346 = vmatprep.subr.mxu0 0.0
    %1347 = vmatpush1.msra.mxu0 0.0
    %1348 = vmatprep.subr.mxu0 0.0
    %1349 = vmatpush1.msra.mxu0 0.0
    %1350 = vmatprep.subr.mxu0 0.0
    %1351 = vmatpush1.msra.mxu0 0.0
    %1352 = vmatprep.subr.mxu0 0.0
    %1353 = vmatpush1.msra.mxu0 0.0
    %1354 = vmatprep.subr.mxu0 0.0
    %1355 = vmatpush1.msra.mxu0 0.0
    %1356 = vmatprep.subr.mxu0 0.0
    %1357 = vmatpush1.msra.mxu0 0.0
    %1358 = vmatprep.subr.mxu0 0.0
    %1359 = vmatpush1.msra.mxu0 0.0
    %1360 = vmatprep.subr.mxu0 0.0
    %1361 = vmatpush1.msra.mxu0 0.0
    %1362 = vmatprep.subr.mxu0 0.0
    %1363 = vmatpush1.msra.mxu0 0.0
    %1364 = vmatprep.subr.mxu0 0.0
    %1365 = vmatpush1.msra.mxu0 0.0
    %1366 = vmatprep.subr.mxu0 0.0
    %1367 = vmatpush1.msra.mxu0 0.0
    %1368 = vmatprep.subr.mxu0 0.0
    %1369 = vmatpush1.msra.mxu0 0.0
    %1370 = vmatprep.subr.mxu0 0.0
    %1371 = vmatpush1.msra.mxu0 0.0
    %1372 = vmatprep.subr.mxu0 0.0
    %1373 = vmatpush1.msra.mxu0 0.0
    %1374 = vmatprep.subr.mxu0 0.0
    %1375 = vmatpush1.msra.mxu0 0.0
    %1376 = vmatprep.subr.mxu0 0.0
    %1377 = vmatpush1.msra.mxu0 0.0
    %1378 = vmatprep.subr.mxu0 0.0
    %1379 = vmatpush1.msra.mxu0 0.0
    %1380 = vmatprep.subr.mxu0 0.0
    %1381 = vmatpush1.msra.mxu0 0.0
    %1382 = vmatprep.subr.mxu0 0.0
    %1383 = vmatpush1.msra.mxu0 0.0
    %1384 = vmatprep.subr.mxu0 0.0
    %1385 = vmatpush1.msra.mxu0 0.0
    %1386 = vmatprep.subr.mxu0 0.0
    %1387 = vmatpush1.msra.mxu0 0.0
    %1388 = vmatprep.subr.mxu0 0.0
    %1389 = vmatpush1.msra.mxu0 0.0
    %1390 = vmatprep.subr.mxu0 0.0
    %1391 = vmatpush1.msra.mxu0 0.0
    %1392 = vmatprep.subr.mxu0 0.0
    %1393 = vmatpush1.msra.mxu0 0.0
    %1394 = vmatprep.subr.mxu0 0.0
    %1395 = vmatpush1.msra.mxu0 0.0
    %1396 = vmatprep.subr.mxu0 0.0
    %1397 = vmatpush1.msra.mxu0 0.0
    %1398 = vmatprep.subr.mxu0 0.0
    %1399 = vmatpush1.msra.mxu0 0.0
    %1400 = vmatprep.mubr.f32.mxu0 0.0
    %1401 = vmatmul.mubr.f32.gmra.mrb[0].mxu0 %v1115
    %v1402 = vpop.f32.mrb[0].mxu0
    %v1403 = vadd.f32 0.0, %v1402
    %v1404 = vpop.f32.mrb[0].mxu0
    %1405 = vdwg.mxu0
    %v1406 = vadd.f32 %v1335, %v1403
    %v1407 = vxor.u32 %v1187, 2147483648
    %v1408 = vmul.f32 %v1407, 1.442695
    %v1409 = vpow.pop %v1408
    %v1410 = vadd.f32 %v1409, 1.0
    %v1411 = vrcp.pop %v1410
    %v1412 = vmul.f32 1.0, %v1411
    %v1413 = vxor.u32 %v1260, 2147483648
    %v1414 = vmul.f32 %v1413, 1.442695
    %v1415 = vpow.pop %v1414
    %v1416 = vadd.f32 %v1415, 1.0
    %v1417 = vrcp.pop %v1416
    %v1418 = vmul.f32 1.0, %v1417
    %v1419 = vtanh.pop %v1333
    %v1420 = vxor.u32 %v1406, 2147483648
    %v1421 = vmul.f32 %v1420, 1.442695
    %v1422 = vpow.pop %v1421
    %v1423 = vadd.f32 %v1422, 1.0
    %v1424 = vrcp.pop %v1423
    %v1425 = vmul.f32 1.0, %v1424
    %v1426 = vmul.f32 %v1418, %v1107
    %v1427 = vmul.f32 %v1412, %v1419
    %v1428 = vadd.f32 %v1426, %v1427
    %v1429 = vtanh.pop %v1428
    %v1430 = vmul.f32 %v1425, %v1429
    %s1431 = scalar_lea.vmem [#allocation16], 6
    %1432 = vst.msk [vmem:[%s1431] sm:$0x3] %vm468, %v1430
    %s1433 = scalar_lea.vmem [#allocation4], 8
    %v1434 = vld [vmem:[%s1433] sm:$0x3]
    %v1436 = vsel %vm153, %v1430, 0
    %1438 = vmatprep.subr.mxu0 0.0
    %1439 = vmatpush1.msra.mxu0 %v131
    %1440 = vmatprep.subr.mxu0 0.0
    %1441 = vmatpush1.msra.mxu0 %v132
    %1442 = vmatprep.subr.mxu0 0.0
    %1443 = vmatpush1.msra.mxu0 %v133
    %1444 = vmatprep.subr.mxu0 0.0
    %1445 = vmatpush1.msra.mxu0 %v134
    %1446 = vmatprep.subr.mxu0 0.0
    %1447 = vmatpush1.msra.mxu0 0.0
    %1448 = vmatprep.subr.mxu0 0.0
    %1449 = vmatpush1.msra.mxu0 0.0
    %1450 = vmatprep.subr.mxu0 0.0
    %1451 = vmatpush1.msra.mxu0 0.0
    %1452 = vmatprep.subr.mxu0 0.0
    %1453 = vmatpush1.msra.mxu0 0.0
    %1454 = vmatprep.subr.mxu0 0.0
    %1455 = vmatpush1.msra.mxu0 0.0
    %1456 = vmatprep.subr.mxu0 0.0
    %1457 = vmatpush1.msra.mxu0 0.0
    %1458 = vmatprep.subr.mxu0 0.0
    %1459 = vmatpush1.msra.mxu0 0.0
    %1460 = vmatprep.subr.mxu0 0.0
    %1461 = vmatpush1.msra.mxu0 0.0
    %1462 = vmatprep.subr.mxu0 0.0
    %1463 = vmatpush1.msra.mxu0 0.0
    %1464 = vmatprep.subr.mxu0 0.0
    %1465 = vmatpush1.msra.mxu0 0.0
    %1466 = vmatprep.subr.mxu0 0.0
    %1467 = vmatpush1.msra.mxu0 0.0
    %1468 = vmatprep.subr.mxu0 0.0
    %1469 = vmatpush1.msra.mxu0 0.0
    %1470 = vmatprep.subr.mxu0 0.0
    %1471 = vmatpush1.msra.mxu0 0.0
    %1472 = vmatprep.subr.mxu0 0.0
    %1473 = vmatpush1.msra.mxu0 0.0
    %1474 = vmatprep.subr.mxu0 0.0
    %1475 = vmatpush1.msra.mxu0 0.0
    %1476 = vmatprep.subr.mxu0 0.0
    %1477 = vmatpush1.msra.mxu0 0.0
    %1478 = vmatprep.subr.mxu0 0.0
    %1479 = vmatpush1.msra.mxu0 0.0
    %1480 = vmatprep.subr.mxu0 0.0
    %1481 = vmatpush1.msra.mxu0 0.0
    %1482 = vmatprep.subr.mxu0 0.0
    %1483 = vmatpush1.msra.mxu0 0.0
    %1484 = vmatprep.subr.mxu0 0.0
    %1485 = vmatpush1.msra.mxu0 0.0
    %1486 = vmatprep.subr.mxu0 0.0
    %1487 = vmatpush1.msra.mxu0 0.0
    %1488 = vmatprep.subr.mxu0 0.0
    %1489 = vmatpush1.msra.mxu0 0.0
    %1490 = vmatprep.subr.mxu0 0.0
    %1491 = vmatpush1.msra.mxu0 0.0
    %1492 = vmatprep.subr.mxu0 0.0
    %1493 = vmatpush1.msra.mxu0 0.0
    %1494 = vmatprep.subr.mxu0 0.0
    %1495 = vmatpush1.msra.mxu0 0.0
    %1496 = vmatprep.subr.mxu0 0.0
    %1497 = vmatpush1.msra.mxu0 0.0
    %1498 = vmatprep.subr.mxu0 0.0
    %1499 = vmatpush1.msra.mxu0 0.0
    %1500 = vmatprep.subr.mxu0 0.0
    %1501 = vmatpush1.msra.mxu0 0.0
    %1502 = vmatprep.mubr.f32.mxu0 0.0
    %1503 = vmatmul.mubr.f32.gmra.mrb[0].mxu0 %v1436
    %v1504 = vpop.f32.mrb[0].mxu0
    %v1505 = vadd.f32 0.0, %v1504
    %v1506 = vpop.f32.mrb[0].mxu0
    %1507 = vdwg.mxu0
    %v1508 = vadd.f32 %v1434, %v1505
    %s1509 = scalar_lea.vmem [#allocation7], 8
    %v1510 = vld [vmem:[%s1509] sm:$0x3]
    %1511 = vmatprep.subr.mxu0 0.0
    %1512 = vmatpush1.msra.mxu0 %v136
    %1513 = vmatprep.subr.mxu0 0.0
    %1514 = vmatpush1.msra.mxu0 %v137
    %1515 = vmatprep.subr.mxu0 0.0
    %1516 = vmatpush1.msra.mxu0 %v138
    %1517 = vmatprep.subr.mxu0 0.0
    %1518 = vmatpush1.msra.mxu0 %v139
    %1519 = vmatprep.subr.mxu0 0.0
    %1520 = vmatpush1.msra.mxu0 0.0
    %1521 = vmatprep.subr.mxu0 0.0
    %1522 = vmatpush1.msra.mxu0 0.0
    %1523 = vmatprep.subr.mxu0 0.0
    %1524 = vmatpush1.msra.mxu0 0.0
    %1525 = vmatprep.subr.mxu0 0.0
    %1526 = vmatpush1.msra.mxu0 0.0
    %1527 = vmatprep.subr.mxu0 0.0
    %1528 = vmatpush1.msra.mxu0 0.0
    %1529 = vmatprep.subr.mxu0 0.0
    %1530 = vmatpush1.msra.mxu0 0.0
    %1531 = vmatprep.subr.mxu0 0.0
    %1532 = vmatpush1.msra.mxu0 0.0
    %1533 = vmatprep.subr.mxu0 0.0
    %1534 = vmatpush1.msra.mxu0 0.0
    %1535 = vmatprep.subr.mxu0 0.0
    %1536 = vmatpush1.msra.mxu0 0.0
    %1537 = vmatprep.subr.mxu0 0.0
    %1538 = vmatpush1.msra.mxu0 0.0
    %1539 = vmatprep.subr.mxu0 0.0
    %1540 = vmatpush1.msra.mxu0 0.0
    %1541 = vmatprep.subr.mxu0 0.0
    %1542 = vmatpush1.msra.mxu0 0.0
    %1543 = vmatprep.subr.mxu0 0.0
    %1544 = vmatpush1.msra.mxu0 0.0
    %1545 = vmatprep.subr.mxu0 0.0
    %1546 = vmatpush1.msra.mxu0 0.0
    %1547 = vmatprep.subr.mxu0 0.0
    %1548 = vmatpush1.msra.mxu0 0.0
    %1549 = vmatprep.subr.mxu0 0.0
    %1550 = vmatpush1.msra.mxu0 0.0
    %1551 = vmatprep.subr.mxu0 0.0
    %1552 = vmatpush1.msra.mxu0 0.0
    %1553 = vmatprep.subr.mxu0 0.0
    %1554 = vmatpush1.msra.mxu0 0.0
    %1555 = vmatprep.subr.mxu0 0.0
    %1556 = vmatpush1.msra.mxu0 0.0
    %1557 = vmatprep.subr.mxu0 0.0
    %1558 = vmatpush1.msra.mxu0 0.0
    %1559 = vmatprep.subr.mxu0 0.0
    %1560 = vmatpush1.msra.mxu0 0.0
    %1561 = vmatprep.subr.mxu0 0.0
    %1562 = vmatpush1.msra.mxu0 0.0
    %1563 = vmatprep.subr.mxu0 0.0
    %1564 = vmatpush1.msra.mxu0 0.0
    %1565 = vmatprep.subr.mxu0 0.0
    %1566 = vmatpush1.msra.mxu0 0.0
    %1567 = vmatprep.subr.mxu0 0.0
    %1568 = vmatpush1.msra.mxu0 0.0
    %1569 = vmatprep.subr.mxu0 0.0
    %1570 = vmatpush1.msra.mxu0 0.0
    %1571 = vmatprep.subr.mxu0 0.0
    %1572 = vmatpush1.msra.mxu0 0.0
    %1573 = vmatprep.subr.mxu0 0.0
    %1574 = vmatpush1.msra.mxu0 0.0
    %1575 = vmatprep.mubr.f32.mxu0 0.0
    %1576 = vmatmul.mubr.f32.gmra.mrb[0].mxu0 %v1436
    %v1577 = vpop.f32.mrb[0].mxu0
    %v1578 = vadd.f32 0.0, %v1577
    %v1579 = vpop.f32.mrb[0].mxu0
    %1580 = vdwg.mxu0
    %v1581 = vadd.f32 %v1510, %v1578
    %s1582 = scalar_lea.vmem [#allocation9], 8
    %v1583 = vld [vmem:[%s1582] sm:$0x3]
    %1584 = vmatprep.subr.mxu0 0.0
    %1585 = vmatpush1.msra.mxu0 %v141
    %1586 = vmatprep.subr.mxu0 0.0
    %1587 = vmatpush1.msra.mxu0 %v142
    %1588 = vmatprep.subr.mxu0 0.0
    %1589 = vmatpush1.msra.mxu0 %v143
    %1590 = vmatprep.subr.mxu0 0.0
    %1591 = vmatpush1.msra.mxu0 %v144
    %1592 = vmatprep.subr.mxu0 0.0
    %1593 = vmatpush1.msra.mxu0 0.0
    %1594 = vmatprep.subr.mxu0 0.0
    %1595 = vmatpush1.msra.mxu0 0.0
    %1596 = vmatprep.subr.mxu0 0.0
    %1597 = vmatpush1.msra.mxu0 0.0
    %1598 = vmatprep.subr.mxu0 0.0
    %1599 = vmatpush1.msra.mxu0 0.0
    %1600 = vmatprep.subr.mxu0 0.0
    %1601 = vmatpush1.msra.mxu0 0.0
    %1602 = vmatprep.subr.mxu0 0.0
    %1603 = vmatpush1.msra.mxu0 0.0
    %1604 = vmatprep.subr.mxu0 0.0
    %1605 = vmatpush1.msra.mxu0 0.0
    %1606 = vmatprep.subr.mxu0 0.0
    %1607 = vmatpush1.msra.mxu0 0.0
    %1608 = vmatprep.subr.mxu0 0.0
    %1609 = vmatpush1.msra.mxu0 0.0
    %1610 = vmatprep.subr.mxu0 0.0
    %1611 = vmatpush1.msra.mxu0 0.0
    %1612 = vmatprep.subr.mxu0 0.0
    %1613 = vmatpush1.msra.mxu0 0.0
    %1614 = vmatprep.subr.mxu0 0.0
    %1615 = vmatpush1.msra.mxu0 0.0
    %1616 = vmatprep.subr.mxu0 0.0
    %1617 = vmatpush1.msra.mxu0 0.0
    %1618 = vmatprep.subr.mxu0 0.0
    %1619 = vmatpush1.msra.mxu0 0.0
    %1620 = vmatprep.subr.mxu0 0.0
    %1621 = vmatpush1.msra.mxu0 0.0
    %1622 = vmatprep.subr.mxu0 0.0
    %1623 = vmatpush1.msra.mxu0 0.0
    %1624 = vmatprep.subr.mxu0 0.0
    %1625 = vmatpush1.msra.mxu0 0.0
    %1626 = vmatprep.subr.mxu0 0.0
    %1627 = vmatpush1.msra.mxu0 0.0
    %1628 = vmatprep.subr.mxu0 0.0
    %1629 = vmatpush1.msra.mxu0 0.0
    %1630 = vmatprep.subr.mxu0 0.0
    %1631 = vmatpush1.msra.mxu0 0.0
    %1632 = vmatprep.subr.mxu0 0.0
    %1633 = vmatpush1.msra.mxu0 0.0
    %1634 = vmatprep.subr.mxu0 0.0
    %1635 = vmatpush1.msra.mxu0 0.0
    %1636 = vmatprep.subr.mxu0 0.0
    %1637 = vmatpush1.msra.mxu0 0.0
    %1638 = vmatprep.subr.mxu0 0.0
    %1639 = vmatpush1.msra.mxu0 0.0
    %1640 = vmatprep.subr.mxu0 0.0
    %1641 = vmatpush1.msra.mxu0 0.0
    %1642 = vmatprep.subr.mxu0 0.0
    %1643 = vmatpush1.msra.mxu0 0.0
    %1644 = vmatprep.subr.mxu0 0.0
    %1645 = vmatpush1.msra.mxu0 0.0
    %1646 = vmatprep.subr.mxu0 0.0
    %1647 = vmatpush1.msra.mxu0 0.0
    %1648 = vmatprep.mubr.f32.mxu0 0.0
    %1649 = vmatmul.mubr.f32.gmra.mrb[0].mxu0 %v1436
    %v1650 = vpop.f32.mrb[0].mxu0
    %v1651 = vadd.f32 0.0, %v1650
    %v1652 = vpop.f32.mrb[0].mxu0
    %1653 = vdwg.mxu0
    %v1654 = vadd.f32 %v1583, %v1651
    %s1655 = scalar_lea.vmem [#allocation10], 8
    %v1656 = vld [vmem:[%s1655] sm:$0x3]
    %1657 = vmatprep.subr.mxu0 0.0
    %1658 = vmatpush1.msra.mxu0 %v146
    %1659 = vmatprep.subr.mxu0 0.0
    %1660 = vmatpush1.msra.mxu0 %v147
    %1661 = vmatprep.subr.mxu0 0.0
    %1662 = vmatpush1.msra.mxu0 %v148
    %1663 = vmatprep.subr.mxu0 0.0
    %1664 = vmatpush1.msra.mxu0 %v149
    %1665 = vmatprep.subr.mxu0 0.0
    %1666 = vmatpush1.msra.mxu0 0.0
    %1667 = vmatprep.subr.mxu0 0.0
    %1668 = vmatpush1.msra.mxu0 0.0
    %1669 = vmatprep.subr.mxu0 0.0
    %1670 = vmatpush1.msra.mxu0 0.0
    %1671 = vmatprep.subr.mxu0 0.0
    %1672 = vmatpush1.msra.mxu0 0.0
    %1673 = vmatprep.subr.mxu0 0.0
    %1674 = vmatpush1.msra.mxu0 0.0
    %1675 = vmatprep.subr.mxu0 0.0
    %1676 = vmatpush1.msra.mxu0 0.0
    %1677 = vmatprep.subr.mxu0 0.0
    %1678 = vmatpush1.msra.mxu0 0.0
    %1679 = vmatprep.subr.mxu0 0.0
    %1680 = vmatpush1.msra.mxu0 0.0
    %1681 = vmatprep.subr.mxu0 0.0
    %1682 = vmatpush1.msra.mxu0 0.0
    %1683 = vmatprep.subr.mxu0 0.0
    %1684 = vmatpush1.msra.mxu0 0.0
    %1685 = vmatprep.subr.mxu0 0.0
    %1686 = vmatpush1.msra.mxu0 0.0
    %1687 = vmatprep.subr.mxu0 0.0
    %1688 = vmatpush1.msra.mxu0 0.0
    %1689 = vmatprep.subr.mxu0 0.0
    %1690 = vmatpush1.msra.mxu0 0.0
    %1691 = vmatprep.subr.mxu0 0.0
    %1692 = vmatpush1.msra.mxu0 0.0
    %1693 = vmatprep.subr.mxu0 0.0
    %1694 = vmatpush1.msra.mxu0 0.0
    %1695 = vmatprep.subr.mxu0 0.0
    %1696 = vmatpush1.msra.mxu0 0.0
    %1697 = vmatprep.subr.mxu0 0.0
    %1698 = vmatpush1.msra.mxu0 0.0
    %1699 = vmatprep.subr.mxu0 0.0
    %1700 = vmatpush1.msra.mxu0 0.0
    %1701 = vmatprep.subr.mxu0 0.0
    %1702 = vmatpush1.msra.mxu0 0.0
    %1703 = vmatprep.subr.mxu0 0.0
    %1704 = vmatpush1.msra.mxu0 0.0
    %1705 = vmatprep.subr.mxu0 0.0
    %1706 = vmatpush1.msra.mxu0 0.0
    %1707 = vmatprep.subr.mxu0 0.0
    %1708 = vmatpush1.msra.mxu0 0.0
    %1709 = vmatprep.subr.mxu0 0.0
    %1710 = vmatpush1.msra.mxu0 0.0
    %1711 = vmatprep.subr.mxu0 0.0
    %1712 = vmatpush1.msra.mxu0 0.0
    %1713 = vmatprep.subr.mxu0 0.0
    %1714 = vmatpush1.msra.mxu0 0.0
    %1715 = vmatprep.subr.mxu0 0.0
    %1716 = vmatpush1.msra.mxu0 0.0
    %1717 = vmatprep.subr.mxu0 0.0
    %1718 = vmatpush1.msra.mxu0 0.0
    %1719 = vmatprep.subr.mxu0 0.0
    %1720 = vmatpush1.msra.mxu0 0.0
    %1721 = vmatprep.mubr.f32.mxu0 0.0
    %1722 = vmatmul.mubr.f32.gmra.mrb[0].mxu0 %v1436
    %v1723 = vpop.f32.mrb[0].mxu0
    %v1724 = vadd.f32 0.0, %v1723
    %v1725 = vpop.f32.mrb[0].mxu0
    %1726 = vdwg.mxu0
    %v1727 = vadd.f32 %v1656, %v1724
    %v1728 = vxor.u32 %v1508, 2147483648
    %v1729 = vmul.f32 %v1728, 1.442695
    %v1730 = vpow.pop %v1729
    %v1731 = vadd.f32 %v1730, 1.0
    %v1732 = vrcp.pop %v1731
    %v1733 = vmul.f32 1.0, %v1732
    %v1734 = vxor.u32 %v1581, 2147483648
    %v1735 = vmul.f32 %v1734, 1.442695
    %v1736 = vpow.pop %v1735
    %v1737 = vadd.f32 %v1736, 1.0
    %v1738 = vrcp.pop %v1737
    %v1739 = vmul.f32 1.0, %v1738
    %v1740 = vtanh.pop %v1654
    %v1741 = vxor.u32 %v1727, 2147483648
    %v1742 = vmul.f32 %v1741, 1.442695
    %v1743 = vpow.pop %v1742
    %v1744 = vadd.f32 %v1743, 1.0
    %v1745 = vrcp.pop %v1744
    %v1746 = vmul.f32 1.0, %v1745
    %v1747 = vmul.f32 %v1739, %v1428
    %v1748 = vmul.f32 %v1733, %v1740
    %v1749 = vadd.f32 %v1747, %v1748
    %v1750 = vtanh.pop %v1749
    %v1751 = vmul.f32 %v1746, %v1750
    %s1752 = scalar_lea.vmem [#allocation16], 8
    %1753 = vst.msk [vmem:[%s1752] sm:$0x3] %vm468, %v1751
    %s1754 = scalar_lea.vmem [#allocation4], 10
    %v1755 = vld [vmem:[%s1754] sm:$0x3]
    %v1757 = vsel %vm153, %v1751, 0
    %1759 = vmatprep.subr.mxu0 0.0
    %1760 = vmatpush1.msra.mxu0 %v131
    %1761 = vmatprep.subr.mxu0 0.0
    %1762 = vmatpush1.msra.mxu0 %v132
    %1763 = vmatprep.subr.mxu0 0.0
    %1764 = vmatpush1.msra.mxu0 %v133
    %1765 = vmatprep.subr.mxu0 0.0
    %1766 = vmatpush1.msra.mxu0 %v134
    %1767 = vmatprep.subr.mxu0 0.0
    %1768 = vmatpush1.msra.mxu0 0.0
    %1769 = vmatprep.subr.mxu0 0.0
    %1770 = vmatpush1.msra.mxu0 0.0
    %1771 = vmatprep.subr.mxu0 0.0
    %1772 = vmatpush1.msra.mxu0 0.0
    %1773 = vmatprep.subr.mxu0 0.0
    %1774 = vmatpush1.msra.mxu0 0.0
    %1775 = vmatprep.subr.mxu0 0.0
    %1776 = vmatpush1.msra.mxu0 0.0
    %1777 = vmatprep.subr.mxu0 0.0
    %1778 = vmatpush1.msra.mxu0 0.0
    %1779 = vmatprep.subr.mxu0 0.0
    %1780 = vmatpush1.msra.mxu0 0.0
    %1781 = vmatprep.subr.mxu0 0.0
    %1782 = vmatpush1.msra.mxu0 0.0
    %1783 = vmatprep.subr.mxu0 0.0
    %1784 = vmatpush1.msra.mxu0 0.0
    %1785 = vmatprep.subr.mxu0 0.0
    %1786 = vmatpush1.msra.mxu0 0.0
    %1787 = vmatprep.subr.mxu0 0.0
    %1788 = vmatpush1.msra.mxu0 0.0
    %1789 = vmatprep.subr.mxu0 0.0
    %1790 = vmatpush1.msra.mxu0 0.0
    %1791 = vmatprep.subr.mxu0 0.0
    %1792 = vmatpush1.msra.mxu0 0.0
    %1793 = vmatprep.subr.mxu0 0.0
    %1794 = vmatpush1.msra.mxu0 0.0
    %1795 = vmatprep.subr.mxu0 0.0
    %1796 = vmatpush1.msra.mxu0 0.0
    %1797 = vmatprep.subr.mxu0 0.0
    %1798 = vmatpush1.msra.mxu0 0.0
    %1799 = vmatprep.subr.mxu0 0.0
    %1800 = vmatpush1.msra.mxu0 0.0
    %1801 = vmatprep.subr.mxu0 0.0
    %1802 = vmatpush1.msra.mxu0 0.0
    %1803 = vmatprep.subr.mxu0 0.0
    %1804 = vmatpush1.msra.mxu0 0.0
    %1805 = vmatprep.subr.mxu0 0.0
    %1806 = vmatpush1.msra.mxu0 0.0
    %1807 = vmatprep.subr.mxu0 0.0
    %1808 = vmatpush1.msra.mxu0 0.0
    %1809 = vmatprep.subr.mxu0 0.0
    %1810 = vmatpush1.msra.mxu0 0.0
    %1811 = vmatprep.subr.mxu0 0.0
    %1812 = vmatpush1.msra.mxu0 0.0
    %1813 = vmatprep.subr.mxu0 0.0
    %1814 = vmatpush1.msra.mxu0 0.0
    %1815 = vmatprep.subr.mxu0 0.0
    %1816 = vmatpush1.msra.mxu0 0.0
    %1817 = vmatprep.subr.mxu0 0.0
    %1818 = vmatpush1.msra.mxu0 0.0
    %1819 = vmatprep.subr.mxu0 0.0
    %1820 = vmatpush1.msra.mxu0 0.0
    %1821 = vmatprep.subr.mxu0 0.0
    %1822 = vmatpush1.msra.mxu0 0.0
    %1823 = vmatprep.mubr.f32.mxu0 0.0
    %1824 = vmatmul.mubr.f32.gmra.mrb[0].mxu0 %v1757
    %v1825 = vpop.f32.mrb[0].mxu0
    %v1826 = vadd.f32 0.0, %v1825
    %v1827 = vpop.f32.mrb[0].mxu0
    %1828 = vdwg.mxu0
    %v1829 = vadd.f32 %v1755, %v1826
    %s1830 = scalar_lea.vmem [#allocation7], 10
    %v1831 = vld [vmem:[%s1830] sm:$0x3]
    %1832 = vmatprep.subr.mxu0 0.0
    %1833 = vmatpush1.msra.mxu0 %v136
    %1834 = vmatprep.subr.mxu0 0.0
    %1835 = vmatpush1.msra.mxu0 %v137
    %1836 = vmatprep.subr.mxu0 0.0
    %1837 = vmatpush1.msra.mxu0 %v138
    %1838 = vmatprep.subr.mxu0 0.0
    %1839 = vmatpush1.msra.mxu0 %v139
    %1840 = vmatprep.subr.mxu0 0.0
    %1841 = vmatpush1.msra.mxu0 0.0
    %1842 = vmatprep.subr.mxu0 0.0
    %1843 = vmatpush1.msra.mxu0 0.0
    %1844 = vmatprep.subr.mxu0 0.0
    %1845 = vmatpush1.msra.mxu0 0.0
    %1846 = vmatprep.subr.mxu0 0.0
    %1847 = vmatpush1.msra.mxu0 0.0
    %1848 = vmatprep.subr.mxu0 0.0
    %1849 = vmatpush1.msra.mxu0 0.0
    %1850 = vmatprep.subr.mxu0 0.0
    %1851 = vmatpush1.msra.mxu0 0.0
    %1852 = vmatprep.subr.mxu0 0.0
    %1853 = vmatpush1.msra.mxu0 0.0
    %1854 = vmatprep.subr.mxu0 0.0
    %1855 = vmatpush1.msra.mxu0 0.0
    %1856 = vmatprep.subr.mxu0 0.0
    %1857 = vmatpush1.msra.mxu0 0.0
    %1858 = vmatprep.subr.mxu0 0.0
    %1859 = vmatpush1.msra.mxu0 0.0
    %1860 = vmatprep.subr.mxu0 0.0
    %1861 = vmatpush1.msra.mxu0 0.0
    %1862 = vmatprep.subr.mxu0 0.0
    %1863 = vmatpush1.msra.mxu0 0.0
    %1864 = vmatprep.subr.mxu0 0.0
    %1865 = vmatpush1.msra.mxu0 0.0
    %1866 = vmatprep.subr.mxu0 0.0
    %1867 = vmatpush1.msra.mxu0 0.0
    %1868 = vmatprep.subr.mxu0 0.0
    %1869 = vmatpush1.msra.mxu0 0.0
    %1870 = vmatprep.subr.mxu0 0.0
    %1871 = vmatpush1.msra.mxu0 0.0
    %1872 = vmatprep.subr.mxu0 0.0
    %1873 = vmatpush1.msra.mxu0 0.0
    %1874 = vmatprep.subr.mxu0 0.0
    %1875 = vmatpush1.msra.mxu0 0.0
    %1876 = vmatprep.subr.mxu0 0.0
    %1877 = vmatpush1.msra.mxu0 0.0
    %1878 = vmatprep.subr.mxu0 0.0
    %1879 = vmatpush1.msra.mxu0 0.0
    %1880 = vmatprep.subr.mxu0 0.0
    %1881 = vmatpush1.msra.mxu0 0.0
    %1882 = vmatprep.subr.mxu0 0.0
    %1883 = vmatpush1.msra.mxu0 0.0
    %1884 = vmatprep.subr.mxu0 0.0
    %1885 = vmatpush1.msra.mxu0 0.0
    %1886 = vmatprep.subr.mxu0 0.0
    %1887 = vmatpush1.msra.mxu0 0.0
    %1888 = vmatprep.subr.mxu0 0.0
    %1889 = vmatpush1.msra.mxu0 0.0
    %1890 = vmatprep.subr.mxu0 0.0
    %1891 = vmatpush1.msra.mxu0 0.0
    %1892 = vmatprep.subr.mxu0 0.0
    %1893 = vmatpush1.msra.mxu0 0.0
    %1894 = vmatprep.subr.mxu0 0.0
    %1895 = vmatpush1.msra.mxu0 0.0
    %1896 = vmatprep.mubr.f32.mxu0 0.0
    %1897 = vmatmul.mubr.f32.gmra.mrb[0].mxu0 %v1757
    %v1898 = vpop.f32.mrb[0].mxu0
    %v1899 = vadd.f32 0.0, %v1898
    %v1900 = vpop.f32.mrb[0].mxu0
    %1901 = vdwg.mxu0
    %v1902 = vadd.f32 %v1831, %v1899
    %s1903 = scalar_lea.vmem [#allocation9], 10
    %v1904 = vld [vmem:[%s1903] sm:$0x3]
    %1905 = vmatprep.subr.mxu0 0.0
    %1906 = vmatpush1.msra.mxu0 %v141
    %1907 = vmatprep.subr.mxu0 0.0
    %1908 = vmatpush1.msra.mxu0 %v142
    %1909 = vmatprep.subr.mxu0 0.0
    %1910 = vmatpush1.msra.mxu0 %v143
    %1911 = vmatprep.subr.mxu0 0.0
    %1912 = vmatpush1.msra.mxu0 %v144
    %1913 = vmatprep.subr.mxu0 0.0
    %1914 = vmatpush1.msra.mxu0 0.0
    %1915 = vmatprep.subr.mxu0 0.0
    %1916 = vmatpush1.msra.mxu0 0.0
    %1917 = vmatprep.subr.mxu0 0.0
    %1918 = vmatpush1.msra.mxu0 0.0
    %1919 = vmatprep.subr.mxu0 0.0
    %1920 = vmatpush1.msra.mxu0 0.0
    %1921 = vmatprep.subr.mxu0 0.0
    %1922 = vmatpush1.msra.mxu0 0.0
    %1923 = vmatprep.subr.mxu0 0.0
    %1924 = vmatpush1.msra.mxu0 0.0
    %1925 = vmatprep.subr.mxu0 0.0
    %1926 = vmatpush1.msra.mxu0 0.0
    %1927 = vmatprep.subr.mxu0 0.0
    %1928 = vmatpush1.msra.mxu0 0.0
    %1929 = vmatprep.subr.mxu0 0.0
    %1930 = vmatpush1.msra.mxu0 0.0
    %1931 = vmatprep.subr.mxu0 0.0
    %1932 = vmatpush1.msra.mxu0 0.0
    %1933 = vmatprep.subr.mxu0 0.0
    %1934 = vmatpush1.msra.mxu0 0.0
    %1935 = vmatprep.subr.mxu0 0.0
    %1936 = vmatpush1.msra.mxu0 0.0
    %1937 = vmatprep.subr.mxu0 0.0
    %1938 = vmatpush1.msra.mxu0 0.0
    %1939 = vmatprep.subr.mxu0 0.0
    %1940 = vmatpush1.msra.mxu0 0.0
    %1941 = vmatprep.subr.mxu0 0.0
    %1942 = vmatpush1.msra.mxu0 0.0
    %1943 = vmatprep.subr.mxu0 0.0
    %1944 = vmatpush1.msra.mxu0 0.0
    %1945 = vmatprep.subr.mxu0 0.0
    %1946 = vmatpush1.msra.mxu0 0.0
    %1947 = vmatprep.subr.mxu0 0.0
    %1948 = vmatpush1.msra.mxu0 0.0
    %1949 = vmatprep.subr.mxu0 0.0
    %1950 = vmatpush1.msra.mxu0 0.0
    %1951 = vmatprep.subr.mxu0 0.0
    %1952 = vmatpush1.msra.mxu0 0.0
    %1953 = vmatprep.subr.mxu0 0.0
    %1954 = vmatpush1.msra.mxu0 0.0
    %1955 = vmatprep.subr.mxu0 0.0
    %1956 = vmatpush1.msra.mxu0 0.0
    %1957 = vmatprep.subr.mxu0 0.0
    %1958 = vmatpush1.msra.mxu0 0.0
    %1959 = vmatprep.subr.mxu0 0.0
    %1960 = vmatpush1.msra.mxu0 0.0
    %1961 = vmatprep.subr.mxu0 0.0
    %1962 = vmatpush1.msra.mxu0 0.0
    %1963 = vmatprep.subr.mxu0 0.0
    %1964 = vmatpush1.msra.mxu0 0.0
    %1965 = vmatprep.subr.mxu0 0.0
    %1966 = vmatpush1.msra.mxu0 0.0
    %1967 = vmatprep.subr.mxu0 0.0
    %1968 = vmatpush1.msra.mxu0 0.0
    %1969 = vmatprep.mubr.f32.mxu0 0.0
    %1970 = vmatmul.mubr.f32.gmra.mrb[0].mxu0 %v1757
    %v1971 = vpop.f32.mrb[0].mxu0
    %v1972 = vadd.f32 0.0, %v1971
    %v1973 = vpop.f32.mrb[0].mxu0
    %1974 = vdwg.mxu0
    %v1975 = vadd.f32 %v1904, %v1972
    %s1976 = scalar_lea.vmem [#allocation10], 10
    %v1977 = vld [vmem:[%s1976] sm:$0x3]
    %1978 = vmatprep.subr.mxu0 0.0
    %1979 = vmatpush1.msra.mxu0 %v146
    %1980 = vmatprep.subr.mxu0 0.0
    %1981 = vmatpush1.msra.mxu0 %v147
    %1982 = vmatprep.subr.mxu0 0.0
    %1983 = vmatpush1.msra.mxu0 %v148
    %1984 = vmatprep.subr.mxu0 0.0
    %1985 = vmatpush1.msra.mxu0 %v149
    %1986 = vmatprep.subr.mxu0 0.0
    %1987 = vmatpush1.msra.mxu0 0.0
    %1988 = vmatprep.subr.mxu0 0.0
    %1989 = vmatpush1.msra.mxu0 0.0
    %1990 = vmatprep.subr.mxu0 0.0
    %1991 = vmatpush1.msra.mxu0 0.0
    %1992 = vmatprep.subr.mxu0 0.0
    %1993 = vmatpush1.msra.mxu0 0.0
    %1994 = vmatprep.subr.mxu0 0.0
    %1995 = vmatpush1.msra.mxu0 0.0
    %1996 = vmatprep.subr.mxu0 0.0
    %1997 = vmatpush1.msra.mxu0 0.0
    %1998 = vmatprep.subr.mxu0 0.0
    %1999 = vmatpush1.msra.mxu0 0.0
    %2000 = vmatprep.subr.mxu0 0.0
    %2001 = vmatpush1.msra.mxu0 0.0
    %2002 = vmatprep.subr.mxu0 0.0
    %2003 = vmatpush1.msra.mxu0 0.0
    %2004 = vmatprep.subr.mxu0 0.0
    %2005 = vmatpush1.msra.mxu0 0.0
    %2006 = vmatprep.subr.mxu0 0.0
    %2007 = vmatpush1.msra.mxu0 0.0
    %2008 = vmatprep.subr.mxu0 0.0
    %2009 = vmatpush1.msra.mxu0 0.0
    %2010 = vmatprep.subr.mxu0 0.0
    %2011 = vmatpush1.msra.mxu0 0.0
    %2012 = vmatprep.subr.mxu0 0.0
    %2013 = vmatpush1.msra.mxu0 0.0
    %2014 = vmatprep.subr.mxu0 0.0
    %2015 = vmatpush1.msra.mxu0 0.0
    %2016 = vmatprep.subr.mxu0 0.0
    %2017 = vmatpush1.msra.mxu0 0.0
    %2018 = vmatprep.subr.mxu0 0.0
    %2019 = vmatpush1.msra.mxu0 0.0
    %2020 = vmatprep.subr.mxu0 0.0
    %2021 = vmatpush1.msra.mxu0 0.0
    %2022 = vmatprep.subr.mxu0 0.0
    %2023 = vmatpush1.msra.mxu0 0.0
    %2024 = vmatprep.subr.mxu0 0.0
    %2025 = vmatpush1.msra.mxu0 0.0
    %2026 = vmatprep.subr.mxu0 0.0
    %2027 = vmatpush1.msra.mxu0 0.0
    %2028 = vmatprep.subr.mxu0 0.0
    %2029 = vmatpush1.msra.mxu0 0.0
    %2030 = vmatprep.subr.mxu0 0.0
    %2031 = vmatpush1.msra.mxu0 0.0
    %2032 = vmatprep.subr.mxu0 0.0
    %2033 = vmatpush1.msra.mxu0 0.0
    %2034 = vmatprep.subr.mxu0 0.0
    %2035 = vmatpush1.msra.mxu0 0.0
    %2036 = vmatprep.subr.mxu0 0.0
    %2037 = vmatpush1.msra.mxu0 0.0
    %2038 = vmatprep.subr.mxu0 0.0
    %2039 = vmatpush1.msra.mxu0 0.0
    %2040 = vmatprep.subr.mxu0 0.0
    %2041 = vmatpush1.msra.mxu0 0.0
    %2042 = vmatprep.mubr.f32.mxu0 0.0
    %2043 = vmatmul.mubr.f32.gmra.mrb[0].mxu0 %v1757
    %v2044 = vpop.f32.mrb[0].mxu0
    %v2045 = vadd.f32 0.0, %v2044
    %v2046 = vpop.f32.mrb[0].mxu0
    %2047 = vdwg.mxu0
    %v2048 = vadd.f32 %v1977, %v2045
    %v2049 = vxor.u32 %v1829, 2147483648
    %v2050 = vmul.f32 %v2049, 1.442695
    %v2051 = vpow.pop %v2050
    %v2052 = vadd.f32 %v2051, 1.0
    %v2053 = vrcp.pop %v2052
    %v2054 = vmul.f32 1.0, %v2053
    %v2055 = vxor.u32 %v1902, 2147483648
    %v2056 = vmul.f32 %v2055, 1.442695
    %v2057 = vpow.pop %v2056
    %v2058 = vadd.f32 %v2057, 1.0
    %v2059 = vrcp.pop %v2058
    %v2060 = vmul.f32 1.0, %v2059
    %v2061 = vtanh.pop %v1975
    %v2062 = vxor.u32 %v2048, 2147483648
    %v2063 = vmul.f32 %v2062, 1.442695
    %v2064 = vpow.pop %v2063
    %v2065 = vadd.f32 %v2064, 1.0
    %v2066 = vrcp.pop %v2065
    %v2067 = vmul.f32 1.0, %v2066
    %v2068 = vmul.f32 %v2060, %v1749
    %v2069 = vmul.f32 %v2054, %v2061
    %v2070 = vadd.f32 %v2068, %v2069
    %v2071 = vtanh.pop %v2070
    %v2072 = vmul.f32 %v2067, %v2071
    %s2073 = scalar_lea.vmem [#allocation16], 10
    %2074 = vst.msk [vmem:[%s2073] sm:$0x3] %vm468, %v2072
    %s2075 = scalar_lea.vmem [#allocation4], 12
    %v2076 = vld [vmem:[%s2075] sm:$0x3]
    %v2078 = vsel %vm153, %v2072, 0
    %2080 = vmatprep.subr.mxu0 0.0
    %2081 = vmatpush1.msra.mxu0 %v131
    %2082 = vmatprep.subr.mxu0 0.0
    %2083 = vmatpush1.msra.mxu0 %v132
    %2084 = vmatprep.subr.mxu0 0.0
    %2085 = vmatpush1.msra.mxu0 %v133
    %2086 = vmatprep.subr.mxu0 0.0
    %2087 = vmatpush1.msra.mxu0 %v134
    %2088 = vmatprep.subr.mxu0 0.0
    %2089 = vmatpush1.msra.mxu0 0.0
    %2090 = vmatprep.subr.mxu0 0.0
    %2091 = vmatpush1.msra.mxu0 0.0
    %2092 = vmatprep.subr.mxu0 0.0
    %2093 = vmatpush1.msra.mxu0 0.0
    %2094 = vmatprep.subr.mxu0 0.0
    %2095 = vmatpush1.msra.mxu0 0.0
    %2096 = vmatprep.subr.mxu0 0.0
    %2097 = vmatpush1.msra.mxu0 0.0
    %2098 = vmatprep.subr.mxu0 0.0
    %2099 = vmatpush1.msra.mxu0 0.0
    %2100 = vmatprep.subr.mxu0 0.0
    %2101 = vmatpush1.msra.mxu0 0.0
    %2102 = vmatprep.subr.mxu0 0.0
    %2103 = vmatpush1.msra.mxu0 0.0
    %2104 = vmatprep.subr.mxu0 0.0
    %2105 = vmatpush1.msra.mxu0 0.0
    %2106 = vmatprep.subr.mxu0 0.0
    %2107 = vmatpush1.msra.mxu0 0.0
    %2108 = vmatprep.subr.mxu0 0.0
    %2109 = vmatpush1.msra.mxu0 0.0
    %2110 = vmatprep.subr.mxu0 0.0
    %2111 = vmatpush1.msra.mxu0 0.0
    %2112 = vmatprep.subr.mxu0 0.0
    %2113 = vmatpush1.msra.mxu0 0.0
    %2114 = vmatprep.subr.mxu0 0.0
    %2115 = vmatpush1.msra.mxu0 0.0
    %2116 = vmatprep.subr.mxu0 0.0
    %2117 = vmatpush1.msra.mxu0 0.0
    %2118 = vmatprep.subr.mxu0 0.0
    %2119 = vmatpush1.msra.mxu0 0.0
    %2120 = vmatprep.subr.mxu0 0.0
    %2121 = vmatpush1.msra.mxu0 0.0
    %2122 = vmatprep.subr.mxu0 0.0
    %2123 = vmatpush1.msra.mxu0 0.0
    %2124 = vmatprep.subr.mxu0 0.0
    %2125 = vmatpush1.msra.mxu0 0.0
    %2126 = vmatprep.subr.mxu0 0.0
    %2127 = vmatpush1.msra.mxu0 0.0
    %2128 = vmatprep.subr.mxu0 0.0
    %2129 = vmatpush1.msra.mxu0 0.0
    %2130 = vmatprep.subr.mxu0 0.0
    %2131 = vmatpush1.msra.mxu0 0.0
    %2132 = vmatprep.subr.mxu0 0.0
    %2133 = vmatpush1.msra.mxu0 0.0
    %2134 = vmatprep.subr.mxu0 0.0
    %2135 = vmatpush1.msra.mxu0 0.0
    %2136 = vmatprep.subr.mxu0 0.0
    %2137 = vmatpush1.msra.mxu0 0.0
    %2138 = vmatprep.subr.mxu0 0.0
    %2139 = vmatpush1.msra.mxu0 0.0
    %2140 = vmatprep.subr.mxu0 0.0
    %2141 = vmatpush1.msra.mxu0 0.0
    %2142 = vmatprep.subr.mxu0 0.0
    %2143 = vmatpush1.msra.mxu0 0.0
    %2144 = vmatprep.mubr.f32.mxu0 0.0
    %2145 = vmatmul.mubr.f32.gmra.mrb[0].mxu0 %v2078
    %v2146 = vpop.f32.mrb[0].mxu0
    %v2147 = vadd.f32 0.0, %v2146
    %v2148 = vpop.f32.mrb[0].mxu0
    %2149 = vdwg.mxu0
    %v2150 = vadd.f32 %v2076, %v2147
    %s2151 = scalar_lea.vmem [#allocation7], 12
    %v2152 = vld [vmem:[%s2151] sm:$0x3]
    %2153 = vmatprep.subr.mxu0 0.0
    %2154 = vmatpush1.msra.mxu0 %v136
    %2155 = vmatprep.subr.mxu0 0.0
    %2156 = vmatpush1.msra.mxu0 %v137
    %2157 = vmatprep.subr.mxu0 0.0
    %2158 = vmatpush1.msra.mxu0 %v138
    %2159 = vmatprep.subr.mxu0 0.0
    %2160 = vmatpush1.msra.mxu0 %v139
    %2161 = vmatprep.subr.mxu0 0.0
    %2162 = vmatpush1.msra.mxu0 0.0
    %2163 = vmatprep.subr.mxu0 0.0
    %2164 = vmatpush1.msra.mxu0 0.0
    %2165 = vmatprep.subr.mxu0 0.0
    %2166 = vmatpush1.msra.mxu0 0.0
    %2167 = vmatprep.subr.mxu0 0.0
    %2168 = vmatpush1.msra.mxu0 0.0
    %2169 = vmatprep.subr.mxu0 0.0
    %2170 = vmatpush1.msra.mxu0 0.0
    %2171 = vmatprep.subr.mxu0 0.0
    %2172 = vmatpush1.msra.mxu0 0.0
    %2173 = vmatprep.subr.mxu0 0.0
    %2174 = vmatpush1.msra.mxu0 0.0
    %2175 = vmatprep.subr.mxu0 0.0
    %2176 = vmatpush1.msra.mxu0 0.0
    %2177 = vmatprep.subr.mxu0 0.0
    %2178 = vmatpush1.msra.mxu0 0.0
    %2179 = vmatprep.subr.mxu0 0.0
    %2180 = vmatpush1.msra.mxu0 0.0
    %2181 = vmatprep.subr.mxu0 0.0
    %2182 = vmatpush1.msra.mxu0 0.0
    %2183 = vmatprep.subr.mxu0 0.0
    %2184 = vmatpush1.msra.mxu0 0.0
    %2185 = vmatprep.subr.mxu0 0.0
    %2186 = vmatpush1.msra.mxu0 0.0
    %2187 = vmatprep.subr.mxu0 0.0
    %2188 = vmatpush1.msra.mxu0 0.0
    %2189 = vmatprep.subr.mxu0 0.0
    %2190 = vmatpush1.msra.mxu0 0.0
    %2191 = vmatprep.subr.mxu0 0.0
    %2192 = vmatpush1.msra.mxu0 0.0
    %2193 = vmatprep.subr.mxu0 0.0
    %2194 = vmatpush1.msra.mxu0 0.0
    %2195 = vmatprep.subr.mxu0 0.0
    %2196 = vmatpush1.msra.mxu0 0.0
    %2197 = vmatprep.subr.mxu0 0.0
    %2198 = vmatpush1.msra.mxu0 0.0
    %2199 = vmatprep.subr.mxu0 0.0
    %2200 = vmatpush1.msra.mxu0 0.0
    %2201 = vmatprep.subr.mxu0 0.0
    %2202 = vmatpush1.msra.mxu0 0.0
    %2203 = vmatprep.subr.mxu0 0.0
    %2204 = vmatpush1.msra.mxu0 0.0
    %2205 = vmatprep.subr.mxu0 0.0
    %2206 = vmatpush1.msra.mxu0 0.0
    %2207 = vmatprep.subr.mxu0 0.0
    %2208 = vmatpush1.msra.mxu0 0.0
    %2209 = vmatprep.subr.mxu0 0.0
    %2210 = vmatpush1.msra.mxu0 0.0
    %2211 = vmatprep.subr.mxu0 0.0
    %2212 = vmatpush1.msra.mxu0 0.0
    %2213 = vmatprep.subr.mxu0 0.0
    %2214 = vmatpush1.msra.mxu0 0.0
    %2215 = vmatprep.subr.mxu0 0.0
    %2216 = vmatpush1.msra.mxu0 0.0
    %2217 = vmatprep.mubr.f32.mxu0 0.0
    %2218 = vmatmul.mubr.f32.gmra.mrb[0].mxu0 %v2078
    %v2219 = vpop.f32.mrb[0].mxu0
    %v2220 = vadd.f32 0.0, %v2219
    %v2221 = vpop.f32.mrb[0].mxu0
    %2222 = vdwg.mxu0
    %v2223 = vadd.f32 %v2152, %v2220
    %s2224 = scalar_lea.vmem [#allocation9], 12
    %v2225 = vld [vmem:[%s2224] sm:$0x3]
    %2226 = vmatprep.subr.mxu0 0.0
    %2227 = vmatpush1.msra.mxu0 %v141
    %2228 = vmatprep.subr.mxu0 0.0
    %2229 = vmatpush1.msra.mxu0 %v142
    %2230 = vmatprep.subr.mxu0 0.0
    %2231 = vmatpush1.msra.mxu0 %v143
    %2232 = vmatprep.subr.mxu0 0.0
    %2233 = vmatpush1.msra.mxu0 %v144
    %2234 = vmatprep.subr.mxu0 0.0
    %2235 = vmatpush1.msra.mxu0 0.0
    %2236 = vmatprep.subr.mxu0 0.0
    %2237 = vmatpush1.msra.mxu0 0.0
    %2238 = vmatprep.subr.mxu0 0.0
    %2239 = vmatpush1.msra.mxu0 0.0
    %2240 = vmatprep.subr.mxu0 0.0
    %2241 = vmatpush1.msra.mxu0 0.0
    %2242 = vmatprep.subr.mxu0 0.0
    %2243 = vmatpush1.msra.mxu0 0.0
    %2244 = vmatprep.subr.mxu0 0.0
    %2245 = vmatpush1.msra.mxu0 0.0
    %2246 = vmatprep.subr.mxu0 0.0
    %2247 = vmatpush1.msra.mxu0 0.0
    %2248 = vmatprep.subr.mxu0 0.0
    %2249 = vmatpush1.msra.mxu0 0.0
    %2250 = vmatprep.subr.mxu0 0.0
    %2251 = vmatpush1.msra.mxu0 0.0
    %2252 = vmatprep.subr.mxu0 0.0
    %2253 = vmatpush1.msra.mxu0 0.0
    %2254 = vmatprep.subr.mxu0 0.0
    %2255 = vmatpush1.msra.mxu0 0.0
    %2256 = vmatprep.subr.mxu0 0.0
    %2257 = vmatpush1.msra.mxu0 0.0
    %2258 = vmatprep.subr.mxu0 0.0
    %2259 = vmatpush1.msra.mxu0 0.0
    %2260 = vmatprep.subr.mxu0 0.0
    %2261 = vmatpush1.msra.mxu0 0.0
    %2262 = vmatprep.subr.mxu0 0.0
    %2263 = vmatpush1.msra.mxu0 0.0
    %2264 = vmatprep.subr.mxu0 0.0
    %2265 = vmatpush1.msra.mxu0 0.0
    %2266 = vmatprep.subr.mxu0 0.0
    %2267 = vmatpush1.msra.mxu0 0.0
    %2268 = vmatprep.subr.mxu0 0.0
    %2269 = vmatpush1.msra.mxu0 0.0
    %2270 = vmatprep.subr.mxu0 0.0
    %2271 = vmatpush1.msra.mxu0 0.0
    %2272 = vmatprep.subr.mxu0 0.0
    %2273 = vmatpush1.msra.mxu0 0.0
    %2274 = vmatprep.subr.mxu0 0.0
    %2275 = vmatpush1.msra.mxu0 0.0
    %2276 = vmatprep.subr.mxu0 0.0
    %2277 = vmatpush1.msra.mxu0 0.0
    %2278 = vmatprep.subr.mxu0 0.0
    %2279 = vmatpush1.msra.mxu0 0.0
    %2280 = vmatprep.subr.mxu0 0.0
    %2281 = vmatpush1.msra.mxu0 0.0
    %2282 = vmatprep.subr.mxu0 0.0
    %2283 = vmatpush1.msra.mxu0 0.0
    %2284 = vmatprep.subr.mxu0 0.0
    %2285 = vmatpush1.msra.mxu0 0.0
    %2286 = vmatprep.subr.mxu0 0.0
    %2287 = vmatpush1.msra.mxu0 0.0
    %2288 = vmatprep.subr.mxu0 0.0
    %2289 = vmatpush1.msra.mxu0 0.0
    %2290 = vmatprep.mubr.f32.mxu0 0.0
    %2291 = vmatmul.mubr.f32.gmra.mrb[0].mxu0 %v2078
    %v2292 = vpop.f32.mrb[0].mxu0
    %v2293 = vadd.f32 0.0, %v2292
    %v2294 = vpop.f32.mrb[0].mxu0
    %2295 = vdwg.mxu0
    %v2296 = vadd.f32 %v2225, %v2293
    %s2297 = scalar_lea.vmem [#allocation10], 12
    %v2298 = vld [vmem:[%s2297] sm:$0x3]
    %2299 = vmatprep.subr.mxu0 0.0
    %2300 = vmatpush1.msra.mxu0 %v146
    %2301 = vmatprep.subr.mxu0 0.0
    %2302 = vmatpush1.msra.mxu0 %v147
    %2303 = vmatprep.subr.mxu0 0.0
    %2304 = vmatpush1.msra.mxu0 %v148
    %2305 = vmatprep.subr.mxu0 0.0
    %2306 = vmatpush1.msra.mxu0 %v149
    %2307 = vmatprep.subr.mxu0 0.0
    %2308 = vmatpush1.msra.mxu0 0.0
    %2309 = vmatprep.subr.mxu0 0.0
    %2310 = vmatpush1.msra.mxu0 0.0
    %2311 = vmatprep.subr.mxu0 0.0
    %2312 = vmatpush1.msra.mxu0 0.0
    %2313 = vmatprep.subr.mxu0 0.0
    %2314 = vmatpush1.msra.mxu0 0.0
    %2315 = vmatprep.subr.mxu0 0.0
    %2316 = vmatpush1.msra.mxu0 0.0
    %2317 = vmatprep.subr.mxu0 0.0
    %2318 = vmatpush1.msra.mxu0 0.0
    %2319 = vmatprep.subr.mxu0 0.0
    %2320 = vmatpush1.msra.mxu0 0.0
    %2321 = vmatprep.subr.mxu0 0.0
    %2322 = vmatpush1.msra.mxu0 0.0
    %2323 = vmatprep.subr.mxu0 0.0
    %2324 = vmatpush1.msra.mxu0 0.0
    %2325 = vmatprep.subr.mxu0 0.0
    %2326 = vmatpush1.msra.mxu0 0.0
    %2327 = vmatprep.subr.mxu0 0.0
    %2328 = vmatpush1.msra.mxu0 0.0
    %2329 = vmatprep.subr.mxu0 0.0
    %2330 = vmatpush1.msra.mxu0 0.0
    %2331 = vmatprep.subr.mxu0 0.0
    %2332 = vmatpush1.msra.mxu0 0.0
    %2333 = vmatprep.subr.mxu0 0.0
    %2334 = vmatpush1.msra.mxu0 0.0
    %2335 = vmatprep.subr.mxu0 0.0
    %2336 = vmatpush1.msra.mxu0 0.0
    %2337 = vmatprep.subr.mxu0 0.0
    %2338 = vmatpush1.msra.mxu0 0.0
    %2339 = vmatprep.subr.mxu0 0.0
    %2340 = vmatpush1.msra.mxu0 0.0
    %2341 = vmatprep.subr.mxu0 0.0
    %2342 = vmatpush1.msra.mxu0 0.0
    %2343 = vmatprep.subr.mxu0 0.0
    %2344 = vmatpush1.msra.mxu0 0.0
    %2345 = vmatprep.subr.mxu0 0.0
    %2346 = vmatpush1.msra.mxu0 0.0
    %2347 = vmatprep.subr.mxu0 0.0
    %2348 = vmatpush1.msra.mxu0 0.0
    %2349 = vmatprep.subr.mxu0 0.0
    %2350 = vmatpush1.msra.mxu0 0.0
    %2351 = vmatprep.subr.mxu0 0.0
    %2352 = vmatpush1.msra.mxu0 0.0
    %2353 = vmatprep.subr.mxu0 0.0
    %2354 = vmatpush1.msra.mxu0 0.0
    %2355 = vmatprep.subr.mxu0 0.0
    %2356 = vmatpush1.msra.mxu0 0.0
    %2357 = vmatprep.subr.mxu0 0.0
    %2358 = vmatpush1.msra.mxu0 0.0
    %2359 = vmatprep.subr.mxu0 0.0
    %2360 = vmatpush1.msra.mxu0 0.0
    %2361 = vmatprep.subr.mxu0 0.0
    %2362 = vmatpush1.msra.mxu0 0.0
    %2363 = vmatprep.mubr.f32.mxu0 0.0
    %2364 = vmatmul.mubr.f32.gmra.mrb[0].mxu0 %v2078
    %v2365 = vpop.f32.mrb[0].mxu0
    %v2366 = vadd.f32 0.0, %v2365
    %v2367 = vpop.f32.mrb[0].mxu0
    %2368 = vdwg.mxu0
    %v2369 = vadd.f32 %v2298, %v2366
    %v2370 = vxor.u32 %v2150, 2147483648
    %v2371 = vmul.f32 %v2370, 1.442695
    %v2372 = vpow.pop %v2371
    %v2373 = vadd.f32 %v2372, 1.0
    %v2374 = vrcp.pop %v2373
    %v2375 = vmul.f32 1.0, %v2374
    %v2376 = vxor.u32 %v2223, 2147483648
    %v2377 = vmul.f32 %v2376, 1.442695
    %v2378 = vpow.pop %v2377
    %v2379 = vadd.f32 %v2378, 1.0
    %v2380 = vrcp.pop %v2379
    %v2381 = vmul.f32 1.0, %v2380
    %v2382 = vtanh.pop %v2296
    %v2383 = vxor.u32 %v2369, 2147483648
    %v2384 = vmul.f32 %v2383, 1.442695
    %v2385 = vpow.pop %v2384
    %v2386 = vadd.f32 %v2385, 1.0
    %v2387 = vrcp.pop %v2386
    %v2388 = vmul.f32 1.0, %v2387
    %v2389 = vmul.f32 %v2381, %v2070
    %v2390 = vmul.f32 %v2375, %v2382
    %v2391 = vadd.f32 %v2389, %v2390
    %v2392 = vtanh.pop %v2391
    %v2393 = vmul.f32 %v2388, %v2392
    %s2394 = scalar_lea.vmem [#allocation16], 12
    %2395 = vst.msk [vmem:[%s2394] sm:$0x3] %vm468, %v2393
    %s2396 = scalar_lea.vmem [#allocation4], 14
    %v2397 = vld [vmem:[%s2396] sm:$0x3]
    %v2399 = vsel %vm153, %v2393, 0
    %2401 = vmatprep.subr.mxu0 0.0
    %2402 = vmatpush1.msra.mxu0 %v131
    %2403 = vmatprep.subr.mxu0 0.0
    %2404 = vmatpush1.msra.mxu0 %v132
    %2405 = vmatprep.subr.mxu0 0.0
    %2406 = vmatpush1.msra.mxu0 %v133
    %2407 = vmatprep.subr.mxu0 0.0
    %2408 = vmatpush1.msra.mxu0 %v134
    %2409 = vmatprep.subr.mxu0 0.0
    %2410 = vmatpush1.msra.mxu0 0.0
    %2411 = vmatprep.subr.mxu0 0.0
    %2412 = vmatpush1.msra.mxu0 0.0
    %2413 = vmatprep.subr.mxu0 0.0
    %2414 = vmatpush1.msra.mxu0 0.0
    %2415 = vmatprep.subr.mxu0 0.0
    %2416 = vmatpush1.msra.mxu0 0.0
    %2417 = vmatprep.subr.mxu0 0.0
    %2418 = vmatpush1.msra.mxu0 0.0
    %2419 = vmatprep.subr.mxu0 0.0
    %2420 = vmatpush1.msra.mxu0 0.0
    %2421 = vmatprep.subr.mxu0 0.0
    %2422 = vmatpush1.msra.mxu0 0.0
    %2423 = vmatprep.subr.mxu0 0.0
    %2424 = vmatpush1.msra.mxu0 0.0
    %2425 = vmatprep.subr.mxu0 0.0
    %2426 = vmatpush1.msra.mxu0 0.0
    %2427 = vmatprep.subr.mxu0 0.0
    %2428 = vmatpush1.msra.mxu0 0.0
    %2429 = vmatprep.subr.mxu0 0.0
    %2430 = vmatpush1.msra.mxu0 0.0
    %2431 = vmatprep.subr.mxu0 0.0
    %2432 = vmatpush1.msra.mxu0 0.0
    %2433 = vmatprep.subr.mxu0 0.0
    %2434 = vmatpush1.msra.mxu0 0.0
    %2435 = vmatprep.subr.mxu0 0.0
    %2436 = vmatpush1.msra.mxu0 0.0
    %2437 = vmatprep.subr.mxu0 0.0
    %2438 = vmatpush1.msra.mxu0 0.0
    %2439 = vmatprep.subr.mxu0 0.0
    %2440 = vmatpush1.msra.mxu0 0.0
    %2441 = vmatprep.subr.mxu0 0.0
    %2442 = vmatpush1.msra.mxu0 0.0
    %2443 = vmatprep.subr.mxu0 0.0
    %2444 = vmatpush1.msra.mxu0 0.0
    %2445 = vmatprep.subr.mxu0 0.0
    %2446 = vmatpush1.msra.mxu0 0.0
    %2447 = vmatprep.subr.mxu0 0.0
    %2448 = vmatpush1.msra.mxu0 0.0
    %2449 = vmatprep.subr.mxu0 0.0
    %2450 = vmatpush1.msra.mxu0 0.0
    %2451 = vmatprep.subr.mxu0 0.0
    %2452 = vmatpush1.msra.mxu0 0.0
    %2453 = vmatprep.subr.mxu0 0.0
    %2454 = vmatpush1.msra.mxu0 0.0
    %2455 = vmatprep.subr.mxu0 0.0
    %2456 = vmatpush1.msra.mxu0 0.0
    %2457 = vmatprep.subr.mxu0 0.0
    %2458 = vmatpush1.msra.mxu0 0.0
    %2459 = vmatprep.subr.mxu0 0.0
    %2460 = vmatpush1.msra.mxu0 0.0
    %2461 = vmatprep.subr.mxu0 0.0
    %2462 = vmatpush1.msra.mxu0 0.0
    %2463 = vmatprep.subr.mxu0 0.0
    %2464 = vmatpush1.msra.mxu0 0.0
    %2465 = vmatprep.mubr.f32.mxu0 0.0
    %2466 = vmatmul.mubr.f32.gmra.mrb[0].mxu0 %v2399
    %v2467 = vpop.f32.mrb[0].mxu0
    %v2468 = vadd.f32 0.0, %v2467
    %v2469 = vpop.f32.mrb[0].mxu0
    %2470 = vdwg.mxu0
    %v2471 = vadd.f32 %v2397, %v2468
    %s2472 = scalar_lea.vmem [#allocation7], 14
    %v2473 = vld [vmem:[%s2472] sm:$0x3]
    %2474 = vmatprep.subr.mxu0 0.0
    %2475 = vmatpush1.msra.mxu0 %v136
    %2476 = vmatprep.subr.mxu0 0.0
    %2477 = vmatpush1.msra.mxu0 %v137
    %2478 = vmatprep.subr.mxu0 0.0
    %2479 = vmatpush1.msra.mxu0 %v138
    %2480 = vmatprep.subr.mxu0 0.0
    %2481 = vmatpush1.msra.mxu0 %v139
    %2482 = vmatprep.subr.mxu0 0.0
    %2483 = vmatpush1.msra.mxu0 0.0
    %2484 = vmatprep.subr.mxu0 0.0
    %2485 = vmatpush1.msra.mxu0 0.0
    %2486 = vmatprep.subr.mxu0 0.0
    %2487 = vmatpush1.msra.mxu0 0.0
    %2488 = vmatprep.subr.mxu0 0.0
    %2489 = vmatpush1.msra.mxu0 0.0
    %2490 = vmatprep.subr.mxu0 0.0
    %2491 = vmatpush1.msra.mxu0 0.0
    %2492 = vmatprep.subr.mxu0 0.0
    %2493 = vmatpush1.msra.mxu0 0.0
    %2494 = vmatprep.subr.mxu0 0.0
    %2495 = vmatpush1.msra.mxu0 0.0
    %2496 = vmatprep.subr.mxu0 0.0
    %2497 = vmatpush1.msra.mxu0 0.0
    %2498 = vmatprep.subr.mxu0 0.0
    %2499 = vmatpush1.msra.mxu0 0.0
    %2500 = vmatprep.subr.mxu0 0.0
    %2501 = vmatpush1.msra.mxu0 0.0
    %2502 = vmatprep.subr.mxu0 0.0
    %2503 = vmatpush1.msra.mxu0 0.0
    %2504 = vmatprep.subr.mxu0 0.0
    %2505 = vmatpush1.msra.mxu0 0.0
    %2506 = vmatprep.subr.mxu0 0.0
    %2507 = vmatpush1.msra.mxu0 0.0
    %2508 = vmatprep.subr.mxu0 0.0
    %2509 = vmatpush1.msra.mxu0 0.0
    %2510 = vmatprep.subr.mxu0 0.0
    %2511 = vmatpush1.msra.mxu0 0.0
    %2512 = vmatprep.subr.mxu0 0.0
    %2513 = vmatpush1.msra.mxu0 0.0
    %2514 = vmatprep.subr.mxu0 0.0
    %2515 = vmatpush1.msra.mxu0 0.0
    %2516 = vmatprep.subr.mxu0 0.0
    %2517 = vmatpush1.msra.mxu0 0.0
    %2518 = vmatprep.subr.mxu0 0.0
    %2519 = vmatpush1.msra.mxu0 0.0
    %2520 = vmatprep.subr.mxu0 0.0
    %2521 = vmatpush1.msra.mxu0 0.0
    %2522 = vmatprep.subr.mxu0 0.0
    %2523 = vmatpush1.msra.mxu0 0.0
    %2524 = vmatprep.subr.mxu0 0.0
    %2525 = vmatpush1.msra.mxu0 0.0
    %2526 = vmatprep.subr.mxu0 0.0
    %2527 = vmatpush1.msra.mxu0 0.0
    %2528 = vmatprep.subr.mxu0 0.0
    %2529 = vmatpush1.msra.mxu0 0.0
    %2530 = vmatprep.subr.mxu0 0.0
    %2531 = vmatpush1.msra.mxu0 0.0
    %2532 = vmatprep.subr.mxu0 0.0
    %2533 = vmatpush1.msra.mxu0 0.0
    %2534 = vmatprep.subr.mxu0 0.0
    %2535 = vmatpush1.msra.mxu0 0.0
    %2536 = vmatprep.subr.mxu0 0.0
    %2537 = vmatpush1.msra.mxu0 0.0
    %2538 = vmatprep.mubr.f32.mxu0 0.0
    %2539 = vmatmul.mubr.f32.gmra.mrb[0].mxu0 %v2399
    %v2540 = vpop.f32.mrb[0].mxu0
    %v2541 = vadd.f32 0.0, %v2540
    %v2542 = vpop.f32.mrb[0].mxu0
    %2543 = vdwg.mxu0
    %v2544 = vadd.f32 %v2473, %v2541
    %s2545 = scalar_lea.vmem [#allocation9], 14
    %v2546 = vld [vmem:[%s2545] sm:$0x3]
    %2547 = vmatprep.subr.mxu0 0.0
    %2548 = vmatpush1.msra.mxu0 %v141
    %2549 = vmatprep.subr.mxu0 0.0
    %2550 = vmatpush1.msra.mxu0 %v142
    %2551 = vmatprep.subr.mxu0 0.0
    %2552 = vmatpush1.msra.mxu0 %v143
    %2553 = vmatprep.subr.mxu0 0.0
    %2554 = vmatpush1.msra.mxu0 %v144
    %2555 = vmatprep.subr.mxu0 0.0
    %2556 = vmatpush1.msra.mxu0 0.0
    %2557 = vmatprep.subr.mxu0 0.0
    %2558 = vmatpush1.msra.mxu0 0.0
    %2559 = vmatprep.subr.mxu0 0.0
    %2560 = vmatpush1.msra.mxu0 0.0
    %2561 = vmatprep.subr.mxu0 0.0
    %2562 = vmatpush1.msra.mxu0 0.0
    %2563 = vmatprep.subr.mxu0 0.0
    %2564 = vmatpush1.msra.mxu0 0.0
    %2565 = vmatprep.subr.mxu0 0.0
    %2566 = vmatpush1.msra.mxu0 0.0
    %2567 = vmatprep.subr.mxu0 0.0
    %2568 = vmatpush1.msra.mxu0 0.0
    %2569 = vmatprep.subr.mxu0 0.0
    %2570 = vmatpush1.msra.mxu0 0.0
    %2571 = vmatprep.subr.mxu0 0.0
    %2572 = vmatpush1.msra.mxu0 0.0
    %2573 = vmatprep.subr.mxu0 0.0
    %2574 = vmatpush1.msra.mxu0 0.0
    %2575 = vmatprep.subr.mxu0 0.0
    %2576 = vmatpush1.msra.mxu0 0.0
    %2577 = vmatprep.subr.mxu0 0.0
    %2578 = vmatpush1.msra.mxu0 0.0
    %2579 = vmatprep.subr.mxu0 0.0
    %2580 = vmatpush1.msra.mxu0 0.0
    %2581 = vmatprep.subr.mxu0 0.0
    %2582 = vmatpush1.msra.mxu0 0.0
    %2583 = vmatprep.subr.mxu0 0.0
    %2584 = vmatpush1.msra.mxu0 0.0
    %2585 = vmatprep.subr.mxu0 0.0
    %2586 = vmatpush1.msra.mxu0 0.0
    %2587 = vmatprep.subr.mxu0 0.0
    %2588 = vmatpush1.msra.mxu0 0.0
    %2589 = vmatprep.subr.mxu0 0.0
    %2590 = vmatpush1.msra.mxu0 0.0
    %2591 = vmatprep.subr.mxu0 0.0
    %2592 = vmatpush1.msra.mxu0 0.0
    %2593 = vmatprep.subr.mxu0 0.0
    %2594 = vmatpush1.msra.mxu0 0.0
    %2595 = vmatprep.subr.mxu0 0.0
    %2596 = vmatpush1.msra.mxu0 0.0
    %2597 = vmatprep.subr.mxu0 0.0
    %2598 = vmatpush1.msra.mxu0 0.0
    %2599 = vmatprep.subr.mxu0 0.0
    %2600 = vmatpush1.msra.mxu0 0.0
    %2601 = vmatprep.subr.mxu0 0.0
    %2602 = vmatpush1.msra.mxu0 0.0
    %2603 = vmatprep.subr.mxu0 0.0
    %2604 = vmatpush1.msra.mxu0 0.0
    %2605 = vmatprep.subr.mxu0 0.0
    %2606 = vmatpush1.msra.mxu0 0.0
    %2607 = vmatprep.subr.mxu0 0.0
    %2608 = vmatpush1.msra.mxu0 0.0
    %2609 = vmatprep.subr.mxu0 0.0
    %2610 = vmatpush1.msra.mxu0 0.0
    %2611 = vmatprep.mubr.f32.mxu0 0.0
    %2612 = vmatmul.mubr.f32.gmra.mrb[0].mxu0 %v2399
    %v2613 = vpop.f32.mrb[0].mxu0
    %v2614 = vadd.f32 0.0, %v2613
    %v2615 = vpop.f32.mrb[0].mxu0
    %2616 = vdwg.mxu0
    %v2617 = vadd.f32 %v2546, %v2614
    %s2618 = scalar_lea.vmem [#allocation10], 14
    %v2619 = vld [vmem:[%s2618] sm:$0x3]
    %2620 = vmatprep.subr.mxu0 0.0
    %2621 = vmatpush1.msra.mxu0 %v146
    %2622 = vmatprep.subr.mxu0 0.0
    %2623 = vmatpush1.msra.mxu0 %v147
    %2624 = vmatprep.subr.mxu0 0.0
    %2625 = vmatpush1.msra.mxu0 %v148
    %2626 = vmatprep.subr.mxu0 0.0
    %2627 = vmatpush1.msra.mxu0 %v149
    %2628 = vmatprep.subr.mxu0 0.0
    %2629 = vmatpush1.msra.mxu0 0.0
    %2630 = vmatprep.subr.mxu0 0.0
    %2631 = vmatpush1.msra.mxu0 0.0
    %2632 = vmatprep.subr.mxu0 0.0
    %2633 = vmatpush1.msra.mxu0 0.0
    %2634 = vmatprep.subr.mxu0 0.0
    %2635 = vmatpush1.msra.mxu0 0.0
    %2636 = vmatprep.subr.mxu0 0.0
    %2637 = vmatpush1.msra.mxu0 0.0
    %2638 = vmatprep.subr.mxu0 0.0
    %2639 = vmatpush1.msra.mxu0 0.0
    %2640 = vmatprep.subr.mxu0 0.0
    %2641 = vmatpush1.msra.mxu0 0.0
    %2642 = vmatprep.subr.mxu0 0.0
    %2643 = vmatpush1.msra.mxu0 0.0
    %2644 = vmatprep.subr.mxu0 0.0
    %2645 = vmatpush1.msra.mxu0 0.0
    %2646 = vmatprep.subr.mxu0 0.0
    %2647 = vmatpush1.msra.mxu0 0.0
    %2648 = vmatprep.subr.mxu0 0.0
    %2649 = vmatpush1.msra.mxu0 0.0
    %2650 = vmatprep.subr.mxu0 0.0
    %2651 = vmatpush1.msra.mxu0 0.0
    %2652 = vmatprep.subr.mxu0 0.0
    %2653 = vmatpush1.msra.mxu0 0.0
    %2654 = vmatprep.subr.mxu0 0.0
    %2655 = vmatpush1.msra.mxu0 0.0
    %2656 = vmatprep.subr.mxu0 0.0
    %2657 = vmatpush1.msra.mxu0 0.0
    %2658 = vmatprep.subr.mxu0 0.0
    %2659 = vmatpush1.msra.mxu0 0.0
    %2660 = vmatprep.subr.mxu0 0.0
    %2661 = vmatpush1.msra.mxu0 0.0
    %2662 = vmatprep.subr.mxu0 0.0
    %2663 = vmatpush1.msra.mxu0 0.0
    %2664 = vmatprep.subr.mxu0 0.0
    %2665 = vmatpush1.msra.mxu0 0.0
    %2666 = vmatprep.subr.mxu0 0.0
    %2667 = vmatpush1.msra.mxu0 0.0
    %2668 = vmatprep.subr.mxu0 0.0
    %2669 = vmatpush1.msra.mxu0 0.0
    %2670 = vmatprep.subr.mxu0 0.0
    %2671 = vmatpush1.msra.mxu0 0.0
    %2672 = vmatprep.subr.mxu0 0.0
    %2673 = vmatpush1.msra.mxu0 0.0
    %2674 = vmatprep.subr.mxu0 0.0
    %2675 = vmatpush1.msra.mxu0 0.0
    %2676 = vmatprep.subr.mxu0 0.0
    %2677 = vmatpush1.msra.mxu0 0.0
    %2678 = vmatprep.subr.mxu0 0.0
    %2679 = vmatpush1.msra.mxu0 0.0
    %2680 = vmatprep.subr.mxu0 0.0
    %2681 = vmatpush1.msra.mxu0 0.0
    %2682 = vmatprep.subr.mxu0 0.0
    %2683 = vmatpush1.msra.mxu0 0.0
    %2684 = vmatprep.mubr.f32.mxu0 0.0
    %2685 = vmatmul.mubr.f32.gmra.mrb[0].mxu0 %v2399
    %v2686 = vpop.f32.mrb[0].mxu0
    %v2687 = vadd.f32 0.0, %v2686
    %v2688 = vpop.f32.mrb[0].mxu0
    %2689 = vdwg.mxu0
    %v2690 = vadd.f32 %v2619, %v2687
    %v2691 = vxor.u32 %v2471, 2147483648
    %v2692 = vmul.f32 %v2691, 1.442695
    %v2693 = vpow.pop %v2692
    %v2694 = vadd.f32 %v2693, 1.0
    %v2695 = vrcp.pop %v2694
    %v2696 = vmul.f32 1.0, %v2695
    %v2697 = vxor.u32 %v2544, 2147483648
    %v2698 = vmul.f32 %v2697, 1.442695
    %v2699 = vpow.pop %v2698
    %v2700 = vadd.f32 %v2699, 1.0
    %v2701 = vrcp.pop %v2700
    %v2702 = vmul.f32 1.0, %v2701
    %v2703 = vtanh.pop %v2617
    %v2704 = vxor.u32 %v2690, 2147483648
    %v2705 = vmul.f32 %v2704, 1.442695
    %v2706 = vpow.pop %v2705
    %v2707 = vadd.f32 %v2706, 1.0
    %v2708 = vrcp.pop %v2707
    %v2709 = vmul.f32 1.0, %v2708
    %v2710 = vmul.f32 %v2702, %v2391
    %v2711 = vmul.f32 %v2696, %v2703
    %v2712 = vadd.f32 %v2710, %v2711
    %v2713 = vtanh.pop %v2712
    %v2714 = vmul.f32 %v2709, %v2713
    %s2715 = scalar_lea.vmem [#allocation16], 14
    %2716 = vst.msk [vmem:[%s2715] sm:$0x3] %vm468, %v2714
    %2717 = vst.msk [vmem:[#allocation2] sm:$0x3] %vm468, %v2714
    %2718 = vst.msk [vmem:[#allocation3] sm:$0x3] %vm468, %v2712
    // Predicated region
    $region62: #{tpu_custom_call.1} parent=1 // pred_check
      %p2719 = pneg %p122
    $region63: #{tpu_custom_call.1} parent=1 // pred_check_branch
      %2721 = sbr.rel (%p2719) target = $region65
    $region64: #{tpu_custom_call.1} parent=1 // pred_region
      %2722 = vst.msk [vmem:[#allocation17] sm:$0x3] %vm468, %v2714
      %2723 = vst.msk [vmem:[#allocation19] sm:$0x3] %vm468, %v2712
    $region65: #{tpu_custom_call.1} parent=1 // pred_fallthru
      _
    // Predicated region
    $region66: #{tpu_custom_call.1} parent=1 // pred_check
      _
    $region67: #{tpu_custom_call.1} parent=1 // pred_check_branch
      %2725 = sbr.rel (0) target = $region69
    $region68: #{tpu_custom_call.1} parent=1 // pred_region
      %s2727 = ssub.s32 256, 256
      %2728 = vsyncadd [#allocation6], %s2727
      %s2729 = sshll.u32 [#allocation16], 4
      %s2730 = int_to_ptr.vmem [resolvable:$true] %s2729
      %2735 = dma.vmem_to_hbm [thread:$0]  %s2730, 256, %s7, [#allocation6], 32, 32, 2
    $region69: #{tpu_custom_call.1} parent=1 // pred_fallthru
      _
    // Predicated region
    $region70: #{tpu_custom_call.1} parent=1 // pred_check
      _
    $region71: #{tpu_custom_call.1} parent=1 // pred_check_branch
      %2737 = sbr.rel (0) target = $region73
    $region72: #{tpu_custom_call.1} parent=1 // pred_region
      %s2739 = ssub.s32 32, 32
      %2740 = vsyncadd [#allocation18], %s2739
      %s2742 = sshll.u32 [#allocation17], 4
      %s2743 = int_to_ptr.vmem [resolvable:$true] %s2742
      %2745 = dma.vmem_to_hbm [thread:$0]  %s2743, 32, %s8, [#allocation18]
    $region73: #{tpu_custom_call.1} parent=1 // pred_fallthru
      _
    // Predicated region
    $region74: #{tpu_custom_call.1} parent=1 // pred_check
      _
    $region75: #{tpu_custom_call.1} parent=1 // pred_check_branch
      %2747 = sbr.rel (0) target = $region77
    $region76: #{tpu_custom_call.1} parent=1 // pred_region
      %s2749 = ssub.s32 32, 32
      %2750 = vsyncadd [#allocation18], %s2749
      %s2752 = sshll.u32 [#allocation19], 4
      %s2753 = int_to_ptr.vmem [resolvable:$true] %s2752
      %2755 = dma.vmem_to_hbm [thread:$0]  %s2753, 32, %s9, [#allocation18]
    $region77: #{tpu_custom_call.1} parent=1 // pred_fallthru
      _
    // Predicated region
    $region78: #{tpu_custom_call.1} parent=1 // pred_check
      _
    $region79: #{tpu_custom_call.1} parent=1 // pred_check_branch
      %2757 = sbr.rel (0) target = $region81
    $region80: #{tpu_custom_call.1} parent=1 // pred_region
      %2758 = dma.done [#allocation6], 256
    $region81: #{tpu_custom_call.1} parent=1 // pred_fallthru
      _
    // Predicated region
    $region82: #{tpu_custom_call.1} parent=1 // pred_check
      _
    $region83: #{tpu_custom_call.1} parent=1 // pred_check_branch
      %2760 = sbr.rel (0) target = $region85
    $region84: #{tpu_custom_call.1} parent=1 // pred_region
      %2761 = dma.done [#allocation18], 32
    $region85: #{tpu_custom_call.1} parent=1 // pred_fallthru
      _
    // Predicated region
    $region86: #{tpu_custom_call.1} parent=1 // pred_check
      _
    $region87: #{tpu_custom_call.1} parent=1 // pred_check_branch
      %2763 = sbr.rel (0) target = $region89
    $region88: #{tpu_custom_call.1} parent=1 // pred_region
      %2764 = dma.done [#allocation18], 32
    $region89: #{tpu_custom_call.1} parent=1 // pred_fallthru
      _
    %2765 = vsyncpa [#allocation5], 1
    %2766 = vsyncpa [#allocation8], 1
    %2767 = vsyncpa [#allocation11], 1
    %2768 = vsyncpa [#allocation14], 1
    %2769 = vsyncpa [#allocation6], 1
    %2770 = vsyncpa [#allocation18], 1

</llo_original>
